<compile_context>
chip_gen: v6e
topology: v6e:2x2x1
jax: 0.10.0
libtpu: 0.0.40
codegen_flags: <defaults>
</compile_context>

<pallas_src>
import jax
import jax.numpy as jnp
from jax import lax
from jax.experimental import pallas as pl
from jax.experimental.pallas import tpu as pltpu

# ---------------- config ----------------
IN_CHANS = 3
TEMPORAL = 4
SPATIAL = (16, 16)
PATCH_STRIDE = (2, 4, 4)            # == kernel, padding 0
EMBED_DIM = 32
NUM_HEADS = 2
MLP_RATIO = 4
DEPTH = 2
LN_EPS = 1e-6

T_P = TEMPORAL // PATCH_STRIDE[0]
H_P = SPATIAL[0] // PATCH_STRIDE[1]
W_P = SPATIAL[1] // PATCH_STRIDE[2]
NUM_PATCHES = T_P * H_P * W_P                         # 2*4*4 = 32
NT = NUM_PATCHES + 1                                  # 33 tokens (cls + patches)
ROWS = ((NT + 7) // 8) * 8                            # 40 sublane-aligned rows
HEAD_DIM = EMBED_DIM // NUM_HEADS                     # 16
HIDDEN = EMBED_DIM * MLP_RATIO                        # 128
KP = IN_CHANS * PATCH_STRIDE[0] * PATCH_STRIDE[1] * PATCH_STRIDE[2]   # 96
ATTN_SCALE = HEAD_DIM ** -0.5
NEG_INF = -1e30
CLS_ROWS = 8                                          # rows per sample kept in head


# ---------------- slab layouts (static row offsets) ----------------
def _build_offsets():
    # weight slab (bf16, 128 lanes).  Every block offset / height is a multiple
    # of 16 so bf16 (16,128) sublane tiles are never straddled by a slice.
    w_off = {}
    r = 0
    w_off["patch"] = r; r += KP                        # (KP, D)
    for d in range(DEPTH):
        for h in range(NUM_HEADS):
            w_off[f"wq{d}{h}"] = r; r += EMBED_DIM     # (D, HD)
            w_off[f"wk{d}{h}"] = r; r += EMBED_DIM     # (D, HD), pre-scaled
            w_off[f"wv{d}{h}"] = r; r += EMBED_DIM     # (D, HD)
            w_off[f"wp{d}{h}"] = r; r += HEAD_DIM      # (HD, D)
        w_off[f"fc1{d}"] = r; r += EMBED_DIM           # (D, HIDDEN)
        w_off[f"fc2{d}"] = r; r += HIDDEN              # (HIDDEN, D)
    w_rows = ((r + 15) // 16) * 16

    # bias / LayerNorm slab (f32, one row per vector, payload at lane 0)
    v_off = {}
    r = 0
    for d in range(DEPTH):
        for nm in (f"ln1g{d}", f"ln1b{d}"):
            v_off[nm] = r; r += 1
        for h in range(NUM_HEADS):
            for nm in (f"bq{d}{h}", f"bk{d}{h}", f"bv{d}{h}"):
                v_off[nm] = r; r += 1
        for nm in (f"projb{d}", f"ln2g{d}", f"ln2b{d}", f"fc1b{d}", f"fc2b{d}"):
            v_off[nm] = r; r += 1
    v_off["normg"] = r; r += 1
    v_off["normb"] = r; r += 1
    v_rows = ((r + 7) // 8) * 8
    return w_off, w_rows, v_off, v_rows


W_OFF, W_ROWS, V_OFF, V_ROWS = _build_offsets()


# ---------------- fused Pallas kernel (factory closing over BB) ----------------
def _make_kernel(BB):
    MB = BB * ROWS
    f32 = jnp.float32
    bf16 = jnp.bfloat16
    inv_d = 1.0 / EMBED_DIM

    def kernel(xp_ref, w_ref, v_ref, add_ref, o_ref):
        # constants (built once per grid step)
        ones_d = jnp.ones((EMBED_DIM, 1), f32)          # reduce-over-D via MXU
        ones_r = jnp.ones((ROWS, 1), f32)               # softmax denom via MXU
        kcol = lax.broadcasted_iota(jnp.int32, (1, ROWS), 1)
        kmask = jnp.where(kcol < NT, 0.0, NEG_INF)      # additive key-pad bias

        def vrow(name, width):                          # (1, width) f32
            r0 = V_OFF[name]
            return v_ref[r0:r0 + 1, 0:width]

        def wblk(name, nrows, ncols):                   # bf16 weight block
            r0 = W_OFF[name]
            return w_ref[r0:r0 + nrows, 0:ncols]

        def mxdot(a_f32, w_bf16):                       # bf16 MXU inputs, f32 acc
            return jnp.dot(a_f32.astype(bf16), w_bf16,
                           preferred_element_type=f32)

        def layernorm_big(xf, gname, bname):
            # row reductions routed through the (otherwise idle) MXU
            mu = jnp.dot(xf, ones_d, preferred_element_type=f32) * inv_d
            xc = xf - mu
            var = jnp.dot(xc * xc, ones_d, preferred_element_type=f32) * inv_d
            return (xc * lax.rsqrt(var + LN_EPS)
                    * vrow(gname, EMBED_DIM) + vrow(bname, EMBED_DIM))

        def layernorm_small(xf, gname, bname):          # tiny (8, D): plain VPU/XLU
            mu = jnp.mean(xf, axis=-1, keepdims=True)
            var = jnp.mean(jnp.square(xf - mu), axis=-1, keepdims=True)
            return ((xf - mu) * lax.rsqrt(var + LN_EPS)
                    * vrow(gname, EMBED_DIM) + vrow(bname, EMBED_DIM))

        def gelu_exact(t):
            # exact-erf GELU via Abramowitz-Stegun 7.1.26 (|err| < 1.5e-7);
            # uses only exp / div -> no dependence on a lax.erf lowering.
            z = t * 0.7071067811865476
            sgn = jnp.where(z >= 0.0, 1.0, -1.0)
            za = jnp.abs(z)
            u = 1.0 / (1.0 + 0.3275911 * za)
            poly = ((((1.061405429 * u - 1.453152027) * u + 1.421413741) * u
                     - 0.284496736) * u + 0.254829592) * u
            erf = sgn * (1.0 - poly * jnp.exp(-za * za))
            return 0.5 * t * (1.0 + erf)

        # ---- PatchEmbed: im2col rows @ patch weight, + (cls | pos+bias) rows.
        # Row 0 of each sample is the cls slot (zero input), rows NT..ROWS-1 pad.
        x = mxdot(xp_ref[...], wblk("patch", KP, EMBED_DIM)) + add_ref[...]

        # ---- MultiScaleBlocks (identity pooling, residual pooling on) ----
        for d in range(DEPTH):
            xn = layernorm_big(x, f"ln1g{d}", f"ln1b{d}")
            attn = jnp.zeros((MB, EMBED_DIM), f32)
            for h in range(NUM_HEADS):
                # per-head weights pre-split in the wrapper -> no lane-offset
                # slicing of a fused qkv result; scale folded into K.
                q = mxdot(xn, wblk(f"wq{d}{h}", EMBED_DIM, HEAD_DIM)) \
                    + vrow(f"bq{d}{h}", HEAD_DIM)
                k = mxdot(xn, wblk(f"wk{d}{h}", EMBED_DIM, HEAD_DIM)) \
                    + vrow(f"bk{d}{h}", HEAD_DIM)
                v = mxdot(xn, wblk(f"wv{d}{h}", EMBED_DIM, HEAD_DIM)) \
                    + vrow(f"bv{d}{h}", HEAD_DIM)

                pieces = []
                for s_i in range(BB):                  # per-sample attention
                    lo = s_i * ROWS
                    qs = q[lo:lo + ROWS, :]
                    ks = k[lo:lo + ROWS, :]
                    vs = v[lo:lo + ROWS, :]
                    # q @ k^T (k already carries the 1/sqrt(d) scale)
                    sc = lax.dot_general(qs, ks, (((1,), (1,)), ((), ())),
                                         preferred_element_type=f32) + kmask
                    sc = sc - jnp.max(sc, axis=-1, keepdims=True)
                    p = jnp.exp(sc)
                    denom = jnp.dot(p, ones_r, preferred_element_type=f32)
                    pv = jnp.dot(p, vs, preferred_element_type=f32)
                    # exact reciprocal; residual pooling adds unscaled q
                    pieces.append(pv * (1.0 / denom) + qs)
                oh = pieces[0] if BB == 1 else jnp.concatenate(pieces, axis=0)
                # per-head concat folded into the output projection
                attn = attn + mxdot(oh, wblk(f"wp{d}{h}", HEAD_DIM, EMBED_DIM))
            x = x + attn + vrow(f"projb{d}", EMBED_DIM)

            xn2 = layernorm_big(x, f"ln2g{d}", f"ln2b{d}")
            h1 = mxdot(xn2, wblk(f"fc1{d}", EMBED_DIM, HIDDEN)) \
                + vrow(f"fc1b{d}", HIDDEN)
            h1 = gelu_exact(h1)
            x = x + mxdot(h1, wblk(f"fc2{d}", HIDDEN, EMBED_DIM)) \
                + vrow(f"fc2b{d}", EMBED_DIM)

        # ---- head: use_mean_pooling=False, cls_embed_on=True -> norm(x)[:, 0].
        # LayerNorm is per-token, so normalizing only the first 8 rows of each
        # sample (row 0 = cls) is exact; rows 1..7 are written but unused.
        heads = []
        for s_i in range(BB):
            lo = s_i * ROWS
            heads.append(layernorm_small(x[lo:lo + CLS_ROWS, :], "normg", "normb"))
        o_ref[...] = heads[0] if BB == 1 else jnp.concatenate(heads, axis=0)

    return kernel


# ---------------- parameter packing ----------------
def _pack_params(params):
    f32 = jnp.float32
    w = jnp.zeros((W_ROWS, 128), f32)

    def put_w(w, name, mat):
        r0 = W_OFF[name]
        nr, nc = mat.shape
        return w.at[r0:r0 + nr, 0:nc].set(mat.astype(f32))

    w = put_w(w, "patch", params["patch_w"].reshape(EMBED_DIM, KP).T)   # (KP, D)
    for d, blk in enumerate(params["blocks"]):
        qkv_w = blk["qkv_w"]                       # (D, 3D), x @ W orientation
        for h in range(NUM_HEADS):
            lo, hi = h * HEAD_DIM, (h + 1) * HEAD_DIM
            w = put_w(w, f"wq{d}{h}", qkv_w[:, lo:hi])
            w = put_w(w, f"wk{d}{h}",
                      qkv_w[:, EMBED_DIM + lo:EMBED_DIM + hi] * ATTN_SCALE)
            w = put_w(w, f"wv{d}{h}",
                      qkv_w[:, 2 * EMBED_DIM + lo:2 * EMBED_DIM + hi])
            w = put_w(w, f"wp{d}{h}", blk["proj_w"][lo:hi, :])
        w = put_w(w, f"fc1{d}", blk["fc1_w"])
        w = put_w(w, f"fc2{d}", blk["fc2_w"])
    wslab = w.astype(jnp.bfloat16)

    v = jnp.zeros((V_ROWS, 128), f32)

    def put_v(v, name, vec):
        r0 = V_OFF[name]
        n = vec.shape[0]
        return v.at[r0, 0:n].set(vec.astype(f32))

    for d, blk in enumerate(params["blocks"]):
        v = put_v(v, f"ln1g{d}", blk["ln1_g"])
        v = put_v(v, f"ln1b{d}", blk["ln1_b"])
        qkv_b = blk["qkv_b"]
        for h in range(NUM_HEADS):
            lo, hi = h * HEAD_DIM, (h + 1) * HEAD_DIM
            v = put_v(v, f"bq{d}{h}", qkv_b[lo:hi])
            v = put_v(v, f"bk{d}{h}",
                      qkv_b[EMBED_DIM + lo:EMBED_DIM + hi] * ATTN_SCALE)
            v = put_v(v, f"bv{d}{h}", qkv_b[2 * EMBED_DIM + lo:2 * EMBED_DIM + hi])
        v = put_v(v, f"projb{d}", blk["proj_b"])
        v = put_v(v, f"ln2g{d}", blk["ln2_g"])
        v = put_v(v, f"ln2b{d}", blk["ln2_b"])
        v = put_v(v, f"fc1b{d}", blk["fc1_b"])
        v = put_v(v, f"fc2b{d}", blk["fc2_b"])
    v = put_v(v, "normg", params["norm_g"])
    v = put_v(v, "normb", params["norm_b"])
    return wslab, v


# ---------------- parameter init (deterministic, synthetic) ----------------
def _tn(key, shape, std=0.02):
    return (std * jax.random.truncated_normal(key, -2.0, 2.0, shape)).astype(jnp.float32)


def init_params(key):
    ks = iter(jax.random.split(key, 64))
    p = {}
    p["patch_w"] = _tn(next(ks), (EMBED_DIM, IN_CHANS, *PATCH_STRIDE))
    p["patch_b"] = jnp.zeros((EMBED_DIM,), jnp.float32)
    p["cls_token"] = _tn(next(ks), (1, 1, EMBED_DIM))
    p["pos_embed"] = _tn(next(ks), (1, NT, EMBED_DIM))
    blocks = []
    for _ in range(DEPTH):
        blocks.append({
            "ln1_g": jnp.ones((EMBED_DIM,), jnp.float32),
            "ln1_b": jnp.full((EMBED_DIM,), 0.02, jnp.float32),
            "qkv_w": _tn(next(ks), (EMBED_DIM, 3 * EMBED_DIM)),
            "qkv_b": jnp.full((3 * EMBED_DIM,), 0.02, jnp.float32),
            "proj_w": _tn(next(ks), (EMBED_DIM, EMBED_DIM)),
            "proj_b": jnp.full((EMBED_DIM,), 0.02, jnp.float32),
            "ln2_g": jnp.ones((EMBED_DIM,), jnp.float32),
            "ln2_b": jnp.full((EMBED_DIM,), 0.02, jnp.float32),
            "fc1_w": _tn(next(ks), (EMBED_DIM, HIDDEN)),
            "fc1_b": jnp.full((HIDDEN,), 0.02, jnp.float32),
            "fc2_w": _tn(next(ks), (HIDDEN, EMBED_DIM)),
            "fc2_b": jnp.full((EMBED_DIM,), 0.02, jnp.float32),
        })
    p["blocks"] = blocks
    p["norm_g"] = jnp.ones((EMBED_DIM,), jnp.float32)
    p["norm_b"] = jnp.full((EMBED_DIM,), 0.02, jnp.float32)
    return p


# ---------------- forward ----------------
def mvit_forward(x, params):
    # x: (B, C, T, H, W) float32 (NCTHW, PyTorch Conv3d layout)
    B, C, T, H, W = x.shape
    kt, kh, kw = PATCH_STRIDE
    Tp, Hp, Wp = T // kt, H // kh, W // kw
    N = Tp * Hp * Wp
    assert C == IN_CHANS and N == NUM_PATCHES

    # ---- batch folding: BB samples per grid step (fills the MXU M-dim while
    # keeping >= 2 grid steps when possible so both v7x TensorCores stay busy).
    if B >= 16:
        BB = 8
    elif B >= 2:
        BB = max(1, B // 2)
    else:
        BB = 1
    NG = -(-B // BB)
    B_pad = NG * BB
    MB = BB * ROWS

    # ---- Conv3d(kernel==stride, pad=0) == non-overlapping patch matmul (im2col).
    xp = x.reshape(B, C, Tp, kt, Hp, kh, Wp, kw)
    xp = xp.transpose(0, 2, 4, 6, 1, 3, 5, 7).reshape(B, N, KP)
    # row 0 reserved for the cls token, rows NT..ROWS-1 are sublane padding
    xp_rows = jnp.zeros((B_pad, ROWS, KP), jnp.float32).at[:B, 1:NT, :].set(xp)
    xp_flat = xp_rows.reshape(B_pad * ROWS, KP)

    # additive rows: row0 = cls + pos[0]; rows 1..N = pos + conv bias; pads = 0.
    pos = params["pos_embed"][0]
    addvec = jnp.zeros((ROWS, EMBED_DIM), jnp.float32)
    addvec = addvec.at[0].set(params["cls_token"][0, 0] + pos[0])
    addvec = addvec.at[1:NT].set(pos[1:] + params["patch_b"][None, :])
    add_tiled = jnp.tile(addvec, (BB, 1))                  # (MB, D)

    wslab, vslab = _pack_params(params)

    out = pl.pallas_call(
        _make_kernel(BB),
        out_shape=jax.ShapeDtypeStruct((B_pad * CLS_ROWS, EMBED_DIM), jnp.float32),
        grid=(NG,),
        in_specs=[
            pl.BlockSpec((MB, KP), lambda g: (g, 0)),           # im2col rows (per fold)
            pl.BlockSpec((W_ROWS, 128), lambda g: (0, 0)),      # bf16 weight slab
            pl.BlockSpec((V_ROWS, 128), lambda g: (0, 0)),      # f32 bias/LN slab
            pl.BlockSpec((MB, EMBED_DIM), lambda g: (0, 0)),    # cls/pos/bias add
        ],
        out_specs=pl.BlockSpec((BB * CLS_ROWS, EMBED_DIM), lambda g: (g, 0)),
        compiler_params=pltpu.CompilerParams(
            dimension_semantics=("parallel",)),
    )(xp_flat, wslab, vslab, add_tiled)

    return out.reshape(B_pad, CLS_ROWS, EMBED_DIM)[:B, 0, :]   # (B, EMBED_DIM)

# TODO(synk): dropout / drop-path / layer-scale are disabled (rate 0) in this
# config; conv Q/KV pooling, rel-pos bias, separable/sincos pos-embed and
# trilinear pos-embed interpolation are not exercised and are not implemented.


if __name__ == "__main__":
    key = jax.random.PRNGKey(0)
    kx, kp = jax.random.split(key)
    B = 2
    x = jax.random.normal(kx, (B, IN_CHANS, TEMPORAL, *SPATIAL), jnp.float32)
    params = init_params(kp)
    out = jax.jit(mvit_forward)(x, params)
    out = jax.block_until_ready(out)
    assert out.shape == (B, EMBED_DIM) and out.dtype == jnp.float32
    assert bool(jnp.all(jnp.isfinite(out)))
    print("KERNEL_OK")
</pallas_src>

<mosaic_0001>
module attributes {stable_mosaic.version = 11 : i64} {
  func.func @kernel(%arg0: i32, %arg1: memref<40x96xf32, #tpu.memory_space<vmem>>, %arg2: memref<864x128xbf16, #tpu.memory_space<vmem>>, %arg3: memref<32x128xf32, #tpu.memory_space<vmem>>, %arg4: memref<40x32xf32, #tpu.memory_space<vmem>>, %arg5: memref<8x32xf32, #tpu.memory_space<vmem>>) attributes {dimension_semantics = [#tpu.dimension_semantics<parallel>], iteration_bounds = array<i64: 2>, scalar_prefetch = 0 : i64, scratch_operands = 0 : i64, tpu.core_type = #tpu.core_type<tc>, window_params = [{transform_indices = @transform_0, window_bounds = array<i64: 40, 96>}, {pipeline_mode = #tpu.pipeline_mode<synchronous>, transform_indices = @transform_1, window_bounds = array<i64: 864, 128>}, {pipeline_mode = #tpu.pipeline_mode<synchronous>, transform_indices = @transform_2, window_bounds = array<i64: 32, 128>}, {pipeline_mode = #tpu.pipeline_mode<synchronous>, transform_indices = @transform_3, window_bounds = array<i64: 40, 32>}, {transform_indices = @transform_4, window_bounds = array<i64: 8, 32>}]} {
    %cst = arith.constant 1.000000e+00 : f32
    %0 = vector.broadcast %cst : f32 to vector<32x1xf32>
    %cst_0 = arith.constant 1.000000e+00 : f32
    %1 = vector.broadcast %cst_0 : f32 to vector<40x1xf32>
    %2 = tpu.iota {dimensions = array<i32: 1>} : vector<1x40xi32>
    %c33_i32 = arith.constant 33 : i32
    %3 = vector.broadcast %c33_i32 : i32 to vector<1x40xi32>
    %4 = arith.cmpi slt, %2, %3 : vector<1x40xi32>
    %cst_1 = arith.constant 0.000000e+00 : f32
    %cst_2 = arith.constant -1.000000e+30 : f32
    %5 = vector.broadcast %cst_1 : f32 to vector<1x40xf32>
    %6 = vector.broadcast %cst_2 : f32 to vector<1x40xf32>
    %7 = arith.select %4, %5, %6 : vector<1x40xi1>, vector<1x40xf32>
    %c0 = arith.constant 0 : index
    %c0_3 = arith.constant 0 : index
    %8 = vector.load %arg1[%c0, %c0_3] : memref<40x96xf32, #tpu.memory_space<vmem>>, vector<40x96xf32>
    %c0_4 = arith.constant 0 : index
    %c0_5 = arith.constant 0 : index
    %9 = vector.load %arg2[%c0_4, %c0_5] : memref<864x128xbf16, #tpu.memory_space<vmem>>, vector<96x32xbf16>
    %10 = arith.truncf %8 : vector<40x96xf32> to vector<40x96xbf16>
    %cst_6 = arith.constant dense<0.000000e+00> : vector<40x32xf32>
    %11 = tpu.matmul %10, %9, %cst_6 {dimension_numbers = #tpu.dot_dimension_numbers<[1], [0], [0], [1], [0, 0, 1, 1], [], []>} : vector<40x96xbf16>, vector<96x32xbf16>, vector<40x32xf32> -> vector<40x32xf32>
    %c0_7 = arith.constant 0 : index
    %c0_8 = arith.constant 0 : index
    %12 = vector.load %arg4[%c0_7, %c0_8] : memref<40x32xf32, #tpu.memory_space<vmem>>, vector<40x32xf32>
    %13 = arith.addf %11, %12 : vector<40x32xf32>
    %cst_9 = arith.constant dense<0.000000e+00> : vector<40x1xf32>
    %14 = tpu.matmul %13, %0, %cst_9 {dimension_numbers = #tpu.dot_dimension_numbers<[1], [0], [0], [1], [0, 0, 1, 1], [], []>} : vector<40x32xf32>, vector<32x1xf32>, vector<40x1xf32> -> vector<40x1xf32>
    %cst_10 = arith.constant 3.125000e-02 : f32
    %15 = vector.broadcast %cst_10 : f32 to vector<40x1xf32>
    %16 = arith.mulf %14, %15 : vector<40x1xf32>
    %17 = vector.broadcast %16 : vector<40x1xf32> to vector<40x32xf32>
    %18 = arith.subf %13, %17 : vector<40x32xf32>
    %19 = arith.mulf %18, %18 : vector<40x32xf32>
    %cst_11 = arith.constant dense<0.000000e+00> : vector<40x1xf32>
    %20 = tpu.matmul %19, %0, %cst_11 {dimension_numbers = #tpu.dot_dimension_numbers<[1], [0], [0], [1], [0, 0, 1, 1], [], []>} : vector<40x32xf32>, vector<32x1xf32>, vector<40x1xf32> -> vector<40x1xf32>
    %cst_12 = arith.constant 3.125000e-02 : f32
    %21 = vector.broadcast %cst_12 : f32 to vector<40x1xf32>
    %22 = arith.mulf %20, %21 : vector<40x1xf32>
    %cst_13 = arith.constant 9.99999997E-7 : f32
    %23 = vector.broadcast %cst_13 : f32 to vector<40x1xf32>
    %24 = arith.addf %22, %23 : vector<40x1xf32>
    %25 = math.rsqrt %24 : vector<40x1xf32>
    %26 = vector.broadcast %25 : vector<40x1xf32> to vector<40x32xf32>
    %27 = arith.mulf %18, %26 : vector<40x32xf32>
    %c0_14 = arith.constant 0 : index
    %c0_15 = arith.constant 0 : index
    %28 = vector.load %arg3[%c0_14, %c0_15] : memref<32x128xf32, #tpu.memory_space<vmem>>, vector<1x32xf32>
    %29 = vector.broadcast %28 : vector<1x32xf32> to vector<40x32xf32>
    %30 = arith.mulf %27, %29 : vector<40x32xf32>
    %c1 = arith.constant 1 : index
    %c0_16 = arith.constant 0 : index
    %31 = vector.load %arg3[%c1, %c0_16] : memref<32x128xf32, #tpu.memory_space<vmem>>, vector<1x32xf32>
    %32 = vector.broadcast %31 : vector<1x32xf32> to vector<40x32xf32>
    %33 = arith.addf %30, %32 : vector<40x32xf32>
    %cst_17 = arith.constant 0.000000e+00 : f32
    %34 = vector.broadcast %cst_17 : f32 to vector<40x32xf32>
    %c96 = arith.constant 96 : index
    %c0_18 = arith.constant 0 : index
    %35 = vector.load %arg2[%c96, %c0_18] : memref<864x128xbf16, #tpu.memory_space<vmem>>, vector<32x16xbf16>
    %36 = arith.truncf %33 : vector<40x32xf32> to vector<40x32xbf16>
    %cst_19 = arith.constant dense<0.000000e+00> : vector<40x16xf32>
    %37 = tpu.matmul %36, %35, %cst_19 {dimension_numbers = #tpu.dot_dimension_numbers<[1], [0], [0], [1], [0, 0, 1, 1], [], []>} : vector<40x32xbf16>, vector<32x16xbf16>, vector<40x16xf32> -> vector<40x16xf32>
    %c2 = arith.constant 2 : index
    %c0_20 = arith.constant 0 : index
    %38 = vector.load %arg3[%c2, %c0_20] : memref<32x128xf32, #tpu.memory_space<vmem>>, vector<1x16xf32>
    %39 = vector.broadcast %38 : vector<1x16xf32> to vector<40x16xf32>
    %40 = arith.addf %37, %39 : vector<40x16xf32>
    %c128 = arith.constant 128 : index
    %c0_21 = arith.constant 0 : index
    %41 = vector.load %arg2[%c128, %c0_21] : memref<864x128xbf16, #tpu.memory_space<vmem>>, vector<32x16xbf16>
    %42 = arith.truncf %33 : vector<40x32xf32> to vector<40x32xbf16>
    %cst_22 = arith.constant dense<0.000000e+00> : vector<40x16xf32>
    %43 = tpu.matmul %42, %41, %cst_22 {dimension_numbers = #tpu.dot_dimension_numbers<[1], [0], [0], [1], [0, 0, 1, 1], [], []>} : vector<40x32xbf16>, vector<32x16xbf16>, vector<40x16xf32> -> vector<40x16xf32>
    %c3 = arith.constant 3 : index
    %c0_23 = arith.constant 0 : index
    %44 = vector.load %arg3[%c3, %c0_23] : memref<32x128xf32, #tpu.memory_space<vmem>>, vector<1x16xf32>
    %45 = vector.broadcast %44 : vector<1x16xf32> to vector<40x16xf32>
    %46 = arith.addf %43, %45 : vector<40x16xf32>
    %c160 = arith.constant 160 : index
    %c0_24 = arith.constant 0 : index
    %47 = vector.load %arg2[%c160, %c0_24] : memref<864x128xbf16, #tpu.memory_space<vmem>>, vector<32x16xbf16>
    %48 = arith.truncf %33 : vector<40x32xf32> to vector<40x32xbf16>
    %cst_25 = arith.constant dense<0.000000e+00> : vector<40x16xf32>
    %49 = tpu.matmul %48, %47, %cst_25 {dimension_numbers = #tpu.dot_dimension_numbers<[1], [0], [0], [1], [0, 0, 1, 1], [], []>} : vector<40x32xbf16>, vector<32x16xbf16>, vector<40x16xf32> -> vector<40x16xf32>
    %c4 = arith.constant 4 : index
    %c0_26 = arith.constant 0 : index
    %50 = vector.load %arg3[%c4, %c0_26] : memref<32x128xf32, #tpu.memory_space<vmem>>, vector<1x16xf32>
    %51 = vector.broadcast %50 : vector<1x16xf32> to vector<40x16xf32>
    %52 = arith.addf %49, %51 : vector<40x16xf32>
    %cst_27 = arith.constant dense<0.000000e+00> : vector<40x40xf32>
    %53 = tpu.matmul %40, %46, %cst_27 {dimension_numbers = #tpu.dot_dimension_numbers<[1], [1], [0], [0], [0, 0, 1, 0], [], []>} : vector<40x16xf32>, vector<40x16xf32>, vector<40x40xf32> -> vector<40x40xf32>
    %54 = vector.broadcast %7 : vector<1x40xf32> to vector<40x40xf32>
    %55 = arith.addf %53, %54 : vector<40x40xf32>
    %cst_28 = arith.constant dense<0xFF800000> : vector<40xf32>
    %56 = vector.multi_reduction <maximumf>, %55, %cst_28 [1] : vector<40x40xf32> to vector<40xf32>
    %57 = vector.shape_cast %56 : vector<40xf32> to vector<40x1xf32>
    %58 = vector.broadcast %57 : vector<40x1xf32> to vector<40x40xf32>
    %59 = arith.subf %55, %58 : vector<40x40xf32>
    %60 = math.exp %59 : vector<40x40xf32>
    %cst_29 = arith.constant dense<0.000000e+00> : vector<40x1xf32>
    %61 = tpu.matmul %60, %1, %cst_29 {dimension_numbers = #tpu.dot_dimension_numbers<[1], [0], [0], [1], [0, 0, 1, 1], [], []>} : vector<40x40xf32>, vector<40x1xf32>, vector<40x1xf32> -> vector<40x1xf32>
    %cst_30 = arith.constant dense<0.000000e+00> : vector<40x16xf32>
    %62 = tpu.matmul %60, %52, %cst_30 {dimension_numbers = #tpu.dot_dimension_numbers<[1], [0], [0], [1], [0, 0, 1, 1], [], []>} : vector<40x40xf32>, vector<40x16xf32>, vector<40x16xf32> -> vector<40x16xf32>
    %cst_31 = arith.constant 1.000000e+00 : f32
    %63 = vector.broadcast %cst_31 : f32 to vector<40x1xf32>
    %64 = arith.divf %63, %61 : vector<40x1xf32>
    %65 = vector.broadcast %64 : vector<40x1xf32> to vector<40x16xf32>
    %66 = arith.mulf %62, %65 : vector<40x16xf32>
    %67 = arith.addf %66, %40 : vector<40x16xf32>
    %c192 = arith.constant 192 : index
    %c0_32 = arith.constant 0 : index
    %68 = vector.load %arg2[%c192, %c0_32] : memref<864x128xbf16, #tpu.memory_space<vmem>>, vector<16x32xbf16>
    %69 = arith.truncf %67 : vector<40x16xf32> to vector<40x16xbf16>
    %cst_33 = arith.constant dense<0.000000e+00> : vector<40x32xf32>
    %70 = tpu.matmul %69, %68, %cst_33 {dimension_numbers = #tpu.dot_dimension_numbers<[1], [0], [0], [1], [0, 0, 1, 1], [], []>} : vector<40x16xbf16>, vector<16x32xbf16>, vector<40x32xf32> -> vector<40x32xf32>
    %71 = arith.addf %34, %70 : vector<40x32xf32>
    %c208 = arith.constant 208 : index
    %c0_34 = arith.constant 0 : index
    %72 = vector.load %arg2[%c208, %c0_34] : memref<864x128xbf16, #tpu.memory_space<vmem>>, vector<32x16xbf16>
    %73 = arith.truncf %33 : vector<40x32xf32> to vector<40x32xbf16>
    %cst_35 = arith.constant dense<0.000000e+00> : vector<40x16xf32>
    %74 = tpu.matmul %73, %72, %cst_35 {dimension_numbers = #tpu.dot_dimension_numbers<[1], [0], [0], [1], [0, 0, 1, 1], [], []>} : vector<40x32xbf16>, vector<32x16xbf16>, vector<40x16xf32> -> vector<40x16xf32>
    %c5 = arith.constant 5 : index
    %c0_36 = arith.constant 0 : index
    %75 = vector.load %arg3[%c5, %c0_36] : memref<32x128xf32, #tpu.memory_space<vmem>>, vector<1x16xf32>
    %76 = vector.broadcast %75 : vector<1x16xf32> to vector<40x16xf32>
    %77 = arith.addf %74, %76 : vector<40x16xf32>
    %c240 = arith.constant 240 : index
    %c0_37 = arith.constant 0 : index
    %78 = vector.load %arg2[%c240, %c0_37] : memref<864x128xbf16, #tpu.memory_space<vmem>>, vector<32x16xbf16>
    %79 = arith.truncf %33 : vector<40x32xf32> to vector<40x32xbf16>
    %cst_38 = arith.constant dense<0.000000e+00> : vector<40x16xf32>
    %80 = tpu.matmul %79, %78, %cst_38 {dimension_numbers = #tpu.dot_dimension_numbers<[1], [0], [0], [1], [0, 0, 1, 1], [], []>} : vector<40x32xbf16>, vector<32x16xbf16>, vector<40x16xf32> -> vector<40x16xf32>
    %c6 = arith.constant 6 : index
    %c0_39 = arith.constant 0 : index
    %81 = vector.load %arg3[%c6, %c0_39] : memref<32x128xf32, #tpu.memory_space<vmem>>, vector<1x16xf32>
    %82 = vector.broadcast %81 : vector<1x16xf32> to vector<40x16xf32>
    %83 = arith.addf %80, %82 : vector<40x16xf32>
    %c272 = arith.constant 272 : index
    %c0_40 = arith.constant 0 : index
    %84 = vector.load %arg2[%c272, %c0_40] : memref<864x128xbf16, #tpu.memory_space<vmem>>, vector<32x16xbf16>
    %85 = arith.truncf %33 : vector<40x32xf32> to vector<40x32xbf16>
    %cst_41 = arith.constant dense<0.000000e+00> : vector<40x16xf32>
    %86 = tpu.matmul %85, %84, %cst_41 {dimension_numbers = #tpu.dot_dimension_numbers<[1], [0], [0], [1], [0, 0, 1, 1], [], []>} : vector<40x32xbf16>, vector<32x16xbf16>, vector<40x16xf32> -> vector<40x16xf32>
    %c7 = arith.constant 7 : index
    %c0_42 = arith.constant 0 : index
    %87 = vector.load %arg3[%c7, %c0_42] : memref<32x128xf32, #tpu.memory_space<vmem>>, vector<1x16xf32>
    %88 = vector.broadcast %87 : vector<1x16xf32> to vector<40x16xf32>
    %89 = arith.addf %86, %88 : vector<40x16xf32>
    %cst_43 = arith.constant dense<0.000000e+00> : vector<40x40xf32>
    %90 = tpu.matmul %77, %83, %cst_43 {dimension_numbers = #tpu.dot_dimension_numbers<[1], [1], [0], [0], [0, 0, 1, 0], [], []>} : vector<40x16xf32>, vector<40x16xf32>, vector<40x40xf32> -> vector<40x40xf32>
    %91 = vector.broadcast %7 : vector<1x40xf32> to vector<40x40xf32>
    %92 = arith.addf %90, %91 : vector<40x40xf32>
    %cst_44 = arith.constant dense<0xFF800000> : vector<40xf32>
    %93 = vector.multi_reduction <maximumf>, %92, %cst_44 [1] : vector<40x40xf32> to vector<40xf32>
    %94 = vector.shape_cast %93 : vector<40xf32> to vector<40x1xf32>
    %95 = vector.broadcast %94 : vector<40x1xf32> to vector<40x40xf32>
    %96 = arith.subf %92, %95 : vector<40x40xf32>
    %97 = math.exp %96 : vector<40x40xf32>
    %cst_45 = arith.constant dense<0.000000e+00> : vector<40x1xf32>
    %98 = tpu.matmul %97, %1, %cst_45 {dimension_numbers = #tpu.dot_dimension_numbers<[1], [0], [0], [1], [0, 0, 1, 1], [], []>} : vector<40x40xf32>, vector<40x1xf32>, vector<40x1xf32> -> vector<40x1xf32>
    %cst_46 = arith.constant dense<0.000000e+00> : vector<40x16xf32>
    %99 = tpu.matmul %97, %89, %cst_46 {dimension_numbers = #tpu.dot_dimension_numbers<[1], [0], [0], [1], [0, 0, 1, 1], [], []>} : vector<40x40xf32>, vector<40x16xf32>, vector<40x16xf32> -> vector<40x16xf32>
    %cst_47 = arith.constant 1.000000e+00 : f32
    %100 = vector.broadcast %cst_47 : f32 to vector<40x1xf32>
    %101 = arith.divf %100, %98 : vector<40x1xf32>
    %102 = vector.broadcast %101 : vector<40x1xf32> to vector<40x16xf32>
    %103 = arith.mulf %99, %102 : vector<40x16xf32>
    %104 = arith.addf %103, %77 : vector<40x16xf32>
    %c304 = arith.constant 304 : index
    %c0_48 = arith.constant 0 : index
    %105 = vector.load %arg2[%c304, %c0_48] : memref<864x128xbf16, #tpu.memory_space<vmem>>, vector<16x32xbf16>
    %106 = arith.truncf %104 : vector<40x16xf32> to vector<40x16xbf16>
    %cst_49 = arith.constant dense<0.000000e+00> : vector<40x32xf32>
    %107 = tpu.matmul %106, %105, %cst_49 {dimension_numbers = #tpu.dot_dimension_numbers<[1], [0], [0], [1], [0, 0, 1, 1], [], []>} : vector<40x16xbf16>, vector<16x32xbf16>, vector<40x32xf32> -> vector<40x32xf32>
    %108 = arith.addf %71, %107 : vector<40x32xf32>
    %109 = arith.addf %13, %108 : vector<40x32xf32>
    %c8 = arith.constant 8 : index
    %c0_50 = arith.constant 0 : index
    %110 = vector.load %arg3[%c8, %c0_50] : memref<32x128xf32, #tpu.memory_space<vmem>>, vector<1x32xf32>
    %111 = vector.broadcast %110 : vector<1x32xf32> to vector<40x32xf32>
    %112 = arith.addf %109, %111 : vector<40x32xf32>
    %cst_51 = arith.constant dense<0.000000e+00> : vector<40x1xf32>
    %113 = tpu.matmul %112, %0, %cst_51 {dimension_numbers = #tpu.dot_dimension_numbers<[1], [0], [0], [1], [0, 0, 1, 1], [], []>} : vector<40x32xf32>, vector<32x1xf32>, vector<40x1xf32> -> vector<40x1xf32>
    %cst_52 = arith.constant 3.125000e-02 : f32
    %114 = vector.broadcast %cst_52 : f32 to vector<40x1xf32>
    %115 = arith.mulf %113, %114 : vector<40x1xf32>
    %116 = vector.broadcast %115 : vector<40x1xf32> to vector<40x32xf32>
    %117 = arith.subf %112, %116 : vector<40x32xf32>
    %118 = arith.mulf %117, %117 : vector<40x32xf32>
    %cst_53 = arith.constant dense<0.000000e+00> : vector<40x1xf32>
    %119 = tpu.matmul %118, %0, %cst_53 {dimension_numbers = #tpu.dot_dimension_numbers<[1], [0], [0], [1], [0, 0, 1, 1], [], []>} : vector<40x32xf32>, vector<32x1xf32>, vector<40x1xf32> -> vector<40x1xf32>
    %cst_54 = arith.constant 3.125000e-02 : f32
    %120 = vector.broadcast %cst_54 : f32 to vector<40x1xf32>
    %121 = arith.mulf %119, %120 : vector<40x1xf32>
    %cst_55 = arith.constant 9.99999997E-7 : f32
    %122 = vector.broadcast %cst_55 : f32 to vector<40x1xf32>
    %123 = arith.addf %121, %122 : vector<40x1xf32>
    %124 = math.rsqrt %123 : vector<40x1xf32>
    %125 = vector.broadcast %124 : vector<40x1xf32> to vector<40x32xf32>
    %126 = arith.mulf %117, %125 : vector<40x32xf32>
    %c9 = arith.constant 9 : index
    %c0_56 = arith.constant 0 : index
    %127 = vector.load %arg3[%c9, %c0_56] : memref<32x128xf32, #tpu.memory_space<vmem>>, vector<1x32xf32>
    %128 = vector.broadcast %127 : vector<1x32xf32> to vector<40x32xf32>
    %129 = arith.mulf %126, %128 : vector<40x32xf32>
    %c10 = arith.constant 10 : index
    %c0_57 = arith.constant 0 : index
    %130 = vector.load %arg3[%c10, %c0_57] : memref<32x128xf32, #tpu.memory_space<vmem>>, vector<1x32xf32>
    %131 = vector.broadcast %130 : vector<1x32xf32> to vector<40x32xf32>
    %132 = arith.addf %129, %131 : vector<40x32xf32>
    %c320 = arith.constant 320 : index
    %c0_58 = arith.constant 0 : index
    %133 = vector.load %arg2[%c320, %c0_58] : memref<864x128xbf16, #tpu.memory_space<vmem>>, vector<32x128xbf16>
    %134 = arith.truncf %132 : vector<40x32xf32> to vector<40x32xbf16>
    %cst_59 = arith.constant dense<0.000000e+00> : vector<40x128xf32>
    %135 = tpu.matmul %134, %133, %cst_59 {dimension_numbers = #tpu.dot_dimension_numbers<[1], [0], [0], [1], [0, 0, 1, 1], [], []>} : vector<40x32xbf16>, vector<32x128xbf16>, vector<40x128xf32> -> vector<40x128xf32>
    %c11 = arith.constant 11 : index
    %c0_60 = arith.constant 0 : index
    %136 = vector.load %arg3[%c11, %c0_60] : memref<32x128xf32, #tpu.memory_space<vmem>>, vector<1x128xf32>
    %137 = vector.broadcast %136 : vector<1x128xf32> to vector<40x128xf32>
    %138 = arith.addf %135, %137 : vector<40x128xf32>
    %cst_61 = arith.constant 0.707106769 : f32
    %139 = vector.broadcast %cst_61 : f32 to vector<40x128xf32>
    %140 = arith.mulf %138, %139 : vector<40x128xf32>
    %cst_62 = arith.constant 0.000000e+00 : f32
    %141 = vector.broadcast %cst_62 : f32 to vector<40x128xf32>
    %142 = arith.cmpf oge, %140, %141 : vector<40x128xf32>
    %cst_63 = arith.constant 1.000000e+00 : f32
    %cst_64 = arith.constant -1.000000e+00 : f32
    %143 = vector.broadcast %cst_63 : f32 to vector<40x128xf32>
    %144 = vector.broadcast %cst_64 : f32 to vector<40x128xf32>
    %145 = arith.select %142, %143, %144 : vector<40x128xi1>, vector<40x128xf32>
    %146 = math.absf %140 : vector<40x128xf32>
    %cst_65 = arith.constant 0.327591091 : f32
    %147 = vector.broadcast %cst_65 : f32 to vector<40x128xf32>
    %148 = arith.mulf %147, %146 : vector<40x128xf32>
    %cst_66 = arith.constant 1.000000e+00 : f32
    %149 = vector.broadcast %cst_66 : f32 to vector<40x128xf32>
    %150 = arith.addf %149, %148 : vector<40x128xf32>
    %cst_67 = arith.constant 1.000000e+00 : f32
    %151 = vector.broadcast %cst_67 : f32 to vector<40x128xf32>
    %152 = arith.divf %151, %150 : vector<40x128xf32>
    %cst_68 = arith.constant 1.06140542 : f32
    %153 = vector.broadcast %cst_68 : f32 to vector<40x128xf32>
    %154 = arith.mulf %153, %152 : vector<40x128xf32>
    %cst_69 = arith.constant 1.45315206 : f32
    %155 = vector.broadcast %cst_69 : f32 to vector<40x128xf32>
    %156 = arith.subf %154, %155 : vector<40x128xf32>
    %157 = arith.mulf %156, %152 : vector<40x128xf32>
    %cst_70 = arith.constant 1.42141378 : f32
    %158 = vector.broadcast %cst_70 : f32 to vector<40x128xf32>
    %159 = arith.addf %157, %158 : vector<40x128xf32>
    %160 = arith.mulf %159, %152 : vector<40x128xf32>
    %cst_71 = arith.constant 0.284496725 : f32
    %161 = vector.broadcast %cst_71 : f32 to vector<40x128xf32>
    %162 = arith.subf %160, %161 : vector<40x128xf32>
    %163 = arith.mulf %162, %152 : vector<40x128xf32>
    %cst_72 = arith.constant 0.254829586 : f32
    %164 = vector.broadcast %cst_72 : f32 to vector<40x128xf32>
    %165 = arith.addf %163, %164 : vector<40x128xf32>
    %166 = arith.mulf %165, %152 : vector<40x128xf32>
    %cst_73 = arith.constant 0.000000e+00 : f32
    %167 = vector.broadcast %cst_73 : f32 to vector<40x128xf32>
    %168 = arith.subf %167, %146 : vector<40x128xf32>
    %169 = arith.mulf %168, %146 : vector<40x128xf32>
    %170 = math.exp %169 : vector<40x128xf32>
    %171 = arith.mulf %166, %170 : vector<40x128xf32>
    %cst_74 = arith.constant 1.000000e+00 : f32
    %172 = vector.broadcast %cst_74 : f32 to vector<40x128xf32>
    %173 = arith.subf %172, %171 : vector<40x128xf32>
    %174 = arith.mulf %145, %173 : vector<40x128xf32>
    %cst_75 = arith.constant 5.000000e-01 : f32
    %175 = vector.broadcast %cst_75 : f32 to vector<40x128xf32>
    %176 = arith.mulf %175, %138 : vector<40x128xf32>
    %cst_76 = arith.constant 1.000000e+00 : f32
    %177 = vector.broadcast %cst_76 : f32 to vector<40x128xf32>
    %178 = arith.addf %177, %174 : vector<40x128xf32>
    %179 = arith.mulf %176, %178 : vector<40x128xf32>
    %c352 = arith.constant 352 : index
    %c0_77 = arith.constant 0 : index
    %180 = vector.load %arg2[%c352, %c0_77] : memref<864x128xbf16, #tpu.memory_space<vmem>>, vector<128x32xbf16>
    %181 = arith.truncf %179 : vector<40x128xf32> to vector<40x128xbf16>
    %cst_78 = arith.constant dense<0.000000e+00> : vector<40x32xf32>
    %182 = tpu.matmul %181, %180, %cst_78 {dimension_numbers = #tpu.dot_dimension_numbers<[1], [0], [0], [1], [0, 0, 1, 1], [], []>} : vector<40x128xbf16>, vector<128x32xbf16>, vector<40x32xf32> -> vector<40x32xf32>
    %183 = arith.addf %112, %182 : vector<40x32xf32>
    %c12 = arith.constant 12 : index
    %c0_79 = arith.constant 0 : index
    %184 = vector.load %arg3[%c12, %c0_79] : memref<32x128xf32, #tpu.memory_space<vmem>>, vector<1x32xf32>
    %185 = vector.broadcast %184 : vector<1x32xf32> to vector<40x32xf32>
    %186 = arith.addf %183, %185 : vector<40x32xf32>
    %cst_80 = arith.constant dense<0.000000e+00> : vector<40x1xf32>
    %187 = tpu.matmul %186, %0, %cst_80 {dimension_numbers = #tpu.dot_dimension_numbers<[1], [0], [0], [1], [0, 0, 1, 1], [], []>} : vector<40x32xf32>, vector<32x1xf32>, vector<40x1xf32> -> vector<40x1xf32>
    %cst_81 = arith.constant 3.125000e-02 : f32
    %188 = vector.broadcast %cst_81 : f32 to vector<40x1xf32>
    %189 = arith.mulf %187, %188 : vector<40x1xf32>
    %190 = vector.broadcast %189 : vector<40x1xf32> to vector<40x32xf32>
    %191 = arith.subf %186, %190 : vector<40x32xf32>
    %192 = arith.mulf %191, %191 : vector<40x32xf32>
    %cst_82 = arith.constant dense<0.000000e+00> : vector<40x1xf32>
    %193 = tpu.matmul %192, %0, %cst_82 {dimension_numbers = #tpu.dot_dimension_numbers<[1], [0], [0], [1], [0, 0, 1, 1], [], []>} : vector<40x32xf32>, vector<32x1xf32>, vector<40x1xf32> -> vector<40x1xf32>
    %cst_83 = arith.constant 3.125000e-02 : f32
    %194 = vector.broadcast %cst_83 : f32 to vector<40x1xf32>
    %195 = arith.mulf %193, %194 : vector<40x1xf32>
    %cst_84 = arith.constant 9.99999997E-7 : f32
    %196 = vector.broadcast %cst_84 : f32 to vector<40x1xf32>
    %197 = arith.addf %195, %196 : vector<40x1xf32>
    %198 = math.rsqrt %197 : vector<40x1xf32>
    %199 = vector.broadcast %198 : vector<40x1xf32> to vector<40x32xf32>
    %200 = arith.mulf %191, %199 : vector<40x32xf32>
    %c13 = arith.constant 13 : index
    %c0_85 = arith.constant 0 : index
    %201 = vector.load %arg3[%c13, %c0_85] : memref<32x128xf32, #tpu.memory_space<vmem>>, vector<1x32xf32>
    %202 = vector.broadcast %201 : vector<1x32xf32> to vector<40x32xf32>
    %203 = arith.mulf %200, %202 : vector<40x32xf32>
    %c14 = arith.constant 14 : index
    %c0_86 = arith.constant 0 : index
    %204 = vector.load %arg3[%c14, %c0_86] : memref<32x128xf32, #tpu.memory_space<vmem>>, vector<1x32xf32>
    %205 = vector.broadcast %204 : vector<1x32xf32> to vector<40x32xf32>
    %206 = arith.addf %203, %205 : vector<40x32xf32>
    %cst_87 = arith.constant 0.000000e+00 : f32
    %207 = vector.broadcast %cst_87 : f32 to vector<40x32xf32>
    %c480 = arith.constant 480 : index
    %c0_88 = arith.constant 0 : index
    %208 = vector.load %arg2[%c480, %c0_88] : memref<864x128xbf16, #tpu.memory_space<vmem>>, vector<32x16xbf16>
    %209 = arith.truncf %206 : vector<40x32xf32> to vector<40x32xbf16>
    %cst_89 = arith.constant dense<0.000000e+00> : vector<40x16xf32>
    %210 = tpu.matmul %209, %208, %cst_89 {dimension_numbers = #tpu.dot_dimension_numbers<[1], [0], [0], [1], [0, 0, 1, 1], [], []>} : vector<40x32xbf16>, vector<32x16xbf16>, vector<40x16xf32> -> vector<40x16xf32>
    %c15 = arith.constant 15 : index
    %c0_90 = arith.constant 0 : index
    %211 = vector.load %arg3[%c15, %c0_90] : memref<32x128xf32, #tpu.memory_space<vmem>>, vector<1x16xf32>
    %212 = vector.broadcast %211 : vector<1x16xf32> to vector<40x16xf32>
    %213 = arith.addf %210, %212 : vector<40x16xf32>
    %c512 = arith.constant 512 : index
    %c0_91 = arith.constant 0 : index
    %214 = vector.load %arg2[%c512, %c0_91] : memref<864x128xbf16, #tpu.memory_space<vmem>>, vector<32x16xbf16>
    %215 = arith.truncf %206 : vector<40x32xf32> to vector<40x32xbf16>
    %cst_92 = arith.constant dense<0.000000e+00> : vector<40x16xf32>
    %216 = tpu.matmul %215, %214, %cst_92 {dimension_numbers = #tpu.dot_dimension_numbers<[1], [0], [0], [1], [0, 0, 1, 1], [], []>} : vector<40x32xbf16>, vector<32x16xbf16>, vector<40x16xf32> -> vector<40x16xf32>
    %c16 = arith.constant 16 : index
    %c0_93 = arith.constant 0 : index
    %217 = vector.load %arg3[%c16, %c0_93] : memref<32x128xf32, #tpu.memory_space<vmem>>, vector<1x16xf32>
    %218 = vector.broadcast %217 : vector<1x16xf32> to vector<40x16xf32>
    %219 = arith.addf %216, %218 : vector<40x16xf32>
    %c544 = arith.constant 544 : index
    %c0_94 = arith.constant 0 : index
    %220 = vector.load %arg2[%c544, %c0_94] : memref<864x128xbf16, #tpu.memory_space<vmem>>, vector<32x16xbf16>
    %221 = arith.truncf %206 : vector<40x32xf32> to vector<40x32xbf16>
    %cst_95 = arith.constant dense<0.000000e+00> : vector<40x16xf32>
    %222 = tpu.matmul %221, %220, %cst_95 {dimension_numbers = #tpu.dot_dimension_numbers<[1], [0], [0], [1], [0, 0, 1, 1], [], []>} : vector<40x32xbf16>, vector<32x16xbf16>, vector<40x16xf32> -> vector<40x16xf32>
    %c17 = arith.constant 17 : index
    %c0_96 = arith.constant 0 : index
    %223 = vector.load %arg3[%c17, %c0_96] : memref<32x128xf32, #tpu.memory_space<vmem>>, vector<1x16xf32>
    %224 = vector.broadcast %223 : vector<1x16xf32> to vector<40x16xf32>
    %225 = arith.addf %222, %224 : vector<40x16xf32>
    %cst_97 = arith.constant dense<0.000000e+00> : vector<40x40xf32>
    %226 = tpu.matmul %213, %219, %cst_97 {dimension_numbers = #tpu.dot_dimension_numbers<[1], [1], [0], [0], [0, 0, 1, 0], [], []>} : vector<40x16xf32>, vector<40x16xf32>, vector<40x40xf32> -> vector<40x40xf32>
    %227 = vector.broadcast %7 : vector<1x40xf32> to vector<40x40xf32>
    %228 = arith.addf %226, %227 : vector<40x40xf32>
    %cst_98 = arith.constant dense<0xFF800000> : vector<40xf32>
    %229 = vector.multi_reduction <maximumf>, %228, %cst_98 [1] : vector<40x40xf32> to vector<40xf32>
    %230 = vector.shape_cast %229 : vector<40xf32> to vector<40x1xf32>
    %231 = vector.broadcast %230 : vector<40x1xf32> to vector<40x40xf32>
    %232 = arith.subf %228, %231 : vector<40x40xf32>
    %233 = math.exp %232 : vector<40x40xf32>
    %cst_99 = arith.constant dense<0.000000e+00> : vector<40x1xf32>
    %234 = tpu.matmul %233, %1, %cst_99 {dimension_numbers = #tpu.dot_dimension_numbers<[1], [0], [0], [1], [0, 0, 1, 1], [], []>} : vector<40x40xf32>, vector<40x1xf32>, vector<40x1xf32> -> vector<40x1xf32>
    %cst_100 = arith.constant dense<0.000000e+00> : vector<40x16xf32>
    %235 = tpu.matmul %233, %225, %cst_100 {dimension_numbers = #tpu.dot_dimension_numbers<[1], [0], [0], [1], [0, 0, 1, 1], [], []>} : vector<40x40xf32>, vector<40x16xf32>, vector<40x16xf32> -> vector<40x16xf32>
    %cst_101 = arith.constant 1.000000e+00 : f32
    %236 = vector.broadcast %cst_101 : f32 to vector<40x1xf32>
    %237 = arith.divf %236, %234 : vector<40x1xf32>
    %238 = vector.broadcast %237 : vector<40x1xf32> to vector<40x16xf32>
    %239 = arith.mulf %235, %238 : vector<40x16xf32>
    %240 = arith.addf %239, %213 : vector<40x16xf32>
    %c576 = arith.constant 576 : index
    %c0_102 = arith.constant 0 : index
    %241 = vector.load %arg2[%c576, %c0_102] : memref<864x128xbf16, #tpu.memory_space<vmem>>, vector<16x32xbf16>
    %242 = arith.truncf %240 : vector<40x16xf32> to vector<40x16xbf16>
    %cst_103 = arith.constant dense<0.000000e+00> : vector<40x32xf32>
    %243 = tpu.matmul %242, %241, %cst_103 {dimension_numbers = #tpu.dot_dimension_numbers<[1], [0], [0], [1], [0, 0, 1, 1], [], []>} : vector<40x16xbf16>, vector<16x32xbf16>, vector<40x32xf32> -> vector<40x32xf32>
    %244 = arith.addf %207, %243 : vector<40x32xf32>
    %c592 = arith.constant 592 : index
    %c0_104 = arith.constant 0 : index
    %245 = vector.load %arg2[%c592, %c0_104] : memref<864x128xbf16, #tpu.memory_space<vmem>>, vector<32x16xbf16>
    %246 = arith.truncf %206 : vector<40x32xf32> to vector<40x32xbf16>
    %cst_105 = arith.constant dense<0.000000e+00> : vector<40x16xf32>
    %247 = tpu.matmul %246, %245, %cst_105 {dimension_numbers = #tpu.dot_dimension_numbers<[1], [0], [0], [1], [0, 0, 1, 1], [], []>} : vector<40x32xbf16>, vector<32x16xbf16>, vector<40x16xf32> -> vector<40x16xf32>
    %c18 = arith.constant 18 : index
    %c0_106 = arith.constant 0 : index
    %248 = vector.load %arg3[%c18, %c0_106] : memref<32x128xf32, #tpu.memory_space<vmem>>, vector<1x16xf32>
    %249 = vector.broadcast %248 : vector<1x16xf32> to vector<40x16xf32>
    %250 = arith.addf %247, %249 : vector<40x16xf32>
    %c624 = arith.constant 624 : index
    %c0_107 = arith.constant 0 : index
    %251 = vector.load %arg2[%c624, %c0_107] : memref<864x128xbf16, #tpu.memory_space<vmem>>, vector<32x16xbf16>
    %252 = arith.truncf %206 : vector<40x32xf32> to vector<40x32xbf16>
    %cst_108 = arith.constant dense<0.000000e+00> : vector<40x16xf32>
    %253 = tpu.matmul %252, %251, %cst_108 {dimension_numbers = #tpu.dot_dimension_numbers<[1], [0], [0], [1], [0, 0, 1, 1], [], []>} : vector<40x32xbf16>, vector<32x16xbf16>, vector<40x16xf32> -> vector<40x16xf32>
    %c19 = arith.constant 19 : index
    %c0_109 = arith.constant 0 : index
    %254 = vector.load %arg3[%c19, %c0_109] : memref<32x128xf32, #tpu.memory_space<vmem>>, vector<1x16xf32>
    %255 = vector.broadcast %254 : vector<1x16xf32> to vector<40x16xf32>
    %256 = arith.addf %253, %255 : vector<40x16xf32>
    %c656 = arith.constant 656 : index
    %c0_110 = arith.constant 0 : index
    %257 = vector.load %arg2[%c656, %c0_110] : memref<864x128xbf16, #tpu.memory_space<vmem>>, vector<32x16xbf16>
    %258 = arith.truncf %206 : vector<40x32xf32> to vector<40x32xbf16>
    %cst_111 = arith.constant dense<0.000000e+00> : vector<40x16xf32>
    %259 = tpu.matmul %258, %257, %cst_111 {dimension_numbers = #tpu.dot_dimension_numbers<[1], [0], [0], [1], [0, 0, 1, 1], [], []>} : vector<40x32xbf16>, vector<32x16xbf16>, vector<40x16xf32> -> vector<40x16xf32>
    %c20 = arith.constant 20 : index
    %c0_112 = arith.constant 0 : index
    %260 = vector.load %arg3[%c20, %c0_112] : memref<32x128xf32, #tpu.memory_space<vmem>>, vector<1x16xf32>
    %261 = vector.broadcast %260 : vector<1x16xf32> to vector<40x16xf32>
    %262 = arith.addf %259, %261 : vector<40x16xf32>
    %cst_113 = arith.constant dense<0.000000e+00> : vector<40x40xf32>
    %263 = tpu.matmul %250, %256, %cst_113 {dimension_numbers = #tpu.dot_dimension_numbers<[1], [1], [0], [0], [0, 0, 1, 0], [], []>} : vector<40x16xf32>, vector<40x16xf32>, vector<40x40xf32> -> vector<40x40xf32>
    %264 = vector.broadcast %7 : vector<1x40xf32> to vector<40x40xf32>
    %265 = arith.addf %263, %264 : vector<40x40xf32>
    %cst_114 = arith.constant dense<0xFF800000> : vector<40xf32>
    %266 = vector.multi_reduction <maximumf>, %265, %cst_114 [1] : vector<40x40xf32> to vector<40xf32>
    %267 = vector.shape_cast %266 : vector<40xf32> to vector<40x1xf32>
    %268 = vector.broadcast %267 : vector<40x1xf32> to vector<40x40xf32>
    %269 = arith.subf %265, %268 : vector<40x40xf32>
    %270 = math.exp %269 : vector<40x40xf32>
    %cst_115 = arith.constant dense<0.000000e+00> : vector<40x1xf32>
    %271 = tpu.matmul %270, %1, %cst_115 {dimension_numbers = #tpu.dot_dimension_numbers<[1], [0], [0], [1], [0, 0, 1, 1], [], []>} : vector<40x40xf32>, vector<40x1xf32>, vector<40x1xf32> -> vector<40x1xf32>
    %cst_116 = arith.constant dense<0.000000e+00> : vector<40x16xf32>
    %272 = tpu.matmul %270, %262, %cst_116 {dimension_numbers = #tpu.dot_dimension_numbers<[1], [0], [0], [1], [0, 0, 1, 1], [], []>} : vector<40x40xf32>, vector<40x16xf32>, vector<40x16xf32> -> vector<40x16xf32>
    %cst_117 = arith.constant 1.000000e+00 : f32
    %273 = vector.broadcast %cst_117 : f32 to vector<40x1xf32>
    %274 = arith.divf %273, %271 : vector<40x1xf32>
    %275 = vector.broadcast %274 : vector<40x1xf32> to vector<40x16xf32>
    %276 = arith.mulf %272, %275 : vector<40x16xf32>
    %277 = arith.addf %276, %250 : vector<40x16xf32>
    %c688 = arith.constant 688 : index
    %c0_118 = arith.constant 0 : index
    %278 = vector.load %arg2[%c688, %c0_118] : memref<864x128xbf16, #tpu.memory_space<vmem>>, vector<16x32xbf16>
    %279 = arith.truncf %277 : vector<40x16xf32> to vector<40x16xbf16>
    %cst_119 = arith.constant dense<0.000000e+00> : vector<40x32xf32>
    %280 = tpu.matmul %279, %278, %cst_119 {dimension_numbers = #tpu.dot_dimension_numbers<[1], [0], [0], [1], [0, 0, 1, 1], [], []>} : vector<40x16xbf16>, vector<16x32xbf16>, vector<40x32xf32> -> vector<40x32xf32>
    %281 = arith.addf %244, %280 : vector<40x32xf32>
    %282 = arith.addf %186, %281 : vector<40x32xf32>
    %c21 = arith.constant 21 : index
    %c0_120 = arith.constant 0 : index
    %283 = vector.load %arg3[%c21, %c0_120] : memref<32x128xf32, #tpu.memory_space<vmem>>, vector<1x32xf32>
    %284 = vector.broadcast %283 : vector<1x32xf32> to vector<40x32xf32>
    %285 = arith.addf %282, %284 : vector<40x32xf32>
    %cst_121 = arith.constant dense<0.000000e+00> : vector<40x1xf32>
    %286 = tpu.matmul %285, %0, %cst_121 {dimension_numbers = #tpu.dot_dimension_numbers<[1], [0], [0], [1], [0, 0, 1, 1], [], []>} : vector<40x32xf32>, vector<32x1xf32>, vector<40x1xf32> -> vector<40x1xf32>
    %cst_122 = arith.constant 3.125000e-02 : f32
    %287 = vector.broadcast %cst_122 : f32 to vector<40x1xf32>
    %288 = arith.mulf %286, %287 : vector<40x1xf32>
    %289 = vector.broadcast %288 : vector<40x1xf32> to vector<40x32xf32>
    %290 = arith.subf %285, %289 : vector<40x32xf32>
    %291 = arith.mulf %290, %290 : vector<40x32xf32>
    %cst_123 = arith.constant dense<0.000000e+00> : vector<40x1xf32>
    %292 = tpu.matmul %291, %0, %cst_123 {dimension_numbers = #tpu.dot_dimension_numbers<[1], [0], [0], [1], [0, 0, 1, 1], [], []>} : vector<40x32xf32>, vector<32x1xf32>, vector<40x1xf32> -> vector<40x1xf32>
    %cst_124 = arith.constant 3.125000e-02 : f32
    %293 = vector.broadcast %cst_124 : f32 to vector<40x1xf32>
    %294 = arith.mulf %292, %293 : vector<40x1xf32>
    %cst_125 = arith.constant 9.99999997E-7 : f32
    %295 = vector.broadcast %cst_125 : f32 to vector<40x1xf32>
    %296 = arith.addf %294, %295 : vector<40x1xf32>
    %297 = math.rsqrt %296 : vector<40x1xf32>
    %298 = vector.broadcast %297 : vector<40x1xf32> to vector<40x32xf32>
    %299 = arith.mulf %290, %298 : vector<40x32xf32>
    %c22 = arith.constant 22 : index
    %c0_126 = arith.constant 0 : index
    %300 = vector.load %arg3[%c22, %c0_126] : memref<32x128xf32, #tpu.memory_space<vmem>>, vector<1x32xf32>
    %301 = vector.broadcast %300 : vector<1x32xf32> to vector<40x32xf32>
    %302 = arith.mulf %299, %301 : vector<40x32xf32>
    %c23 = arith.constant 23 : index
    %c0_127 = arith.constant 0 : index
    %303 = vector.load %arg3[%c23, %c0_127] : memref<32x128xf32, #tpu.memory_space<vmem>>, vector<1x32xf32>
    %304 = vector.broadcast %303 : vector<1x32xf32> to vector<40x32xf32>
    %305 = arith.addf %302, %304 : vector<40x32xf32>
    %c704 = arith.constant 704 : index
    %c0_128 = arith.constant 0 : index
    %306 = vector.load %arg2[%c704, %c0_128] : memref<864x128xbf16, #tpu.memory_space<vmem>>, vector<32x128xbf16>
    %307 = arith.truncf %305 : vector<40x32xf32> to vector<40x32xbf16>
    %cst_129 = arith.constant dense<0.000000e+00> : vector<40x128xf32>
    %308 = tpu.matmul %307, %306, %cst_129 {dimension_numbers = #tpu.dot_dimension_numbers<[1], [0], [0], [1], [0, 0, 1, 1], [], []>} : vector<40x32xbf16>, vector<32x128xbf16>, vector<40x128xf32> -> vector<40x128xf32>
    %c24 = arith.constant 24 : index
    %c0_130 = arith.constant 0 : index
    %309 = vector.load %arg3[%c24, %c0_130] : memref<32x128xf32, #tpu.memory_space<vmem>>, vector<1x128xf32>
    %310 = vector.broadcast %309 : vector<1x128xf32> to vector<40x128xf32>
    %311 = arith.addf %308, %310 : vector<40x128xf32>
    %cst_131 = arith.constant 0.707106769 : f32
    %312 = vector.broadcast %cst_131 : f32 to vector<40x128xf32>
    %313 = arith.mulf %311, %312 : vector<40x128xf32>
    %cst_132 = arith.constant 0.000000e+00 : f32
    %314 = vector.broadcast %cst_132 : f32 to vector<40x128xf32>
    %315 = arith.cmpf oge, %313, %314 : vector<40x128xf32>
    %cst_133 = arith.constant 1.000000e+00 : f32
    %cst_134 = arith.constant -1.000000e+00 : f32
    %316 = vector.broadcast %cst_133 : f32 to vector<40x128xf32>
    %317 = vector.broadcast %cst_134 : f32 to vector<40x128xf32>
    %318 = arith.select %315, %316, %317 : vector<40x128xi1>, vector<40x128xf32>
    %319 = math.absf %313 : vector<40x128xf32>
    %cst_135 = arith.constant 0.327591091 : f32
    %320 = vector.broadcast %cst_135 : f32 to vector<40x128xf32>
    %321 = arith.mulf %320, %319 : vector<40x128xf32>
    %cst_136 = arith.constant 1.000000e+00 : f32
    %322 = vector.broadcast %cst_136 : f32 to vector<40x128xf32>
    %323 = arith.addf %322, %321 : vector<40x128xf32>
    %cst_137 = arith.constant 1.000000e+00 : f32
    %324 = vector.broadcast %cst_137 : f32 to vector<40x128xf32>
    %325 = arith.divf %324, %323 : vector<40x128xf32>
    %cst_138 = arith.constant 1.06140542 : f32
    %326 = vector.broadcast %cst_138 : f32 to vector<40x128xf32>
    %327 = arith.mulf %326, %325 : vector<40x128xf32>
    %cst_139 = arith.constant 1.45315206 : f32
    %328 = vector.broadcast %cst_139 : f32 to vector<40x128xf32>
    %329 = arith.subf %327, %328 : vector<40x128xf32>
    %330 = arith.mulf %329, %325 : vector<40x128xf32>
    %cst_140 = arith.constant 1.42141378 : f32
    %331 = vector.broadcast %cst_140 : f32 to vector<40x128xf32>
    %332 = arith.addf %330, %331 : vector<40x128xf32>
    %333 = arith.mulf %332, %325 : vector<40x128xf32>
    %cst_141 = arith.constant 0.284496725 : f32
    %334 = vector.broadcast %cst_141 : f32 to vector<40x128xf32>
    %335 = arith.subf %333, %334 : vector<40x128xf32>
    %336 = arith.mulf %335, %325 : vector<40x128xf32>
    %cst_142 = arith.constant 0.254829586 : f32
    %337 = vector.broadcast %cst_142 : f32 to vector<40x128xf32>
    %338 = arith.addf %336, %337 : vector<40x128xf32>
    %339 = arith.mulf %338, %325 : vector<40x128xf32>
    %cst_143 = arith.constant 0.000000e+00 : f32
    %340 = vector.broadcast %cst_143 : f32 to vector<40x128xf32>
    %341 = arith.subf %340, %319 : vector<40x128xf32>
    %342 = arith.mulf %341, %319 : vector<40x128xf32>
    %343 = math.exp %342 : vector<40x128xf32>
    %344 = arith.mulf %339, %343 : vector<40x128xf32>
    %cst_144 = arith.constant 1.000000e+00 : f32
    %345 = vector.broadcast %cst_144 : f32 to vector<40x128xf32>
    %346 = arith.subf %345, %344 : vector<40x128xf32>
    %347 = arith.mulf %318, %346 : vector<40x128xf32>
    %cst_145 = arith.constant 5.000000e-01 : f32
    %348 = vector.broadcast %cst_145 : f32 to vector<40x128xf32>
    %349 = arith.mulf %348, %311 : vector<40x128xf32>
    %cst_146 = arith.constant 1.000000e+00 : f32
    %350 = vector.broadcast %cst_146 : f32 to vector<40x128xf32>
    %351 = arith.addf %350, %347 : vector<40x128xf32>
    %352 = arith.mulf %349, %351 : vector<40x128xf32>
    %c736 = arith.constant 736 : index
    %c0_147 = arith.constant 0 : index
    %353 = vector.load %arg2[%c736, %c0_147] : memref<864x128xbf16, #tpu.memory_space<vmem>>, vector<128x32xbf16>
    %354 = arith.truncf %352 : vector<40x128xf32> to vector<40x128xbf16>
    %cst_148 = arith.constant dense<0.000000e+00> : vector<40x32xf32>
    %355 = tpu.matmul %354, %353, %cst_148 {dimension_numbers = #tpu.dot_dimension_numbers<[1], [0], [0], [1], [0, 0, 1, 1], [], []>} : vector<40x128xbf16>, vector<128x32xbf16>, vector<40x32xf32> -> vector<40x32xf32>
    %356 = arith.addf %285, %355 : vector<40x32xf32>
    %c25 = arith.constant 25 : index
    %c0_149 = arith.constant 0 : index
    %357 = vector.load %arg3[%c25, %c0_149] : memref<32x128xf32, #tpu.memory_space<vmem>>, vector<1x32xf32>
    %358 = vector.broadcast %357 : vector<1x32xf32> to vector<40x32xf32>
    %359 = arith.addf %356, %358 : vector<40x32xf32>
    %360 = vector.extract_strided_slice %359 {offsets = [0, 0], sizes = [8, 32], strides = [1, 1]} : vector<40x32xf32> to vector<8x32xf32>
    %cst_150 = arith.constant dense<0.000000e+00> : vector<8xf32>
    %361 = vector.multi_reduction <add>, %360, %cst_150 [1] : vector<8x32xf32> to vector<8xf32>
    %362 = vector.shape_cast %361 : vector<8xf32> to vector<8x1xf32>
    %cst_151 = arith.constant 3.200000e+01 : f32
    %363 = vector.broadcast %cst_151 : f32 to vector<8x1xf32>
    %364 = arith.divf %362, %363 : vector<8x1xf32>
    %365 = vector.broadcast %364 : vector<8x1xf32> to vector<8x32xf32>
    %366 = arith.subf %360, %365 : vector<8x32xf32>
    %367 = arith.mulf %366, %366 : vector<8x32xf32>
    %cst_152 = arith.constant dense<0.000000e+00> : vector<8xf32>
    %368 = vector.multi_reduction <add>, %367, %cst_152 [1] : vector<8x32xf32> to vector<8xf32>
    %369 = vector.shape_cast %368 : vector<8xf32> to vector<8x1xf32>
    %cst_153 = arith.constant 3.200000e+01 : f32
    %370 = vector.broadcast %cst_153 : f32 to vector<8x1xf32>
    %371 = arith.divf %369, %370 : vector<8x1xf32>
    %372 = vector.broadcast %364 : vector<8x1xf32> to vector<8x32xf32>
    %373 = arith.subf %360, %372 : vector<8x32xf32>
    %cst_154 = arith.constant 9.99999997E-7 : f32
    %374 = vector.broadcast %cst_154 : f32 to vector<8x1xf32>
    %375 = arith.addf %371, %374 : vector<8x1xf32>
    %376 = math.rsqrt %375 : vector<8x1xf32>
    %377 = vector.broadcast %376 : vector<8x1xf32> to vector<8x32xf32>
    %378 = arith.mulf %373, %377 : vector<8x32xf32>
    %c26 = arith.constant 26 : index
    %c0_155 = arith.constant 0 : index
    %379 = vector.load %arg3[%c26, %c0_155] : memref<32x128xf32, #tpu.memory_space<vmem>>, vector<1x32xf32>
    %380 = vector.broadcast %379 : vector<1x32xf32> to vector<8x32xf32>
    %381 = arith.mulf %378, %380 : vector<8x32xf32>
    %c27 = arith.constant 27 : index
    %c0_156 = arith.constant 0 : index
    %382 = vector.load %arg3[%c27, %c0_156] : memref<32x128xf32, #tpu.memory_space<vmem>>, vector<1x32xf32>
    %383 = vector.broadcast %382 : vector<1x32xf32> to vector<8x32xf32>
    %384 = arith.addf %381, %383 : vector<8x32xf32>
    %c0_157 = arith.constant 0 : index
    %c0_158 = arith.constant 0 : index
    %385 = vector.load %arg5[%c0_157, %c0_158] : memref<8x32xf32, #tpu.memory_space<vmem>>, vector<8x32xf32>
    tpu.vector_store %arg5[%c0_157, %c0_158], %384 {strides = array<i32>} : memref<8x32xf32, #tpu.memory_space<vmem>>, vector<8x32xf32>,
    return
  }
  func.func @transform_0(%arg0: i32) -> (i32, i32) {
    %c0_i32 = arith.constant 0 : i32
    %c0_i32_0 = arith.constant 0 : i32
    return %arg0, %c0_i32 : i32, i32
  }
  func.func @transform_1(%arg0: i32) -> (i32, i32) {
    %c0_i32 = arith.constant 0 : i32
    %c0_i32_0 = arith.constant 0 : i32
    %c0_i32_1 = arith.constant 0 : i32
    return %c0_i32, %c0_i32_0 : i32, i32
  }
  func.func @transform_2(%arg0: i32) -> (i32, i32) {
    %c0_i32 = arith.constant 0 : i32
    %c0_i32_0 = arith.constant 0 : i32
    %c0_i32_1 = arith.constant 0 : i32
    return %c0_i32, %c0_i32_0 : i32, i32
  }
  func.func @transform_3(%arg0: i32) -> (i32, i32) {
    %c0_i32 = arith.constant 0 : i32
    %c0_i32_0 = arith.constant 0 : i32
    %c0_i32_1 = arith.constant 0 : i32
    return %c0_i32, %c0_i32_0 : i32, i32
  }
  func.func @transform_4(%arg0: i32) -> (i32, i32) {
    %c0_i32 = arith.constant 0 : i32
    %c0_i32_0 = arith.constant 0 : i32
    return %arg0, %c0_i32 : i32, i32
  }
}

</mosaic_0001>

<llo_original>
// kernel: mvit_forward.1
$region0: #{mvit_forward.1}
  #allocation0 [shape = 'u32[]', space=smem, size = 0x4, offset = 0x4, fixed_abs, tag = 'smem constant byte address 0x4 - core index']
  #allocation1 [shape = 'u32[144,128]{1,0:T(1,128)}', space=vmem, size = 0x12000, scoped, tag = 'internal scratch']
  %s0 = inlined_call_operand.vmem [shape: f32[80,96], index: 0, kind: input, shape index: {}]
  %s1 = inlined_call_operand.vmem [shape: bf16[864,128], index: 1, kind: input, shape index: {}]
  %s2 = inlined_call_operand.vmem [shape: f32[32,128], index: 2, kind: input, shape index: {}]
  %s3 = inlined_call_operand.vmem [shape: f32[40,32], index: 3, kind: input, shape index: {}]
  %s4 = inlined_call_operand.vmem [shape: f32[16,32], index: 4, kind: output, shape index: {}]
  %s5 = sld [smem:[#allocation0]]
  $region49: #{mvit_forward.1} parent=0
    _
  %s7 = ssub.s32 1, %s5
  %s8 = scalar_select 0, %s7, %s5
  loop: start=0, step=1, limit=4
  $region2: #{mvit_forward.1} parent=0 // loop_pre_header
    _
  $region3: #{mvit_forward.1} parent=0 // loop_header
    %s10 = sphi 0, %s14
    %p11 = scmp.ge.s32.totalorder %s10, 4
    %s20 = sphi 0, %s22
    %s23 = sphi 0, %s20
    %s24 = sphi 0, %s23
    %s40 = sphi 0, %s24
    %s44 = sphi 0, %s44
    %s46 = sphi 0, %s44
    %s47 = sphi 0, %s46
    %s61 = sphi 0, %s47
    %s65 = sphi 0, %s65
    %s67 = sphi 0, %s65
    %s68 = sphi 0, %s67
    %s82 = sphi 0, %s68
    %s86 = sphi 0, %s86
    %s88 = sphi 0, %s86
    %s89 = sphi 0, %s88
    %s103 = sphi 0, %s89
    %s109 = sphi 0, %s111
    %s112 = sphi 0, %s109
    %s113 = sphi 0, %s112
    %s129 = sphi 0, %s113
  $region4: #{mvit_forward.1} parent=0 // loop_header_branch
    %13 = sbr.rel (%p11) target = $region8
  $region5: #{mvit_forward.1} parent=0 // loop_body
    %s15 = ssub.s32 %s10, 1
    %s16 = ssub.s32 %s10, 2
    %s17 = sadd.s32 %s10, 1
    %s18 = ssub.s32 %s10, %s17
    %p19 = scmp.eq.s32.totalorder %s18, 0
    %s21 = sadd.s32 %s20, 1
    %s22 = scalar_select %p19, %s20, %s21
    %p25 = pneg %p19
    %p26 = scmp.eq.s32.totalorder %s10, 1
    %p27 = por %p25, %p26
    %p28 = scmp.ne.s32.totalorder %s20, %s23
    %p29 = scmp.eq.s32.totalorder %s10, 0
    %p30 = por %p28, %p29
    %p31 = scmp.ne.s32.totalorder %s20, %s23
    %p32 = scmp.eq.s32.totalorder %s15, 1
    %p33 = por %p31, %p32
    %p34 = scmp.ne.s32.totalorder %s23, %s24
    %p35 = scmp.eq.s32.totalorder %s15, 0
    %p36 = por %p34, %p35
    %p37 = scmp.ne.s32.totalorder %s23, %s24
    %p38 = scmp.eq.s32.totalorder %s16, 1
    %p39 = por %p37, %p38
    %p41 = scmp.ne.s32.totalorder %s24, %s40
    %p42 = scmp.eq.s32.totalorder %s16, 0
    %p43 = por %p41, %p42
    %s45 = sadd.s32 %s44, 1
    %p48 = scmp.eq.s32.totalorder %s10, 1
    %p49 = scmp.ne.s32.totalorder %s44, %s46
    %p50 = scmp.eq.s32.totalorder %s10, 0
    %p51 = por %p49, %p50
    %p52 = scmp.ne.s32.totalorder %s44, %s46
    %p53 = scmp.eq.s32.totalorder %s15, 1
    %p54 = por %p52, %p53
    %p55 = scmp.ne.s32.totalorder %s46, %s47
    %p56 = scmp.eq.s32.totalorder %s15, 0
    %p57 = por %p55, %p56
    %p58 = scmp.ne.s32.totalorder %s46, %s47
    %p59 = scmp.eq.s32.totalorder %s16, 1
    %p60 = por %p58, %p59
    %p62 = scmp.ne.s32.totalorder %s47, %s61
    %p63 = scmp.eq.s32.totalorder %s16, 0
    %p64 = por %p62, %p63
    %s66 = sadd.s32 %s65, 1
    %p69 = scmp.eq.s32.totalorder %s10, 1
    %p70 = scmp.ne.s32.totalorder %s65, %s67
    %p71 = scmp.eq.s32.totalorder %s10, 0
    %p72 = por %p70, %p71
    %p73 = scmp.ne.s32.totalorder %s65, %s67
    %p74 = scmp.eq.s32.totalorder %s15, 1
    %p75 = por %p73, %p74
    %p76 = scmp.ne.s32.totalorder %s67, %s68
    %p77 = scmp.eq.s32.totalorder %s15, 0
    %p78 = por %p76, %p77
    %p79 = scmp.ne.s32.totalorder %s67, %s68
    %p80 = scmp.eq.s32.totalorder %s16, 1
    %p81 = por %p79, %p80
    %p83 = scmp.ne.s32.totalorder %s68, %s82
    %p84 = scmp.eq.s32.totalorder %s16, 0
    %p85 = por %p83, %p84
    %s87 = sadd.s32 %s86, 1
    %p90 = scmp.eq.s32.totalorder %s10, 1
    %p91 = scmp.ne.s32.totalorder %s86, %s88
    %p92 = scmp.eq.s32.totalorder %s10, 0
    %p93 = por %p91, %p92
    %p94 = scmp.ne.s32.totalorder %s86, %s88
    %p95 = scmp.eq.s32.totalorder %s15, 1
    %p96 = por %p94, %p95
    %p97 = scmp.ne.s32.totalorder %s88, %s89
    %p98 = scmp.eq.s32.totalorder %s15, 0
    %p99 = por %p97, %p98
    %p100 = scmp.ne.s32.totalorder %s88, %s89
    %p101 = scmp.eq.s32.totalorder %s16, 1
    %p102 = por %p100, %p101
    %p104 = scmp.ne.s32.totalorder %s89, %s103
    %p105 = scmp.eq.s32.totalorder %s16, 0
    %p106 = por %p104, %p105
    %s107 = ssub.s32 %s10, %s17
    %p108 = scmp.eq.s32.totalorder %s107, 0
    %s110 = sadd.s32 %s109, 1
    %s111 = scalar_select %p108, %s109, %s110
    %p114 = pneg %p108
    %p115 = scmp.eq.s32.totalorder %s10, 1
    %p116 = por %p114, %p115
    %p117 = scmp.ne.s32.totalorder %s109, %s112
    %p118 = scmp.eq.s32.totalorder %s10, 0
    %p119 = por %p117, %p118
    %p120 = scmp.ne.s32.totalorder %s109, %s112
    %p121 = scmp.eq.s32.totalorder %s15, 1
    %p122 = por %p120, %p121
    %p123 = scmp.ne.s32.totalorder %s112, %s113
    %p124 = scmp.eq.s32.totalorder %s15, 0
    %p125 = por %p123, %p124
    %p126 = scmp.ne.s32.totalorder %s112, %s113
    %p127 = scmp.eq.s32.totalorder %s16, 1
    %p128 = por %p126, %p127
    %p130 = scmp.ne.s32.totalorder %s113, %s129
    %p131 = scmp.eq.s32.totalorder %s16, 0
    %p132 = por %p130, %p131
    %p133 = scmp.le.s32.totalorder 1, %s10
    %p134 = scmp.lt.s32.totalorder %s10, 3
    %p135 = pnand %p133, %p134
    %p136 = pneg %p135
    // Predicated region
    $region9: #{mvit_forward.1} parent=5 // pred_check
      _
    $region10: #{mvit_forward.1} parent=5 // pred_check_branch
      %138 = sbr.rel (%p135) target = $region12
    $region11: #{mvit_forward.1} parent=5 // pred_region
      %s139 = ssub.s32 %s10, 1
      // Predicated region
      $region13: #{mvit_forward.1} parent=11 // pred_check
        %p140 = pneg %p57
      $region14: #{mvit_forward.1} parent=11 // pred_check_branch
        %142 = sbr.rel (%p140) target = $region16
      $region15: #{mvit_forward.1} parent=11 // pred_region
        _
      $region16: #{mvit_forward.1} parent=11 // pred_fallthru
        _
      // Predicated region
      $region17: #{mvit_forward.1} parent=11 // pred_check
        %p143 = pneg %p78
      $region18: #{mvit_forward.1} parent=11 // pred_check_branch
        %145 = sbr.rel (%p143) target = $region20
      $region19: #{mvit_forward.1} parent=11 // pred_region
        _
      $region20: #{mvit_forward.1} parent=11 // pred_fallthru
        _
      // Predicated region
      $region21: #{mvit_forward.1} parent=11 // pred_check
        %p146 = pneg %p99
      $region22: #{mvit_forward.1} parent=11 // pred_check_branch
        %148 = sbr.rel (%p146) target = $region24
      $region23: #{mvit_forward.1} parent=11 // pred_region
        _
      $region24: #{mvit_forward.1} parent=11 // pred_fallthru
        _
    $region12: #{mvit_forward.1} parent=5 // pred_fallthru
      _
    %p149 = scmp.lt.s32.totalorder %s10, 2
    // Predicated region
    $region25: #{mvit_forward.1} parent=5 // pred_check
      %p150 = pneg %p149
    $region26: #{mvit_forward.1} parent=5 // pred_check_branch
      %152 = sbr.rel (%p150) target = $region28
    $region27: #{mvit_forward.1} parent=5 // pred_region
      // Predicated region
      $region29: #{mvit_forward.1} parent=27 // pred_check
        %p153 = pneg %p30
      $region30: #{mvit_forward.1} parent=27 // pred_check_branch
        %155 = sbr.rel (%p153) target = $region32
      $region31: #{mvit_forward.1} parent=27 // pred_region
        %s156 = smul.u32 5, %s10
        %p157 = scmp.lt.s32.totalorder %s156, 9
        %s158 = scalar_select %p157, %s156, 9
        %s159 = smul.addr %s158, 8
        %s160 = scalar_lea.vmem %s0, %s159
        %s161 = smul.u32 5, %s10
      $region32: #{mvit_forward.1} parent=27 // pred_fallthru
        _
    $region28: #{mvit_forward.1} parent=5 // pred_fallthru
      _
    %p162 = scmp.le.s32.totalorder 1, %s10
    %p163 = scmp.lt.s32.totalorder %s10, 3
    %p164 = pnand %p162, %p163
    %p165 = pneg %p164
    // Predicated region
    $region33: #{mvit_forward.1} parent=5 // pred_check
      _
    $region34: #{mvit_forward.1} parent=5 // pred_check_branch
      %167 = sbr.rel (%p164) target = $region36
    $region35: #{mvit_forward.1} parent=5 // pred_region
      %s168 = ssub.s32 %s10, 1
      %s169 = smul.u32 5, %s15
      %p170 = scmp.lt.s32.totalorder %s169, 9
      %s171 = scalar_select %p170, %s169, 9
      %s172 = smul.addr %s171, 8
      %s173 = scalar_lea.vmem %s0, %s172
      %p174 = pneg %p36
      %p175 = pneg %p33
      %p176 = pneg %p57
      %p177 = pneg %p54
      %p178 = pneg %p78
      %p179 = pneg %p75
      %p180 = pneg %p99
      %p181 = pneg %p96
      %p182 = pneg %p125
      %p183 = pneg %p122
      %p184 = scmp.lt.s32.totalorder %s15, 1
      %s185 = scalar_select %p184, %s15, 1
      %s186 = smul.addr %s185, 8
      %s187 = scalar_lea.vmem %s4, %s186
      %s188 = smul.u32 5, %s15
      %p189 = scmp.lt.s32.totalorder %s188, 9
      %s190 = scalar_select %p189, %s188, 9
      %s191 = smul.addr %s190, 8
      %s192 = scalar_lea.vmem %s0, %s191
      %s193 = smul.u32 5, %s15
      %p194 = scmp.lt.s32.totalorder %s15, 1
      %s195 = scalar_select %p194, %s15, 1
      %s196 = smul.addr %s195, 8
      %s197 = scalar_lea.vmem %s4, %s196
      %v199 = vlaneseq
      %v200 = vand.u32 %v199, 127
      %vm201 = vcmp.lt.s32.totalorder %v200, 33
      %v202 = vsel %vm201, 0.0, -1e+30
      %v203 = vld [vmem:[%s192] sm:$0xff]
      %v204 = vld [vmem:[%s192 + $0x8] sm:$0xff]
      %v205 = vld [vmem:[%s192 + $0x10] sm:$0xff]
      %v206 = vld [vmem:[%s192 + $0x18] sm:$0xff]
      %v207 = vld [vmem:[%s192 + $0x20] sm:$0xff]
      %v208 = vld [vmem:[%s1] sm:$0xf]
      %v209 = vld [vmem:[%s1 + $0x4] sm:$0xf]
      %v210 = vld [vmem:[%s1 + $0x8] sm:$0xf]
      %v211 = vld [vmem:[%s1 + $0xc] sm:$0xf]
      %v212 = vld [vmem:[%s1 + $0x10] sm:$0xf]
      %v213 = vld [vmem:[%s1 + $0x14] sm:$0xf]
      %v214 = vld [vmem:[%s1 + $0x18] sm:$0xf]
      %v215 = vld [vmem:[%s1 + $0x1c] sm:$0xf]
      %v216 = vld [vmem:[%s1 + $0x20] sm:$0xf]
      %v217 = vld [vmem:[%s1 + $0x24] sm:$0xf]
      %v218 = vld [vmem:[%s1 + $0x28] sm:$0xf]
      %v219 = vld [vmem:[%s1 + $0x2c] sm:$0xf]
      %v220 = vpack.c.bf16 %v204, %v203
      %v221 = vpack.c.bf16 %v206, %v205
      %v222 = vpack.c.bf16 %v207, %v207
      %v223 = vld [vmem:[%s3] sm:$0xff]
      %v224 = vld [vmem:[%s3 + $0x8] sm:$0xff]
      %v225 = vld [vmem:[%s3 + $0x10] sm:$0xff]
      %v226 = vld [vmem:[%s3 + $0x18] sm:$0xff]
      %v227 = vld [vmem:[%s3 + $0x20] sm:$0xff]
      %v240 = vunpack.c.l.b16 %v208
      %v241 = vunpack.c.l.b16 %v209
      %v242 = vunpack.c.l.b16 %v210
      %v243 = vunpack.c.l.b16 %v211
      %v244 = vunpack.c.l.b16 %v212
      %v245 = vunpack.c.l.b16 %v213
      %v246 = vunpack.c.l.b16 %v214
      %v247 = vunpack.c.l.b16 %v215
      %v248 = vunpack.c.l.b16 %v216
      %v249 = vunpack.c.l.b16 %v217
      %v250 = vunpack.c.l.b16 %v218
      %v251 = vunpack.c.l.b16 %v219
      %v252 = vpack.c.b16 %v241, %v240
      %v253 = vpack.c.b16 %v243, %v242
      %v254 = vpack.c.b16 %v245, %v244
      %v255 = vpack.c.b16 %v247, %v246
      %v256 = vpack.c.b16 %v249, %v248
      %v257 = vpack.c.b16 %v251, %v250
      %vm264 = vcmask 785408
      %v266 = vsel %vm264, %v220, 0
      %v269 = vsel %vm264, %v221, 0
      %v272 = vsel %vm264, %v222, 0
      %274 = vmatprep.subr.bf16.mxu0 0
      %275 = vmatpush1.bf16.msra.mxu0 0
      %276 = vmatprep.subr.bf16.mxu0 0
      %277 = vmatpush1.bf16.msra.mxu0 0
      %278 = vmatprep.subr.bf16.mxu0 0
      %279 = vmatpush1.bf16.msra.mxu0 %v257
      %280 = vmatprep.subr.bf16.mxu0 0
      %281 = vmatpush1.bf16.msra.mxu0 %v256
      %282 = vmatprep.subr.bf16.mxu0 0
      %283 = vmatpush1.bf16.msra.mxu0 %v255
      %284 = vmatprep.subr.bf16.mxu0 0
      %285 = vmatpush1.bf16.msra.mxu0 %v254
      %286 = vmatprep.subr.bf16.mxu0 0
      %287 = vmatpush1.bf16.msra.mxu0 %v253
      %288 = vmatprep.subr.bf16.mxu0 0
      %289 = vmatpush1.bf16.msra.mxu0 %v252
      %290 = vmatprep.subr.bf16.mxu0 0
      %291 = vmatpush2.bf16.msra.mxu0 0
      %292 = vmatprep.subr.bf16.mxu0 0
      %293 = vmatpush2.bf16.msra.mxu0 0
      %294 = vmatprep.subr.bf16.mxu0 0
      %295 = vmatpush2.bf16.msra.mxu0 0
      %296 = vmatprep.subr.bf16.mxu0 0
      %297 = vmatpush2.bf16.msra.mxu0 0
      %298 = vmatprep.subr.bf16.mxu0 0
      %299 = vmatpush2.bf16.msra.mxu0 0
      %300 = vmatprep.subr.bf16.mxu0 0
      %301 = vmatpush2.bf16.msra.mxu0 0
      %302 = vmatprep.subr.bf16.mxu0 0
      %303 = vmatpush2.bf16.msra.mxu0 0
      %304 = vmatprep.subr.bf16.mxu0 0
      %305 = vmatpush2.bf16.msra.mxu0 0
      %306 = vmatprep.mubr.bf16.mxu0 0
      %307 = vmatmul.mubr.bf16.gmra.mxu0 %v266
      %v308 = vpop.f32.mrf.mxu0
      %v309 = vadd.f32 %v223, %v308
      %v310 = vpop.f32.mrf.mxu0
      %v311 = vpop.f32.mrf.mxu0
      %v312 = vadd.f32 %v224, %v311
      %v313 = vpop.f32.mrf.mxu0
      %314 = vmatprep.mubr.bf16.mxu0 0
      %315 = vmatmul.mubr.bf16.gmra.mxu0 %v269
      %v316 = vpop.f32.mrf.mxu0
      %v317 = vadd.f32 %v225, %v316
      %v318 = vpop.f32.mrf.mxu0
      %v319 = vpop.f32.mrf.mxu0
      %v320 = vadd.f32 %v226, %v319
      %v321 = vpop.f32.mrf.mxu0
      %322 = vmatprep.mubr.bf16.mxu0 0
      %323 = vmatmul.mubr.bf16.gmra.mxu0 %v272
      %v324 = vpop.f32.mrf.mxu0
      %v325 = vadd.f32 %v227, %v324
      %v326 = vpop.f32.mrf.mxu0
      %v327 = vpop.f32.mrf.mxu0
      %v328 = vpop.f32.mrf.mxu0
      %329 = vdwg.mxu0
      %vm330 = vcmask 261120
      %v332 = vsel %vm330, %v309, 0
      %v335 = vsel %vm330, %v312, 0
      %v338 = vsel %vm330, %v317, 0
      %v341 = vsel %vm330, %v320, 0
      %v344 = vsel %vm330, %v325, 0
      %346 = vmatprep.subr.mxu0 0.0
      %347 = vmatpush1.msra.mxu0 0.0
      %348 = vmatprep.subr.mxu0 0.0
      %349 = vmatpush1.msra.mxu0 0.0
      %350 = vmatprep.subr.mxu0 0.0
      %351 = vmatpush1.msra.mxu0 0.0
      %352 = vmatprep.subr.mxu0 0.0
      %353 = vmatpush1.msra.mxu0 0.0
      %354 = vmatprep.subr.mxu0 0.0
      %355 = vmatpush1.msra.mxu0 0.0
      %356 = vmatprep.subr.mxu0 0.0
      %357 = vmatpush1.msra.mxu0 0.0
      %358 = vmatprep.subr.mxu0 0.0
      %359 = vmatpush1.msra.mxu0 0.0
      %360 = vmatprep.subr.mxu0 0.0
      %361 = vmatpush1.msra.mxu0 0.0
      %362 = vmatprep.subr.mxu0 0.0
      %363 = vmatpush1.msra.mxu0 0.0
      %364 = vmatprep.subr.mxu0 0.0
      %365 = vmatpush1.msra.mxu0 0.0
      %366 = vmatprep.subr.mxu0 0.0
      %367 = vmatpush1.msra.mxu0 0.0
      %368 = vmatprep.subr.mxu0 0.0
      %369 = vmatpush1.msra.mxu0 0.0
      %370 = vmatprep.subr.mxu0 0.0
      %371 = vmatpush1.msra.mxu0 1.0
      %372 = vmatprep.subr.mxu0 0.0
      %373 = vmatpush1.msra.mxu0 1.0
      %374 = vmatprep.subr.mxu0 0.0
      %375 = vmatpush1.msra.mxu0 1.0
      %376 = vmatprep.subr.mxu0 0.0
      %377 = vmatpush1.msra.mxu0 1.0
      %378 = vmatprep.subr.mxu0 0.0
      %379 = vmatpush2.msra.mxu0 0.0
      %380 = vmatprep.subr.mxu0 0.0
      %381 = vmatpush2.msra.mxu0 0.0
      %382 = vmatprep.subr.mxu0 0.0
      %383 = vmatpush2.msra.mxu0 0.0
      %384 = vmatprep.subr.mxu0 0.0
      %385 = vmatpush2.msra.mxu0 0.0
      %386 = vmatprep.subr.mxu0 0.0
      %387 = vmatpush2.msra.mxu0 0.0
      %388 = vmatprep.subr.mxu0 0.0
      %389 = vmatpush2.msra.mxu0 0.0
      %390 = vmatprep.subr.mxu0 0.0
      %391 = vmatpush2.msra.mxu0 0.0
      %392 = vmatprep.subr.mxu0 0.0
      %393 = vmatpush2.msra.mxu0 0.0
      %394 = vmatprep.subr.mxu0 0.0
      %395 = vmatpush2.msra.mxu0 0.0
      %396 = vmatprep.subr.mxu0 0.0
      %397 = vmatpush2.msra.mxu0 0.0
      %398 = vmatprep.subr.mxu0 0.0
      %399 = vmatpush2.msra.mxu0 0.0
      %400 = vmatprep.subr.mxu0 0.0
      %401 = vmatpush2.msra.mxu0 0.0
      %402 = vmatprep.subr.mxu0 0.0
      %403 = vmatpush2.msra.mxu0 0.0
      %404 = vmatprep.subr.mxu0 0.0
      %405 = vmatpush2.msra.mxu0 0.0
      %406 = vmatprep.subr.mxu0 0.0
      %407 = vmatpush2.msra.mxu0 0.0
      %408 = vmatprep.subr.mxu0 0.0
      %409 = vmatpush2.msra.mxu0 0.0
      %410 = vmatprep.mubr.f32.mxu0 0.0
      %411 = vmatmul.mubr.f32.gmra.mxu0 %v332
      %v412 = vpop.f32.mrf.mxu0
      %v413 = vadd.f32 0.0, %v412
      %v414 = vpop.f32.mrf.mxu0
      %415 = vmatprep.mubr.f32.mxu0 0.0
      %416 = vmatmul.mubr.f32.gmra.mxu0 %v335
      %v417 = vpop.f32.mrf.mxu0
      %v418 = vadd.f32 0.0, %v417
      %v419 = vpop.f32.mrf.mxu0
      %420 = vmatprep.mubr.f32.mxu0 0.0
      %421 = vmatmul.mubr.f32.gmra.mxu0 %v338
      %v422 = vpop.f32.mrf.mxu0
      %v423 = vadd.f32 0.0, %v422
      %v424 = vpop.f32.mrf.mxu0
      %425 = vmatprep.mubr.f32.mxu0 0.0
      %426 = vmatmul.mubr.f32.gmra.mxu0 %v341
      %v427 = vpop.f32.mrf.mxu0
      %v428 = vadd.f32 0.0, %v427
      %v429 = vpop.f32.mrf.mxu0
      %430 = vmatprep.mubr.f32.mxu0 0.0
      %431 = vmatmul.mubr.f32.gmra.mxu0 %v344
      %v432 = vpop.f32.mrf.mxu0
      %v433 = vadd.f32 0.0, %v432
      %v434 = vpop.f32.mrf.mxu0
      %435 = vdwg.mxu0
      %v436 = vmul.f32 %v413, 0.03125
      %v437 = vmul.f32 %v418, 0.03125
      %v438 = vmul.f32 %v423, 0.03125
      %v439 = vmul.f32 %v428, 0.03125
      %v440 = vmul.f32 %v433, 0.03125
      %442 = vset.pattern.permute.xlu0 0
      %443 = vperm.xlu0 %442, %v436
      %v444 = vpop.permute.xlu0 %443
      %447 = vset.pattern.permute.xlu0 0
      %448 = vperm.xlu0 %447, %v437
      %v449 = vpop.permute.xlu0 %448
      %452 = vset.pattern.permute.xlu0 0
      %453 = vperm.xlu0 %452, %v438
      %v454 = vpop.permute.xlu0 %453
      %457 = vset.pattern.permute.xlu0 0
      %458 = vperm.xlu0 %457, %v439
      %v459 = vpop.permute.xlu0 %458
      %462 = vset.pattern.permute.xlu0 0
      %463 = vperm.xlu0 %462, %v440
      %v464 = vpop.permute.xlu0 %463
      %v466 = vsub.f32 %v309, %v444
      %v467 = vsub.f32 %v312, %v449
      %v468 = vsub.f32 %v317, %v454
      %v469 = vsub.f32 %v320, %v459
      %v470 = vsub.f32 %v325, %v464
      %v471 = vmul.f32 %v466, %v466
      %v472 = vmul.f32 %v467, %v467
      %v473 = vmul.f32 %v468, %v468
      %v474 = vmul.f32 %v469, %v469
      %v475 = vmul.f32 %v470, %v470
      %v477 = vsel %vm330, %v471, 0
      %v480 = vsel %vm330, %v472, 0
      %v483 = vsel %vm330, %v473, 0
      %v486 = vsel %vm330, %v474, 0
      %v489 = vsel %vm330, %v475, 0
      %491 = vmatprep.subr.mxu0 0.0
      %492 = vmatpush1.msra.mxu0 0.0
      %493 = vmatprep.subr.mxu0 0.0
      %494 = vmatpush1.msra.mxu0 0.0
      %495 = vmatprep.subr.mxu0 0.0
      %496 = vmatpush1.msra.mxu0 0.0
      %497 = vmatprep.subr.mxu0 0.0
      %498 = vmatpush1.msra.mxu0 0.0
      %499 = vmatprep.subr.mxu0 0.0
      %500 = vmatpush1.msra.mxu0 0.0
      %501 = vmatprep.subr.mxu0 0.0
      %502 = vmatpush1.msra.mxu0 0.0
      %503 = vmatprep.subr.mxu0 0.0
      %504 = vmatpush1.msra.mxu0 0.0
      %505 = vmatprep.subr.mxu0 0.0
      %506 = vmatpush1.msra.mxu0 0.0
      %507 = vmatprep.subr.mxu0 0.0
      %508 = vmatpush1.msra.mxu0 0.0
      %509 = vmatprep.subr.mxu0 0.0
      %510 = vmatpush1.msra.mxu0 0.0
      %511 = vmatprep.subr.mxu0 0.0
      %512 = vmatpush1.msra.mxu0 0.0
      %513 = vmatprep.subr.mxu0 0.0
      %514 = vmatpush1.msra.mxu0 0.0
      %515 = vmatprep.subr.mxu0 0.0
      %516 = vmatpush1.msra.mxu0 1.0
      %517 = vmatprep.subr.mxu0 0.0
      %518 = vmatpush1.msra.mxu0 1.0
      %519 = vmatprep.subr.mxu0 0.0
      %520 = vmatpush1.msra.mxu0 1.0
      %521 = vmatprep.subr.mxu0 0.0
      %522 = vmatpush1.msra.mxu0 1.0
      %523 = vmatprep.subr.mxu0 0.0
      %524 = vmatpush2.msra.mxu0 0.0
      %525 = vmatprep.subr.mxu0 0.0
      %526 = vmatpush2.msra.mxu0 0.0
      %527 = vmatprep.subr.mxu0 0.0
      %528 = vmatpush2.msra.mxu0 0.0
      %529 = vmatprep.subr.mxu0 0.0
      %530 = vmatpush2.msra.mxu0 0.0
      %531 = vmatprep.subr.mxu0 0.0
      %532 = vmatpush2.msra.mxu0 0.0
      %533 = vmatprep.subr.mxu0 0.0
      %534 = vmatpush2.msra.mxu0 0.0
      %535 = vmatprep.subr.mxu0 0.0
      %536 = vmatpush2.msra.mxu0 0.0
      %537 = vmatprep.subr.mxu0 0.0
      %538 = vmatpush2.msra.mxu0 0.0
      %539 = vmatprep.subr.mxu0 0.0
      %540 = vmatpush2.msra.mxu0 0.0
      %541 = vmatprep.subr.mxu0 0.0
      %542 = vmatpush2.msra.mxu0 0.0
      %543 = vmatprep.subr.mxu0 0.0
      %544 = vmatpush2.msra.mxu0 0.0
      %545 = vmatprep.subr.mxu0 0.0
      %546 = vmatpush2.msra.mxu0 0.0
      %547 = vmatprep.subr.mxu0 0.0
      %548 = vmatpush2.msra.mxu0 0.0
      %549 = vmatprep.subr.mxu0 0.0
      %550 = vmatpush2.msra.mxu0 0.0
      %551 = vmatprep.subr.mxu0 0.0
      %552 = vmatpush2.msra.mxu0 0.0
      %553 = vmatprep.subr.mxu0 0.0
      %554 = vmatpush2.msra.mxu0 0.0
      %555 = vmatprep.mubr.f32.mxu0 0.0
      %556 = vmatmul.mubr.f32.gmra.mxu0 %v477
      %v557 = vpop.f32.mrf.mxu0
      %v558 = vadd.f32 0.0, %v557
      %v559 = vpop.f32.mrf.mxu0
      %560 = vmatprep.mubr.f32.mxu0 0.0
      %561 = vmatmul.mubr.f32.gmra.mxu0 %v480
      %v562 = vpop.f32.mrf.mxu0
      %v563 = vadd.f32 0.0, %v562
      %v564 = vpop.f32.mrf.mxu0
      %565 = vmatprep.mubr.f32.mxu0 0.0
      %566 = vmatmul.mubr.f32.gmra.mxu0 %v483
      %v567 = vpop.f32.mrf.mxu0
      %v568 = vadd.f32 0.0, %v567
      %v569 = vpop.f32.mrf.mxu0
      %570 = vmatprep.mubr.f32.mxu0 0.0
      %571 = vmatmul.mubr.f32.gmra.mxu0 %v486
      %v572 = vpop.f32.mrf.mxu0
      %v573 = vadd.f32 0.0, %v572
      %v574 = vpop.f32.mrf.mxu0
      %575 = vmatprep.mubr.f32.mxu0 0.0
      %576 = vmatmul.mubr.f32.gmra.mxu0 %v489
      %v577 = vpop.f32.mrf.mxu0
      %v578 = vadd.f32 0.0, %v577
      %v579 = vpop.f32.mrf.mxu0
      %580 = vdwg.mxu0
      %v581 = vmul.f32 %v558, 0.03125
      %v582 = vmul.f32 %v563, 0.03125
      %v583 = vmul.f32 %v568, 0.03125
      %v584 = vmul.f32 %v573, 0.03125
      %v585 = vmul.f32 %v578, 0.03125
      %v586 = vadd.f32 %v581, 1e-06
      %v587 = vadd.f32 %v582, 1e-06
      %v588 = vadd.f32 %v583, 1e-06
      %v589 = vadd.f32 %v584, 1e-06
      %v590 = vadd.f32 %v585, 1e-06
      %v591 = vrsqrt.pop %v586
      %v592 = vrsqrt.pop %v587
      %v593 = vrsqrt.pop %v588
      %v594 = vrsqrt.pop %v589
      %v595 = vrsqrt.pop %v590
      %597 = vset.pattern.permute.xlu0 0
      %598 = vperm.xlu0 %597, %v591
      %v599 = vpop.permute.xlu0 %598
      %602 = vset.pattern.permute.xlu0 0
      %603 = vperm.xlu0 %602, %v592
      %v604 = vpop.permute.xlu0 %603
      %607 = vset.pattern.permute.xlu0 0
      %608 = vperm.xlu0 %607, %v593
      %v609 = vpop.permute.xlu0 %608
      %612 = vset.pattern.permute.xlu0 0
      %613 = vperm.xlu0 %612, %v594
      %v614 = vpop.permute.xlu0 %613
      %617 = vset.pattern.permute.xlu0 0
      %618 = vperm.xlu0 %617, %v595
      %v619 = vpop.permute.xlu0 %618
      %v621 = vmul.f32 %v466, %v599
      %v622 = vmul.f32 %v467, %v604
      %v623 = vmul.f32 %v468, %v609
      %v624 = vmul.f32 %v469, %v614
      %v625 = vmul.f32 %v470, %v619
      %v626 = vld [vmem:[%s2] sm:$0x1]
      %v627 = vlaneseq
      %v628 = vshrl.u32 %v627, 7
      %v629 = vsub.s32 0, %v628
      %v630 = vrot.slane %v626, %v629
      %v631 = vmul.f32 %v621, %v630
      %v632 = vmul.f32 %v622, %v630
      %v633 = vmul.f32 %v623, %v630
      %v634 = vmul.f32 %v624, %v630
      %v635 = vmul.f32 %v625, %v630
      %v636 = vld [vmem:[%s2 + $0x1] sm:$0x1]
      %v637 = vlaneseq
      %v638 = vshrl.u32 %v637, 7
      %v639 = vsub.s32 0, %v638
      %v640 = vrot.slane %v636, %v639
      %v641 = vadd.f32 %v631, %v640
      %v642 = vadd.f32 %v632, %v640
      %v643 = vadd.f32 %v633, %v640
      %v644 = vadd.f32 %v634, %v640
      %v645 = vadd.f32 %v635, %v640
      %v646 = vld [vmem:[%s1 + $0x30] sm:$0xf]
      %v647 = vld [vmem:[%s1 + $0x34] sm:$0xf]
      %v648 = vld [vmem:[%s1 + $0x38] sm:$0xf]
      %v649 = vld [vmem:[%s1 + $0x3c] sm:$0xf]
      %v650 = vpack.c.bf16 %v642, %v641
      %v651 = vpack.c.bf16 %v644, %v643
      %v652 = vpack.c.bf16 %v645, %v645
      %v653 = vld [vmem:[%s2 + $0x2] sm:$0x1]
      %v654 = vlaneseq
      %v655 = vshrl.u32 %v654, 7
      %v656 = vsub.s32 0, %v655
      %v657 = vrot.slane %v653, %v656
      %v662 = vunpack.c.l.b16 %v646
      %v663 = vunpack.c.l.b16 %v647
      %v664 = vunpack.c.l.b16 %v648
      %v665 = vunpack.c.l.b16 %v649
      %v666 = vpack.c.b16 %v663, %v662
      %v667 = vpack.c.b16 %v665, %v664
      %v671 = vsel %vm330, %v650, 0
      %v674 = vsel %vm330, %v651, 0
      %v677 = vsel %vm330, %v652, 0
      %679 = vmatprep.subr.bf16.mxu0 0
      %680 = vmatpush1.bf16.msra.mxu0 0
      %681 = vmatprep.subr.bf16.mxu0 0
      %682 = vmatpush1.bf16.msra.mxu0 0
      %683 = vmatprep.subr.bf16.mxu0 0
      %684 = vmatpush1.bf16.msra.mxu0 0
      %685 = vmatprep.subr.bf16.mxu0 0
      %686 = vmatpush1.bf16.msra.mxu0 0
      %687 = vmatprep.subr.bf16.mxu0 0
      %688 = vmatpush1.bf16.msra.mxu0 0
      %689 = vmatprep.subr.bf16.mxu0 0
      %690 = vmatpush1.bf16.msra.mxu0 0
      %691 = vmatprep.subr.bf16.mxu0 0
      %692 = vmatpush1.bf16.msra.mxu0 %v667
      %693 = vmatprep.subr.bf16.mxu0 0
      %694 = vmatpush1.bf16.msra.mxu0 %v666
      %695 = vmatprep.subr.bf16.mxu0 0
      %696 = vmatpush2.bf16.msra.mxu0 0
      %697 = vmatprep.subr.bf16.mxu0 0
      %698 = vmatpush2.bf16.msra.mxu0 0
      %699 = vmatprep.subr.bf16.mxu0 0
      %700 = vmatpush2.bf16.msra.mxu0 0
      %701 = vmatprep.subr.bf16.mxu0 0
      %702 = vmatpush2.bf16.msra.mxu0 0
      %703 = vmatprep.subr.bf16.mxu0 0
      %704 = vmatpush2.bf16.msra.mxu0 0
      %705 = vmatprep.subr.bf16.mxu0 0
      %706 = vmatpush2.bf16.msra.mxu0 0
      %707 = vmatprep.subr.bf16.mxu0 0
      %708 = vmatpush2.bf16.msra.mxu0 0
      %709 = vmatprep.subr.bf16.mxu0 0
      %710 = vmatpush2.bf16.msra.mxu0 0
      %711 = vmatprep.mubr.bf16.mxu0 0
      %712 = vmatmul.mubr.bf16.gmra.mxu0 %v671
      %v713 = vpop.f32.mrf.mxu0
      %v714 = vadd.f32 %v657, %v713
      %v715 = vpop.f32.mrf.mxu0
      %v716 = vpop.f32.mrf.mxu0
      %v717 = vadd.f32 %v657, %v716
      %v718 = vpop.f32.mrf.mxu0
      %719 = vmatprep.mubr.bf16.mxu0 0
      %720 = vmatmul.mubr.bf16.gmra.mxu0 %v674
      %v721 = vpop.f32.mrf.mxu0
      %v722 = vadd.f32 %v657, %v721
      %v723 = vpop.f32.mrf.mxu0
      %v724 = vpop.f32.mrf.mxu0
      %v725 = vadd.f32 %v657, %v724
      %v726 = vpop.f32.mrf.mxu0
      %727 = vmatprep.mubr.bf16.mxu0 0
      %728 = vmatmul.mubr.bf16.gmra.mxu0 %v677
      %v729 = vpop.f32.mrf.mxu0
      %v730 = vadd.f32 %v657, %v729
      %v731 = vpop.f32.mrf.mxu0
      %v732 = vpop.f32.mrf.mxu0
      %v733 = vpop.f32.mrf.mxu0
      %734 = vdwg.mxu0
      %v735 = vld [vmem:[%s1 + $0x40] sm:$0xf]
      %v736 = vld [vmem:[%s1 + $0x44] sm:$0xf]
      %v737 = vld [vmem:[%s1 + $0x48] sm:$0xf]
      %v738 = vld [vmem:[%s1 + $0x4c] sm:$0xf]
      %v739 = vld [vmem:[%s2 + $0x3] sm:$0x1]
      %v740 = vlaneseq
      %v741 = vshrl.u32 %v740, 7
      %v742 = vsub.s32 0, %v741
      %v743 = vrot.slane %v739, %v742
      %v748 = vunpack.c.l.b16 %v735
      %v749 = vunpack.c.l.b16 %v736
      %v750 = vunpack.c.l.b16 %v737
      %v751 = vunpack.c.l.b16 %v738
      %v752 = vpack.c.b16 %v749, %v748
      %v753 = vpack.c.b16 %v751, %v750
      %756 = vmatprep.subr.bf16.mxu0 0
      %757 = vmatpush1.bf16.msra.mxu0 0
      %758 = vmatprep.subr.bf16.mxu0 0
      %759 = vmatpush1.bf16.msra.mxu0 0
      %760 = vmatprep.subr.bf16.mxu0 0
      %761 = vmatpush1.bf16.msra.mxu0 0
      %762 = vmatprep.subr.bf16.mxu0 0
      %763 = vmatpush1.bf16.msra.mxu0 0
      %764 = vmatprep.subr.bf16.mxu0 0
      %765 = vmatpush1.bf16.msra.mxu0 0
      %766 = vmatprep.subr.bf16.mxu0 0
      %767 = vmatpush1.bf16.msra.mxu0 0
      %768 = vmatprep.subr.bf16.mxu0 0
      %769 = vmatpush1.bf16.msra.mxu0 %v753
      %770 = vmatprep.subr.bf16.mxu0 0
      %771 = vmatpush1.bf16.msra.mxu0 %v752
      %772 = vmatprep.subr.bf16.mxu0 0
      %773 = vmatpush2.bf16.msra.mxu0 0
      %774 = vmatprep.subr.bf16.mxu0 0
      %775 = vmatpush2.bf16.msra.mxu0 0
      %776 = vmatprep.subr.bf16.mxu0 0
      %777 = vmatpush2.bf16.msra.mxu0 0
      %778 = vmatprep.subr.bf16.mxu0 0
      %779 = vmatpush2.bf16.msra.mxu0 0
      %780 = vmatprep.subr.bf16.mxu0 0
      %781 = vmatpush2.bf16.msra.mxu0 0
      %782 = vmatprep.subr.bf16.mxu0 0
      %783 = vmatpush2.bf16.msra.mxu0 0
      %784 = vmatprep.subr.bf16.mxu0 0
      %785 = vmatpush2.bf16.msra.mxu0 0
      %786 = vmatprep.subr.bf16.mxu0 0
      %787 = vmatpush2.bf16.msra.mxu0 0
      %788 = vmatprep.mubr.bf16.mxu0 0
      %789 = vmatmul.mubr.bf16.gmra.mxu0 %v671
      %v790 = vpop.f32.mrf.mxu0
      %v791 = vadd.f32 %v743, %v790
      %v792 = vpop.f32.mrf.mxu0
      %v793 = vpop.f32.mrf.mxu0
      %v794 = vadd.f32 %v743, %v793
      %v795 = vpop.f32.mrf.mxu0
      %796 = vmatprep.mubr.bf16.mxu0 0
      %797 = vmatmul.mubr.bf16.gmra.mxu0 %v674
      %v798 = vpop.f32.mrf.mxu0
      %v799 = vadd.f32 %v743, %v798
      %v800 = vpop.f32.mrf.mxu0
      %v801 = vpop.f32.mrf.mxu0
      %v802 = vadd.f32 %v743, %v801
      %v803 = vpop.f32.mrf.mxu0
      %804 = vmatprep.mubr.bf16.mxu0 0
      %805 = vmatmul.mubr.bf16.gmra.mxu0 %v677
      %v806 = vpop.f32.mrf.mxu0
      %v807 = vadd.f32 %v743, %v806
      %v808 = vpop.f32.mrf.mxu0
      %v809 = vpop.f32.mrf.mxu0
      %v810 = vpop.f32.mrf.mxu0
      %811 = vdwg.mxu0
      %v812 = vld [vmem:[%s1 + $0x50] sm:$0xf]
      %v813 = vld [vmem:[%s1 + $0x54] sm:$0xf]
      %v814 = vld [vmem:[%s1 + $0x58] sm:$0xf]
      %v815 = vld [vmem:[%s1 + $0x5c] sm:$0xf]
      %v816 = vld [vmem:[%s2 + $0x4] sm:$0x1]
      %v817 = vlaneseq
      %v818 = vshrl.u32 %v817, 7
      %v819 = vsub.s32 0, %v818
      %v820 = vrot.slane %v816, %v819
      %v825 = vunpack.c.l.b16 %v812
      %v826 = vunpack.c.l.b16 %v813
      %v827 = vunpack.c.l.b16 %v814
      %v828 = vunpack.c.l.b16 %v815
      %v829 = vpack.c.b16 %v826, %v825
      %v830 = vpack.c.b16 %v828, %v827
      %833 = vmatprep.subr.bf16.mxu0 0
      %834 = vmatpush1.bf16.msra.mxu0 0
      %835 = vmatprep.subr.bf16.mxu0 0
      %836 = vmatpush1.bf16.msra.mxu0 0
      %837 = vmatprep.subr.bf16.mxu0 0
      %838 = vmatpush1.bf16.msra.mxu0 0
      %839 = vmatprep.subr.bf16.mxu0 0
      %840 = vmatpush1.bf16.msra.mxu0 0
      %841 = vmatprep.subr.bf16.mxu0 0
      %842 = vmatpush1.bf16.msra.mxu0 0
      %843 = vmatprep.subr.bf16.mxu0 0
      %844 = vmatpush1.bf16.msra.mxu0 0
      %845 = vmatprep.subr.bf16.mxu0 0
      %846 = vmatpush1.bf16.msra.mxu0 %v830
      %847 = vmatprep.subr.bf16.mxu0 0
      %848 = vmatpush1.bf16.msra.mxu0 %v829
      %849 = vmatprep.subr.bf16.mxu0 0
      %850 = vmatpush2.bf16.msra.mxu0 0
      %851 = vmatprep.subr.bf16.mxu0 0
      %852 = vmatpush2.bf16.msra.mxu0 0
      %853 = vmatprep.subr.bf16.mxu0 0
      %854 = vmatpush2.bf16.msra.mxu0 0
      %855 = vmatprep.subr.bf16.mxu0 0
      %856 = vmatpush2.bf16.msra.mxu0 0
      %857 = vmatprep.subr.bf16.mxu0 0
      %858 = vmatpush2.bf16.msra.mxu0 0
      %859 = vmatprep.subr.bf16.mxu0 0
      %860 = vmatpush2.bf16.msra.mxu0 0
      %861 = vmatprep.subr.bf16.mxu0 0
      %862 = vmatpush2.bf16.msra.mxu0 0
      %863 = vmatprep.subr.bf16.mxu0 0
      %864 = vmatpush2.bf16.msra.mxu0 0
      %865 = vmatprep.mubr.bf16.mxu0 0
      %866 = vmatmul.mubr.bf16.gmra.mxu0 %v671
      %v867 = vpop.f32.mrf.mxu0
      %v868 = vadd.f32 %v820, %v867
      %v869 = vpop.f32.mrf.mxu0
      %v870 = vpop.f32.mrf.mxu0
      %v871 = vadd.f32 %v820, %v870
      %v872 = vpop.f32.mrf.mxu0
      %873 = vmatprep.mubr.bf16.mxu0 0
      %874 = vmatmul.mubr.bf16.gmra.mxu0 %v674
      %v875 = vpop.f32.mrf.mxu0
      %v876 = vadd.f32 %v820, %v875
      %v877 = vpop.f32.mrf.mxu0
      %v878 = vpop.f32.mrf.mxu0
      %v879 = vadd.f32 %v820, %v878
      %v880 = vpop.f32.mrf.mxu0
      %881 = vmatprep.mubr.bf16.mxu0 0
      %882 = vmatmul.mubr.bf16.gmra.mxu0 %v677
      %v883 = vpop.f32.mrf.mxu0
      %v884 = vadd.f32 %v820, %v883
      %v885 = vpop.f32.mrf.mxu0
      %v886 = vpop.f32.mrf.mxu0
      %v887 = vpop.f32.mrf.mxu0
      %888 = vdwg.mxu0
      %vm889 = vcmask 130048
      %v891 = vsel %vm889, %v714, 0
      %v894 = vsel %vm889, %v717, 0
      %v897 = vsel %vm889, %v722, 0
      %v900 = vsel %vm889, %v725, 0
      %v903 = vsel %vm889, %v730, 0
      %v906 = vsel %vm889, %v791, 0
      %v909 = vsel %vm889, %v794, 0
      %v912 = vsel %vm889, %v799, 0
      %v915 = vsel %vm889, %v802, 0
      %v918 = vsel %vm889, %v807, 0
      %920 = vmatprep.subr.mxu0 0.0
      %921 = vmatpush1.xpose.msra.mxu0 0.0
      %922 = vmatprep.subr.mxu0 0.0
      %923 = vmatpush1.xpose.msra.mxu0 0.0
      %924 = vmatprep.subr.mxu0 0.0
      %925 = vmatpush1.xpose.msra.mxu0 0.0
      %926 = vmatprep.subr.mxu0 0.0
      %927 = vmatpush1.xpose.msra.mxu0 0.0
      %928 = vmatprep.subr.mxu0 0.0
      %929 = vmatpush1.xpose.msra.mxu0 0.0
      %930 = vmatprep.subr.mxu0 0.0
      %931 = vmatpush1.xpose.msra.mxu0 0.0
      %932 = vmatprep.subr.mxu0 0.0
      %933 = vmatpush1.xpose.msra.mxu0 0.0
      %934 = vmatprep.subr.mxu0 0.0
      %935 = vmatpush1.xpose.msra.mxu0 0.0
      %936 = vmatprep.subr.mxu0 0.0
      %937 = vmatpush1.xpose.msra.mxu0 0.0
      %938 = vmatprep.subr.mxu0 0.0
      %939 = vmatpush1.xpose.msra.mxu0 0.0
      %940 = vmatprep.subr.mxu0 0.0
      %941 = vmatpush1.xpose.msra.mxu0 0.0
      %942 = vmatprep.subr.mxu0 0.0
      %943 = vmatpush1.xpose.msra.mxu0 %v918
      %944 = vmatprep.subr.mxu0 0.0
      %945 = vmatpush1.xpose.msra.mxu0 %v915
      %946 = vmatprep.subr.mxu0 0.0
      %947 = vmatpush1.xpose.msra.mxu0 %v912
      %948 = vmatprep.subr.mxu0 0.0
      %949 = vmatpush1.xpose.msra.mxu0 %v909
      %950 = vmatprep.subr.mxu0 0.0
      %951 = vmatpush1.xpose.msra.mxu0 %v906
      %952 = vmatprep.subr.mxu0 0.0
      %953 = vmatpush2.xpose.msra.mxu0 0.0
      %954 = vmatprep.subr.mxu0 0.0
      %955 = vmatpush2.xpose.msra.mxu0 0.0
      %956 = vmatprep.subr.mxu0 0.0
      %957 = vmatpush2.xpose.msra.mxu0 0.0
      %958 = vmatprep.subr.mxu0 0.0
      %959 = vmatpush2.xpose.msra.mxu0 0.0
      %960 = vmatprep.subr.mxu0 0.0
      %961 = vmatpush2.xpose.msra.mxu0 0.0
      %962 = vmatprep.subr.mxu0 0.0
      %963 = vmatpush2.xpose.msra.mxu0 0.0
      %964 = vmatprep.subr.mxu0 0.0
      %965 = vmatpush2.xpose.msra.mxu0 0.0
      %966 = vmatprep.subr.mxu0 0.0
      %967 = vmatpush2.xpose.msra.mxu0 0.0
      %968 = vmatprep.subr.mxu0 0.0
      %969 = vmatpush2.xpose.msra.mxu0 0.0
      %970 = vmatprep.subr.mxu0 0.0
      %971 = vmatpush2.xpose.msra.mxu0 0.0
      %972 = vmatprep.subr.mxu0 0.0
      %973 = vmatpush2.xpose.msra.mxu0 0.0
      %974 = vmatprep.subr.mxu0 0.0
      %975 = vmatpush2.xpose.msra.mxu0 0.0
      %976 = vmatprep.subr.mxu0 0.0
      %977 = vmatpush2.xpose.msra.mxu0 0.0
      %978 = vmatprep.subr.mxu0 0.0
      %979 = vmatpush2.xpose.msra.mxu0 0.0
      %980 = vmatprep.subr.mxu0 0.0
      %981 = vmatpush2.xpose.msra.mxu0 0.0
      %982 = vmatprep.subr.mxu0 0.0
      %983 = vmatpush2.xpose.msra.mxu0 0.0
      %984 = vmatprep.mubr.f32.mxu0 0.0
      %985 = vmatmul.mubr.f32.gmra.mxu0 %v891
      %v986 = vpop.f32.mrf.mxu0
      %v987 = vadd.f32 %v202, %v986
      %v988 = vpop.f32.mrf.mxu0
      %989 = vmatprep.mubr.f32.mxu0 0.0
      %990 = vmatmul.mubr.f32.gmra.mxu0 %v894
      %v991 = vpop.f32.mrf.mxu0
      %v992 = vadd.f32 %v202, %v991
      %v993 = vpop.f32.mrf.mxu0
      %994 = vmatprep.mubr.f32.mxu0 0.0
      %995 = vmatmul.mubr.f32.gmra.mxu0 %v897
      %v996 = vpop.f32.mrf.mxu0
      %v997 = vadd.f32 %v202, %v996
      %v998 = vpop.f32.mrf.mxu0
      %999 = vmatprep.mubr.f32.mxu0 0.0
      %1000 = vmatmul.mubr.f32.gmra.mxu0 %v900
      %v1001 = vpop.f32.mrf.mxu0
      %v1002 = vadd.f32 %v202, %v1001
      %v1003 = vpop.f32.mrf.mxu0
      %1004 = vmatprep.mubr.f32.mxu0 0.0
      %1005 = vmatmul.mubr.f32.gmra.mxu0 %v903
      %v1006 = vpop.f32.mrf.mxu0
      %v1007 = vadd.f32 %v202, %v1006
      %v1008 = vpop.f32.mrf.mxu0
      %1009 = vdwg.mxu0
      %vm1010 = vcmask 326656
      %v1011 = vsel %vm1010, %v987, -inf
      %1012 = vmax.xlane.f32.xlu0 %v1011
      %v1013 = vpop.xlane.xlu0 %1012
      %v1014 = vsel %vm1010, %v992, -inf
      %1015 = vmax.xlane.f32.xlu0 %v1014
      %v1016 = vpop.xlane.xlu0 %1015
      %v1017 = vsel %vm1010, %v997, -inf
      %1018 = vmax.xlane.f32.xlu0 %v1017
      %v1019 = vpop.xlane.xlu0 %1018
      %v1020 = vsel %vm1010, %v1002, -inf
      %1021 = vmax.xlane.f32.xlu0 %v1020
      %v1022 = vpop.xlane.xlu0 %1021
      %v1023 = vsel %vm1010, %v1007, -inf
      %1024 = vmax.xlane.f32.xlu0 %v1023
      %v1025 = vpop.xlane.xlu0 %1024
      %v1026 = vsub.f32 %v987, %v1013
      %v1027 = vsub.f32 %v992, %v1016
      %v1028 = vsub.f32 %v997, %v1019
      %v1029 = vsub.f32 %v1002, %v1022
      %v1030 = vsub.f32 %v1007, %v1025
      %v1031 = vmul.f32 %v1026, 1.442695
      %v1032 = vpow.pop %v1031
      %v1033 = vmul.f32 %v1027, 1.442695
      %v1034 = vpow.pop %v1033
      %v1035 = vmul.f32 %v1028, 1.442695
      %v1036 = vpow.pop %v1035
      %v1037 = vmul.f32 %v1029, 1.442695
      %v1038 = vpow.pop %v1037
      %v1039 = vmul.f32 %v1030, 1.442695
      %v1040 = vpow.pop %v1039
      %v1042 = vsel %vm1010, %v1032, 0
      %v1045 = vsel %vm1010, %v1034, 0
      %v1048 = vsel %vm1010, %v1036, 0
      %v1051 = vsel %vm1010, %v1038, 0
      %v1054 = vsel %vm1010, %v1040, 0
      %1056 = vmatprep.subr.mxu0 0.0
      %1057 = vmatpush1.msra.mxu0 0.0
      %1058 = vmatprep.subr.mxu0 0.0
      %1059 = vmatpush1.msra.mxu0 0.0
      %1060 = vmatprep.subr.mxu0 0.0
      %1061 = vmatpush1.msra.mxu0 0.0
      %1062 = vmatprep.subr.mxu0 0.0
      %1063 = vmatpush1.msra.mxu0 0.0
      %1064 = vmatprep.subr.mxu0 0.0
      %1065 = vmatpush1.msra.mxu0 0.0
      %1066 = vmatprep.subr.mxu0 0.0
      %1067 = vmatpush1.msra.mxu0 0.0
      %1068 = vmatprep.subr.mxu0 0.0
      %1069 = vmatpush1.msra.mxu0 0.0
      %1070 = vmatprep.subr.mxu0 0.0
      %1071 = vmatpush1.msra.mxu0 0.0
      %1072 = vmatprep.subr.mxu0 0.0
      %1073 = vmatpush1.msra.mxu0 0.0
      %1074 = vmatprep.subr.mxu0 0.0
      %1075 = vmatpush1.msra.mxu0 0.0
      %1076 = vmatprep.subr.mxu0 0.0
      %1077 = vmatpush1.msra.mxu0 0.0
      %1078 = vmatprep.subr.mxu0 0.0
      %1079 = vmatpush1.msra.mxu0 1.0
      %1080 = vmatprep.subr.mxu0 0.0
      %1081 = vmatpush1.msra.mxu0 1.0
      %1082 = vmatprep.subr.mxu0 0.0
      %1083 = vmatpush1.msra.mxu0 1.0
      %1084 = vmatprep.subr.mxu0 0.0
      %1085 = vmatpush1.msra.mxu0 1.0
      %1086 = vmatprep.subr.mxu0 0.0
      %1087 = vmatpush1.msra.mxu0 1.0
      %1088 = vmatprep.subr.mxu0 0.0
      %1089 = vmatpush2.msra.mxu0 0.0
      %1090 = vmatprep.subr.mxu0 0.0
      %1091 = vmatpush2.msra.mxu0 0.0
      %1092 = vmatprep.subr.mxu0 0.0
      %1093 = vmatpush2.msra.mxu0 0.0
      %1094 = vmatprep.subr.mxu0 0.0
      %1095 = vmatpush2.msra.mxu0 0.0
      %1096 = vmatprep.subr.mxu0 0.0
      %1097 = vmatpush2.msra.mxu0 0.0
      %1098 = vmatprep.subr.mxu0 0.0
      %1099 = vmatpush2.msra.mxu0 0.0
      %1100 = vmatprep.subr.mxu0 0.0
      %1101 = vmatpush2.msra.mxu0 0.0
      %1102 = vmatprep.subr.mxu0 0.0
      %1103 = vmatpush2.msra.mxu0 0.0
      %1104 = vmatprep.subr.mxu0 0.0
      %1105 = vmatpush2.msra.mxu0 0.0
      %1106 = vmatprep.subr.mxu0 0.0
      %1107 = vmatpush2.msra.mxu0 0.0
      %1108 = vmatprep.subr.mxu0 0.0
      %1109 = vmatpush2.msra.mxu0 0.0
      %1110 = vmatprep.subr.mxu0 0.0
      %1111 = vmatpush2.msra.mxu0 0.0
      %1112 = vmatprep.subr.mxu0 0.0
      %1113 = vmatpush2.msra.mxu0 0.0
      %1114 = vmatprep.subr.mxu0 0.0
      %1115 = vmatpush2.msra.mxu0 0.0
      %1116 = vmatprep.subr.mxu0 0.0
      %1117 = vmatpush2.msra.mxu0 0.0
      %1118 = vmatprep.subr.mxu0 0.0
      %1119 = vmatpush2.msra.mxu0 0.0
      %1120 = vmatprep.mubr.f32.mxu0 0.0
      %1121 = vmatmul.mubr.f32.gmra.mxu0 %v1042
      %v1122 = vpop.f32.mrf.mxu0
      %v1123 = vadd.f32 0.0, %v1122
      %v1124 = vpop.f32.mrf.mxu0
      %1125 = vmatprep.mubr.f32.mxu0 0.0
      %1126 = vmatmul.mubr.f32.gmra.mxu0 %v1045
      %v1127 = vpop.f32.mrf.mxu0
      %v1128 = vadd.f32 0.0, %v1127
      %v1129 = vpop.f32.mrf.mxu0
      %1130 = vmatprep.mubr.f32.mxu0 0.0
      %1131 = vmatmul.mubr.f32.gmra.mxu0 %v1048
      %v1132 = vpop.f32.mrf.mxu0
      %v1133 = vadd.f32 0.0, %v1132
      %v1134 = vpop.f32.mrf.mxu0
      %1135 = vmatprep.mubr.f32.mxu0 0.0
      %1136 = vmatmul.mubr.f32.gmra.mxu0 %v1051
      %v1137 = vpop.f32.mrf.mxu0
      %v1138 = vadd.f32 0.0, %v1137
      %v1139 = vpop.f32.mrf.mxu0
      %1140 = vmatprep.mubr.f32.mxu0 0.0
      %1141 = vmatmul.mubr.f32.gmra.mxu0 %v1054
      %v1142 = vpop.f32.mrf.mxu0
      %v1143 = vadd.f32 0.0, %v1142
      %v1144 = vpop.f32.mrf.mxu0
      %1145 = vdwg.mxu0
      %1146 = vmatprep.subr.mxu0 0.0
      %1147 = vmatpush1.msra.mxu0 0.0
      %1148 = vmatprep.subr.mxu0 0.0
      %1149 = vmatpush1.msra.mxu0 0.0
      %1150 = vmatprep.subr.mxu0 0.0
      %1151 = vmatpush1.msra.mxu0 0.0
      %1152 = vmatprep.subr.mxu0 0.0
      %1153 = vmatpush1.msra.mxu0 0.0
      %1154 = vmatprep.subr.mxu0 0.0
      %1155 = vmatpush1.msra.mxu0 0.0
      %1156 = vmatprep.subr.mxu0 0.0
      %1157 = vmatpush1.msra.mxu0 0.0
      %1158 = vmatprep.subr.mxu0 0.0
      %1159 = vmatpush1.msra.mxu0 0.0
      %1160 = vmatprep.subr.mxu0 0.0
      %1161 = vmatpush1.msra.mxu0 0.0
      %1162 = vmatprep.subr.mxu0 0.0
      %1163 = vmatpush1.msra.mxu0 0.0
      %1164 = vmatprep.subr.mxu0 0.0
      %1165 = vmatpush1.msra.mxu0 0.0
      %1166 = vmatprep.subr.mxu0 0.0
      %1167 = vmatpush1.msra.mxu0 0.0
      %1168 = vmatprep.subr.mxu0 0.0
      %1169 = vmatpush1.msra.mxu0 %v884
      %1170 = vmatprep.subr.mxu0 0.0
      %1171 = vmatpush1.msra.mxu0 %v879
      %1172 = vmatprep.subr.mxu0 0.0
      %1173 = vmatpush1.msra.mxu0 %v876
      %1174 = vmatprep.subr.mxu0 0.0
      %1175 = vmatpush1.msra.mxu0 %v871
      %1176 = vmatprep.subr.mxu0 0.0
      %1177 = vmatpush1.msra.mxu0 %v868
      %1178 = vmatprep.subr.mxu0 0.0
      %1179 = vmatpush2.msra.mxu0 0.0
      %1180 = vmatprep.subr.mxu0 0.0
      %1181 = vmatpush2.msra.mxu0 0.0
      %1182 = vmatprep.subr.mxu0 0.0
      %1183 = vmatpush2.msra.mxu0 0.0
      %1184 = vmatprep.subr.mxu0 0.0
      %1185 = vmatpush2.msra.mxu0 0.0
      %1186 = vmatprep.subr.mxu0 0.0
      %1187 = vmatpush2.msra.mxu0 0.0
      %1188 = vmatprep.subr.mxu0 0.0
      %1189 = vmatpush2.msra.mxu0 0.0
      %1190 = vmatprep.subr.mxu0 0.0
      %1191 = vmatpush2.msra.mxu0 0.0
      %1192 = vmatprep.subr.mxu0 0.0
      %1193 = vmatpush2.msra.mxu0 0.0
      %1194 = vmatprep.subr.mxu0 0.0
      %1195 = vmatpush2.msra.mxu0 0.0
      %1196 = vmatprep.subr.mxu0 0.0
      %1197 = vmatpush2.msra.mxu0 0.0
      %1198 = vmatprep.subr.mxu0 0.0
      %1199 = vmatpush2.msra.mxu0 0.0
      %1200 = vmatprep.subr.mxu0 0.0
      %1201 = vmatpush2.msra.mxu0 0.0
      %1202 = vmatprep.subr.mxu0 0.0
      %1203 = vmatpush2.msra.mxu0 0.0
      %1204 = vmatprep.subr.mxu0 0.0
      %1205 = vmatpush2.msra.mxu0 0.0
      %1206 = vmatprep.subr.mxu0 0.0
      %1207 = vmatpush2.msra.mxu0 0.0
      %1208 = vmatprep.subr.mxu0 0.0
      %1209 = vmatpush2.msra.mxu0 0.0
      %1210 = vmatprep.mubr.f32.mxu0 0.0
      %1211 = vmatmul.mubr.f32.gmra.mxu0 %v1042
      %v1212 = vpop.f32.mrf.mxu0
      %v1213 = vadd.f32 0.0, %v1212
      %v1214 = vpop.f32.mrf.mxu0
      %1215 = vmatprep.mubr.f32.mxu0 0.0
      %1216 = vmatmul.mubr.f32.gmra.mxu0 %v1045
      %v1217 = vpop.f32.mrf.mxu0
      %v1218 = vadd.f32 0.0, %v1217
      %v1219 = vpop.f32.mrf.mxu0
      %1220 = vmatprep.mubr.f32.mxu0 0.0
      %1221 = vmatmul.mubr.f32.gmra.mxu0 %v1048
      %v1222 = vpop.f32.mrf.mxu0
      %v1223 = vadd.f32 0.0, %v1222
      %v1224 = vpop.f32.mrf.mxu0
      %1225 = vmatprep.mubr.f32.mxu0 0.0
      %1226 = vmatmul.mubr.f32.gmra.mxu0 %v1051
      %v1227 = vpop.f32.mrf.mxu0
      %v1228 = vadd.f32 0.0, %v1227
      %v1229 = vpop.f32.mrf.mxu0
      %1230 = vmatprep.mubr.f32.mxu0 0.0
      %1231 = vmatmul.mubr.f32.gmra.mxu0 %v1054
      %v1232 = vpop.f32.mrf.mxu0
      %v1233 = vadd.f32 0.0, %v1232
      %v1234 = vpop.f32.mrf.mxu0
      %1235 = vdwg.mxu0
      %v1236 = vrcp.pop %v1123
      %v1237 = vmul.f32 1.0, %v1236
      %v1238 = vrcp.pop %v1128
      %v1239 = vmul.f32 1.0, %v1238
      %v1240 = vrcp.pop %v1133
      %v1241 = vmul.f32 1.0, %v1240
      %v1242 = vrcp.pop %v1138
      %v1243 = vmul.f32 1.0, %v1242
      %v1244 = vrcp.pop %v1143
      %v1245 = vmul.f32 1.0, %v1244
      %1247 = vset.pattern.permute.xlu0 0
      %1248 = vperm.xlu0 %1247, %v1237
      %v1249 = vpop.permute.xlu0 %1248
      %1252 = vset.pattern.permute.xlu0 0
      %1253 = vperm.xlu0 %1252, %v1239
      %v1254 = vpop.permute.xlu0 %1253
      %1257 = vset.pattern.permute.xlu0 0
      %1258 = vperm.xlu0 %1257, %v1241
      %v1259 = vpop.permute.xlu0 %1258
      %1262 = vset.pattern.permute.xlu0 0
      %1263 = vperm.xlu0 %1262, %v1243
      %v1264 = vpop.permute.xlu0 %1263
      %1267 = vset.pattern.permute.xlu0 0
      %1268 = vperm.xlu0 %1267, %v1245
      %v1269 = vpop.permute.xlu0 %1268
      %v1271 = vmul.f32 %v1213, %v1249
      %v1272 = vmul.f32 %v1218, %v1254
      %v1273 = vmul.f32 %v1223, %v1259
      %v1274 = vmul.f32 %v1228, %v1264
      %v1275 = vmul.f32 %v1233, %v1269
      %v1276 = vadd.f32 %v1271, %v714
      %v1277 = vadd.f32 %v1272, %v717
      %v1278 = vadd.f32 %v1273, %v722
      %v1279 = vadd.f32 %v1274, %v725
      %v1280 = vadd.f32 %v1275, %v730
      %v1281 = vld [vmem:[%s1 + $0x60] sm:$0xf]
      %v1282 = vld [vmem:[%s1 + $0x64] sm:$0xf]
      %v1283 = vpack.c.bf16 %v1277, %v1276
      %v1284 = vpack.c.bf16 %v1279, %v1278
      %v1285 = vpack.c.bf16 %v1280, %v1280
      %v1286 = vld [vmem:[%s1 + $0x68] sm:$0xf]
      %v1287 = vld [vmem:[%s1 + $0x6c] sm:$0xf]
      %v1288 = vld [vmem:[%s1 + $0x70] sm:$0xf]
      %v1289 = vld [vmem:[%s1 + $0x74] sm:$0xf]
      %v1290 = vld [vmem:[%s2 + $0x5] sm:$0x1]
      %v1291 = vlaneseq
      %v1292 = vshrl.u32 %v1291, 7
      %v1293 = vsub.s32 0, %v1292
      %v1294 = vrot.slane %v1290, %v1293
      %v1299 = vunpack.c.l.b16 %v1286
      %v1300 = vunpack.c.l.b16 %v1287
      %v1301 = vunpack.c.l.b16 %v1288
      %v1302 = vunpack.c.l.b16 %v1289
      %v1303 = vpack.c.b16 %v1300, %v1299
      %v1304 = vpack.c.b16 %v1302, %v1301
      %1307 = vmatprep.subr.bf16.mxu0 0
      %1308 = vmatpush1.bf16.msra.mxu0 0
      %1309 = vmatprep.subr.bf16.mxu0 0
      %1310 = vmatpush1.bf16.msra.mxu0 0
      %1311 = vmatprep.subr.bf16.mxu0 0
      %1312 = vmatpush1.bf16.msra.mxu0 0
      %1313 = vmatprep.subr.bf16.mxu0 0
      %1314 = vmatpush1.bf16.msra.mxu0 0
      %1315 = vmatprep.subr.bf16.mxu0 0
      %1316 = vmatpush1.bf16.msra.mxu0 0
      %1317 = vmatprep.subr.bf16.mxu0 0
      %1318 = vmatpush1.bf16.msra.mxu0 0
      %1319 = vmatprep.subr.bf16.mxu0 0
      %1320 = vmatpush1.bf16.msra.mxu0 %v1304
      %1321 = vmatprep.subr.bf16.mxu0 0
      %1322 = vmatpush1.bf16.msra.mxu0 %v1303
      %1323 = vmatprep.subr.bf16.mxu0 0
      %1324 = vmatpush2.bf16.msra.mxu0 0
      %1325 = vmatprep.subr.bf16.mxu0 0
      %1326 = vmatpush2.bf16.msra.mxu0 0
      %1327 = vmatprep.subr.bf16.mxu0 0
      %1328 = vmatpush2.bf16.msra.mxu0 0
      %1329 = vmatprep.subr.bf16.mxu0 0
      %1330 = vmatpush2.bf16.msra.mxu0 0
      %1331 = vmatprep.subr.bf16.mxu0 0
      %1332 = vmatpush2.bf16.msra.mxu0 0
      %1333 = vmatprep.subr.bf16.mxu0 0
      %1334 = vmatpush2.bf16.msra.mxu0 0
      %1335 = vmatprep.subr.bf16.mxu0 0
      %1336 = vmatpush2.bf16.msra.mxu0 0
      %1337 = vmatprep.subr.bf16.mxu0 0
      %1338 = vmatpush2.bf16.msra.mxu0 0
      %1339 = vmatprep.mubr.bf16.mxu0 0
      %1340 = vmatmul.mubr.bf16.gmra.mxu0 %v671
      %v1341 = vpop.f32.mrf.mxu0
      %v1342 = vadd.f32 %v1294, %v1341
      %v1343 = vpop.f32.mrf.mxu0
      %v1344 = vpop.f32.mrf.mxu0
      %v1345 = vadd.f32 %v1294, %v1344
      %v1346 = vpop.f32.mrf.mxu0
      %1347 = vmatprep.mubr.bf16.mxu0 0
      %1348 = vmatmul.mubr.bf16.gmra.mxu0 %v674
      %v1349 = vpop.f32.mrf.mxu0
      %v1350 = vadd.f32 %v1294, %v1349
      %v1351 = vpop.f32.mrf.mxu0
      %v1352 = vpop.f32.mrf.mxu0
      %v1353 = vadd.f32 %v1294, %v1352
      %v1354 = vpop.f32.mrf.mxu0
      %1355 = vmatprep.mubr.bf16.mxu0 0
      %1356 = vmatmul.mubr.bf16.gmra.mxu0 %v677
      %v1357 = vpop.f32.mrf.mxu0
      %v1358 = vadd.f32 %v1294, %v1357
      %v1359 = vpop.f32.mrf.mxu0
      %v1360 = vpop.f32.mrf.mxu0
      %v1361 = vpop.f32.mrf.mxu0
      %1362 = vdwg.mxu0
      %v1363 = vld [vmem:[%s1 + $0x78] sm:$0xf]
      %v1364 = vld [vmem:[%s1 + $0x7c] sm:$0xf]
      %v1365 = vld [vmem:[%s1 + $0x80] sm:$0xf]
      %v1366 = vld [vmem:[%s1 + $0x84] sm:$0xf]
      %v1367 = vld [vmem:[%s2 + $0x6] sm:$0x1]
      %v1368 = vlaneseq
      %v1369 = vshrl.u32 %v1368, 7
      %v1370 = vsub.s32 0, %v1369
      %v1371 = vrot.slane %v1367, %v1370
      %v1376 = vunpack.c.l.b16 %v1363
      %v1377 = vunpack.c.l.b16 %v1364
      %v1378 = vunpack.c.l.b16 %v1365
      %v1379 = vunpack.c.l.b16 %v1366
      %v1380 = vpack.c.b16 %v1377, %v1376
      %v1381 = vpack.c.b16 %v1379, %v1378
      %1384 = vmatprep.subr.bf16.mxu0 0
      %1385 = vmatpush1.bf16.msra.mxu0 0
      %1386 = vmatprep.subr.bf16.mxu0 0
      %1387 = vmatpush1.bf16.msra.mxu0 0
      %1388 = vmatprep.subr.bf16.mxu0 0
      %1389 = vmatpush1.bf16.msra.mxu0 0
      %1390 = vmatprep.subr.bf16.mxu0 0
      %1391 = vmatpush1.bf16.msra.mxu0 0
      %1392 = vmatprep.subr.bf16.mxu0 0
      %1393 = vmatpush1.bf16.msra.mxu0 0
      %1394 = vmatprep.subr.bf16.mxu0 0
      %1395 = vmatpush1.bf16.msra.mxu0 0
      %1396 = vmatprep.subr.bf16.mxu0 0
      %1397 = vmatpush1.bf16.msra.mxu0 %v1381
      %1398 = vmatprep.subr.bf16.mxu0 0
      %1399 = vmatpush1.bf16.msra.mxu0 %v1380
      %1400 = vmatprep.subr.bf16.mxu0 0
      %1401 = vmatpush2.bf16.msra.mxu0 0
      %1402 = vmatprep.subr.bf16.mxu0 0
      %1403 = vmatpush2.bf16.msra.mxu0 0
      %1404 = vmatprep.subr.bf16.mxu0 0
      %1405 = vmatpush2.bf16.msra.mxu0 0
      %1406 = vmatprep.subr.bf16.mxu0 0
      %1407 = vmatpush2.bf16.msra.mxu0 0
      %1408 = vmatprep.subr.bf16.mxu0 0
      %1409 = vmatpush2.bf16.msra.mxu0 0
      %1410 = vmatprep.subr.bf16.mxu0 0
      %1411 = vmatpush2.bf16.msra.mxu0 0
      %1412 = vmatprep.subr.bf16.mxu0 0
      %1413 = vmatpush2.bf16.msra.mxu0 0
      %1414 = vmatprep.subr.bf16.mxu0 0
      %1415 = vmatpush2.bf16.msra.mxu0 0
      %1416 = vmatprep.mubr.bf16.mxu0 0
      %1417 = vmatmul.mubr.bf16.gmra.mxu0 %v671
      %v1418 = vpop.f32.mrf.mxu0
      %v1419 = vadd.f32 %v1371, %v1418
      %v1420 = vpop.f32.mrf.mxu0
      %v1421 = vpop.f32.mrf.mxu0
      %v1422 = vadd.f32 %v1371, %v1421
      %v1423 = vpop.f32.mrf.mxu0
      %1424 = vmatprep.mubr.bf16.mxu0 0
      %1425 = vmatmul.mubr.bf16.gmra.mxu0 %v674
      %v1426 = vpop.f32.mrf.mxu0
      %v1427 = vadd.f32 %v1371, %v1426
      %v1428 = vpop.f32.mrf.mxu0
      %v1429 = vpop.f32.mrf.mxu0
      %v1430 = vadd.f32 %v1371, %v1429
      %v1431 = vpop.f32.mrf.mxu0
      %1432 = vmatprep.mubr.bf16.mxu0 0
      %1433 = vmatmul.mubr.bf16.gmra.mxu0 %v677
      %v1434 = vpop.f32.mrf.mxu0
      %v1435 = vadd.f32 %v1371, %v1434
      %v1436 = vpop.f32.mrf.mxu0
      %v1437 = vpop.f32.mrf.mxu0
      %v1438 = vpop.f32.mrf.mxu0
      %1439 = vdwg.mxu0
      %v1440 = vld [vmem:[%s1 + $0x88] sm:$0xf]
      %v1441 = vld [vmem:[%s1 + $0x8c] sm:$0xf]
      %v1442 = vld [vmem:[%s1 + $0x90] sm:$0xf]
      %v1443 = vld [vmem:[%s1 + $0x94] sm:$0xf]
      %v1444 = vld [vmem:[%s2 + $0x7] sm:$0x1]
      %v1445 = vlaneseq
      %v1446 = vshrl.u32 %v1445, 7
      %v1447 = vsub.s32 0, %v1446
      %v1448 = vrot.slane %v1444, %v1447
      %v1453 = vunpack.c.l.b16 %v1440
      %v1454 = vunpack.c.l.b16 %v1441
      %v1455 = vunpack.c.l.b16 %v1442
      %v1456 = vunpack.c.l.b16 %v1443
      %v1457 = vpack.c.b16 %v1454, %v1453
      %v1458 = vpack.c.b16 %v1456, %v1455
      %1461 = vmatprep.subr.bf16.mxu0 0
      %1462 = vmatpush1.bf16.msra.mxu0 0
      %1463 = vmatprep.subr.bf16.mxu0 0
      %1464 = vmatpush1.bf16.msra.mxu0 0
      %1465 = vmatprep.subr.bf16.mxu0 0
      %1466 = vmatpush1.bf16.msra.mxu0 0
      %1467 = vmatprep.subr.bf16.mxu0 0
      %1468 = vmatpush1.bf16.msra.mxu0 0
      %1469 = vmatprep.subr.bf16.mxu0 0
      %1470 = vmatpush1.bf16.msra.mxu0 0
      %1471 = vmatprep.subr.bf16.mxu0 0
      %1472 = vmatpush1.bf16.msra.mxu0 0
      %1473 = vmatprep.subr.bf16.mxu0 0
      %1474 = vmatpush1.bf16.msra.mxu0 %v1458
      %1475 = vmatprep.subr.bf16.mxu0 0
      %1476 = vmatpush1.bf16.msra.mxu0 %v1457
      %1477 = vmatprep.subr.bf16.mxu0 0
      %1478 = vmatpush2.bf16.msra.mxu0 0
      %1479 = vmatprep.subr.bf16.mxu0 0
      %1480 = vmatpush2.bf16.msra.mxu0 0
      %1481 = vmatprep.subr.bf16.mxu0 0
      %1482 = vmatpush2.bf16.msra.mxu0 0
      %1483 = vmatprep.subr.bf16.mxu0 0
      %1484 = vmatpush2.bf16.msra.mxu0 0
      %1485 = vmatprep.subr.bf16.mxu0 0
      %1486 = vmatpush2.bf16.msra.mxu0 0
      %1487 = vmatprep.subr.bf16.mxu0 0
      %1488 = vmatpush2.bf16.msra.mxu0 0
      %1489 = vmatprep.subr.bf16.mxu0 0
      %1490 = vmatpush2.bf16.msra.mxu0 0
      %1491 = vmatprep.subr.bf16.mxu0 0
      %1492 = vmatpush2.bf16.msra.mxu0 0
      %1493 = vmatprep.mubr.bf16.mxu0 0
      %1494 = vmatmul.mubr.bf16.gmra.mxu0 %v671
      %v1495 = vpop.f32.mrf.mxu0
      %v1496 = vadd.f32 %v1448, %v1495
      %v1497 = vpop.f32.mrf.mxu0
      %v1498 = vpop.f32.mrf.mxu0
      %v1499 = vadd.f32 %v1448, %v1498
      %v1500 = vpop.f32.mrf.mxu0
      %1501 = vmatprep.mubr.bf16.mxu0 0
      %1502 = vmatmul.mubr.bf16.gmra.mxu0 %v674
      %v1503 = vpop.f32.mrf.mxu0
      %v1504 = vadd.f32 %v1448, %v1503
      %v1505 = vpop.f32.mrf.mxu0
      %v1506 = vpop.f32.mrf.mxu0
      %v1507 = vadd.f32 %v1448, %v1506
      %v1508 = vpop.f32.mrf.mxu0
      %1509 = vmatprep.mubr.bf16.mxu0 0
      %1510 = vmatmul.mubr.bf16.gmra.mxu0 %v677
      %v1511 = vpop.f32.mrf.mxu0
      %v1512 = vadd.f32 %v1448, %v1511
      %v1513 = vpop.f32.mrf.mxu0
      %v1514 = vpop.f32.mrf.mxu0
      %v1515 = vpop.f32.mrf.mxu0
      %1516 = vdwg.mxu0
      %v1518 = vsel %vm889, %v1342, 0
      %v1521 = vsel %vm889, %v1345, 0
      %v1524 = vsel %vm889, %v1350, 0
      %v1527 = vsel %vm889, %v1353, 0
      %v1530 = vsel %vm889, %v1358, 0
      %v1533 = vsel %vm889, %v1419, 0
      %v1536 = vsel %vm889, %v1422, 0
      %v1539 = vsel %vm889, %v1427, 0
      %v1542 = vsel %vm889, %v1430, 0
      %v1545 = vsel %vm889, %v1435, 0
      %1547 = vmatprep.subr.mxu0 0.0
      %1548 = vmatpush1.xpose.msra.mxu0 0.0
      %1549 = vmatprep.subr.mxu0 0.0
      %1550 = vmatpush1.xpose.msra.mxu0 0.0
      %1551 = vmatprep.subr.mxu0 0.0
      %1552 = vmatpush1.xpose.msra.mxu0 0.0
      %1553 = vmatprep.subr.mxu0 0.0
      %1554 = vmatpush1.xpose.msra.mxu0 0.0
      %1555 = vmatprep.subr.mxu0 0.0
      %1556 = vmatpush1.xpose.msra.mxu0 0.0
      %1557 = vmatprep.subr.mxu0 0.0
      %1558 = vmatpush1.xpose.msra.mxu0 0.0
      %1559 = vmatprep.subr.mxu0 0.0
      %1560 = vmatpush1.xpose.msra.mxu0 0.0
      %1561 = vmatprep.subr.mxu0 0.0
      %1562 = vmatpush1.xpose.msra.mxu0 0.0
      %1563 = vmatprep.subr.mxu0 0.0
      %1564 = vmatpush1.xpose.msra.mxu0 0.0
      %1565 = vmatprep.subr.mxu0 0.0
      %1566 = vmatpush1.xpose.msra.mxu0 0.0
      %1567 = vmatprep.subr.mxu0 0.0
      %1568 = vmatpush1.xpose.msra.mxu0 0.0
      %1569 = vmatprep.subr.mxu0 0.0
      %1570 = vmatpush1.xpose.msra.mxu0 %v1545
      %1571 = vmatprep.subr.mxu0 0.0
      %1572 = vmatpush1.xpose.msra.mxu0 %v1542
      %1573 = vmatprep.subr.mxu0 0.0
      %1574 = vmatpush1.xpose.msra.mxu0 %v1539
      %1575 = vmatprep.subr.mxu0 0.0
      %1576 = vmatpush1.xpose.msra.mxu0 %v1536
      %1577 = vmatprep.subr.mxu0 0.0
      %1578 = vmatpush1.xpose.msra.mxu0 %v1533
      %1579 = vmatprep.subr.mxu0 0.0
      %1580 = vmatpush2.xpose.msra.mxu0 0.0
      %1581 = vmatprep.subr.mxu0 0.0
      %1582 = vmatpush2.xpose.msra.mxu0 0.0
      %1583 = vmatprep.subr.mxu0 0.0
      %1584 = vmatpush2.xpose.msra.mxu0 0.0
      %1585 = vmatprep.subr.mxu0 0.0
      %1586 = vmatpush2.xpose.msra.mxu0 0.0
      %1587 = vmatprep.subr.mxu0 0.0
      %1588 = vmatpush2.xpose.msra.mxu0 0.0
      %1589 = vmatprep.subr.mxu0 0.0
      %1590 = vmatpush2.xpose.msra.mxu0 0.0
      %1591 = vmatprep.subr.mxu0 0.0
      %1592 = vmatpush2.xpose.msra.mxu0 0.0
      %1593 = vmatprep.subr.mxu0 0.0
      %1594 = vmatpush2.xpose.msra.mxu0 0.0
      %1595 = vmatprep.subr.mxu0 0.0
      %1596 = vmatpush2.xpose.msra.mxu0 0.0
      %1597 = vmatprep.subr.mxu0 0.0
      %1598 = vmatpush2.xpose.msra.mxu0 0.0
      %1599 = vmatprep.subr.mxu0 0.0
      %1600 = vmatpush2.xpose.msra.mxu0 0.0
      %1601 = vmatprep.subr.mxu0 0.0
      %1602 = vmatpush2.xpose.msra.mxu0 0.0
      %1603 = vmatprep.subr.mxu0 0.0
      %1604 = vmatpush2.xpose.msra.mxu0 0.0
      %1605 = vmatprep.subr.mxu0 0.0
      %1606 = vmatpush2.xpose.msra.mxu0 0.0
      %1607 = vmatprep.subr.mxu0 0.0
      %1608 = vmatpush2.xpose.msra.mxu0 0.0
      %1609 = vmatprep.subr.mxu0 0.0
      %1610 = vmatpush2.xpose.msra.mxu0 0.0
      %1611 = vmatprep.mubr.f32.mxu0 0.0
      %1612 = vmatmul.mubr.f32.gmra.mxu0 %v1518
      %v1613 = vpop.f32.mrf.mxu0
      %v1614 = vadd.f32 %v202, %v1613
      %v1615 = vpop.f32.mrf.mxu0
      %1616 = vmatprep.mubr.f32.mxu0 0.0
      %1617 = vmatmul.mubr.f32.gmra.mxu0 %v1521
      %v1618 = vpop.f32.mrf.mxu0
      %v1619 = vadd.f32 %v202, %v1618
      %v1620 = vpop.f32.mrf.mxu0
      %1621 = vmatprep.mubr.f32.mxu0 0.0
      %1622 = vmatmul.mubr.f32.gmra.mxu0 %v1524
      %v1623 = vpop.f32.mrf.mxu0
      %v1624 = vadd.f32 %v202, %v1623
      %v1625 = vpop.f32.mrf.mxu0
      %1626 = vmatprep.mubr.f32.mxu0 0.0
      %1627 = vmatmul.mubr.f32.gmra.mxu0 %v1527
      %v1628 = vpop.f32.mrf.mxu0
      %v1629 = vadd.f32 %v202, %v1628
      %v1630 = vpop.f32.mrf.mxu0
      %1631 = vmatprep.mubr.f32.mxu0 0.0
      %1632 = vmatmul.mubr.f32.gmra.mxu0 %v1530
      %v1633 = vpop.f32.mrf.mxu0
      %v1634 = vadd.f32 %v202, %v1633
      %v1635 = vpop.f32.mrf.mxu0
      %1636 = vdwg.mxu0
      %v1637 = vsel %vm1010, %v1614, -inf
      %1638 = vmax.xlane.f32.xlu0 %v1637
      %v1639 = vpop.xlane.xlu0 %1638
      %v1640 = vsel %vm1010, %v1619, -inf
      %1641 = vmax.xlane.f32.xlu0 %v1640
      %v1642 = vpop.xlane.xlu0 %1641
      %v1643 = vsel %vm1010, %v1624, -inf
      %1644 = vmax.xlane.f32.xlu0 %v1643
      %v1645 = vpop.xlane.xlu0 %1644
      %v1646 = vsel %vm1010, %v1629, -inf
      %1647 = vmax.xlane.f32.xlu0 %v1646
      %v1648 = vpop.xlane.xlu0 %1647
      %v1649 = vsel %vm1010, %v1634, -inf
      %1650 = vmax.xlane.f32.xlu0 %v1649
      %v1651 = vpop.xlane.xlu0 %1650
      %v1652 = vsub.f32 %v1614, %v1639
      %v1653 = vsub.f32 %v1619, %v1642
      %v1654 = vsub.f32 %v1624, %v1645
      %v1655 = vsub.f32 %v1629, %v1648
      %v1656 = vsub.f32 %v1634, %v1651
      %v1657 = vmul.f32 %v1652, 1.442695
      %v1658 = vpow.pop %v1657
      %v1659 = vmul.f32 %v1653, 1.442695
      %v1660 = vpow.pop %v1659
      %v1661 = vmul.f32 %v1654, 1.442695
      %v1662 = vpow.pop %v1661
      %v1663 = vmul.f32 %v1655, 1.442695
      %v1664 = vpow.pop %v1663
      %v1665 = vmul.f32 %v1656, 1.442695
      %v1666 = vpow.pop %v1665
      %v1668 = vsel %vm1010, %v1658, 0
      %v1671 = vsel %vm1010, %v1660, 0
      %v1674 = vsel %vm1010, %v1662, 0
      %v1677 = vsel %vm1010, %v1664, 0
      %v1680 = vsel %vm1010, %v1666, 0
      %1682 = vmatprep.subr.mxu0 0.0
      %1683 = vmatpush1.msra.mxu0 0.0
      %1684 = vmatprep.subr.mxu0 0.0
      %1685 = vmatpush1.msra.mxu0 0.0
      %1686 = vmatprep.subr.mxu0 0.0
      %1687 = vmatpush1.msra.mxu0 0.0
      %1688 = vmatprep.subr.mxu0 0.0
      %1689 = vmatpush1.msra.mxu0 0.0
      %1690 = vmatprep.subr.mxu0 0.0
      %1691 = vmatpush1.msra.mxu0 0.0
      %1692 = vmatprep.subr.mxu0 0.0
      %1693 = vmatpush1.msra.mxu0 0.0
      %1694 = vmatprep.subr.mxu0 0.0
      %1695 = vmatpush1.msra.mxu0 0.0
      %1696 = vmatprep.subr.mxu0 0.0
      %1697 = vmatpush1.msra.mxu0 0.0
      %1698 = vmatprep.subr.mxu0 0.0
      %1699 = vmatpush1.msra.mxu0 0.0
      %1700 = vmatprep.subr.mxu0 0.0
      %1701 = vmatpush1.msra.mxu0 0.0
      %1702 = vmatprep.subr.mxu0 0.0
      %1703 = vmatpush1.msra.mxu0 0.0
      %1704 = vmatprep.subr.mxu0 0.0
      %1705 = vmatpush1.msra.mxu0 1.0
      %1706 = vmatprep.subr.mxu0 0.0
      %1707 = vmatpush1.msra.mxu0 1.0
      %1708 = vmatprep.subr.mxu0 0.0
      %1709 = vmatpush1.msra.mxu0 1.0
      %1710 = vmatprep.subr.mxu0 0.0
      %1711 = vmatpush1.msra.mxu0 1.0
      %1712 = vmatprep.subr.mxu0 0.0
      %1713 = vmatpush1.msra.mxu0 1.0
      %1714 = vmatprep.subr.mxu0 0.0
      %1715 = vmatpush2.msra.mxu0 0.0
      %1716 = vmatprep.subr.mxu0 0.0
      %1717 = vmatpush2.msra.mxu0 0.0
      %1718 = vmatprep.subr.mxu0 0.0
      %1719 = vmatpush2.msra.mxu0 0.0
      %1720 = vmatprep.subr.mxu0 0.0
      %1721 = vmatpush2.msra.mxu0 0.0
      %1722 = vmatprep.subr.mxu0 0.0
      %1723 = vmatpush2.msra.mxu0 0.0
      %1724 = vmatprep.subr.mxu0 0.0
      %1725 = vmatpush2.msra.mxu0 0.0
      %1726 = vmatprep.subr.mxu0 0.0
      %1727 = vmatpush2.msra.mxu0 0.0
      %1728 = vmatprep.subr.mxu0 0.0
      %1729 = vmatpush2.msra.mxu0 0.0
      %1730 = vmatprep.subr.mxu0 0.0
      %1731 = vmatpush2.msra.mxu0 0.0
      %1732 = vmatprep.subr.mxu0 0.0
      %1733 = vmatpush2.msra.mxu0 0.0
      %1734 = vmatprep.subr.mxu0 0.0
      %1735 = vmatpush2.msra.mxu0 0.0
      %1736 = vmatprep.subr.mxu0 0.0
      %1737 = vmatpush2.msra.mxu0 0.0
      %1738 = vmatprep.subr.mxu0 0.0
      %1739 = vmatpush2.msra.mxu0 0.0
      %1740 = vmatprep.subr.mxu0 0.0
      %1741 = vmatpush2.msra.mxu0 0.0
      %1742 = vmatprep.subr.mxu0 0.0
      %1743 = vmatpush2.msra.mxu0 0.0
      %1744 = vmatprep.subr.mxu0 0.0
      %1745 = vmatpush2.msra.mxu0 0.0
      %1746 = vmatprep.mubr.f32.mxu0 0.0
      %1747 = vmatmul.mubr.f32.gmra.mxu0 %v1668
      %v1748 = vpop.f32.mrf.mxu0
      %v1749 = vadd.f32 0.0, %v1748
      %v1750 = vpop.f32.mrf.mxu0
      %1751 = vmatprep.mubr.f32.mxu0 0.0
      %1752 = vmatmul.mubr.f32.gmra.mxu0 %v1671
      %v1753 = vpop.f32.mrf.mxu0
      %v1754 = vadd.f32 0.0, %v1753
      %v1755 = vpop.f32.mrf.mxu0
      %1756 = vmatprep.mubr.f32.mxu0 0.0
      %1757 = vmatmul.mubr.f32.gmra.mxu0 %v1674
      %v1758 = vpop.f32.mrf.mxu0
      %v1759 = vadd.f32 0.0, %v1758
      %v1760 = vpop.f32.mrf.mxu0
      %1761 = vmatprep.mubr.f32.mxu0 0.0
      %1762 = vmatmul.mubr.f32.gmra.mxu0 %v1677
      %v1763 = vpop.f32.mrf.mxu0
      %v1764 = vadd.f32 0.0, %v1763
      %v1765 = vpop.f32.mrf.mxu0
      %1766 = vmatprep.mubr.f32.mxu0 0.0
      %1767 = vmatmul.mubr.f32.gmra.mxu0 %v1680
      %v1768 = vpop.f32.mrf.mxu0
      %v1769 = vadd.f32 0.0, %v1768
      %v1770 = vpop.f32.mrf.mxu0
      %1771 = vdwg.mxu0
      %1772 = vmatprep.subr.mxu0 0.0
      %1773 = vmatpush1.msra.mxu0 0.0
      %1774 = vmatprep.subr.mxu0 0.0
      %1775 = vmatpush1.msra.mxu0 0.0
      %1776 = vmatprep.subr.mxu0 0.0
      %1777 = vmatpush1.msra.mxu0 0.0
      %1778 = vmatprep.subr.mxu0 0.0
      %1779 = vmatpush1.msra.mxu0 0.0
      %1780 = vmatprep.subr.mxu0 0.0
      %1781 = vmatpush1.msra.mxu0 0.0
      %1782 = vmatprep.subr.mxu0 0.0
      %1783 = vmatpush1.msra.mxu0 0.0
      %1784 = vmatprep.subr.mxu0 0.0
      %1785 = vmatpush1.msra.mxu0 0.0
      %1786 = vmatprep.subr.mxu0 0.0
      %1787 = vmatpush1.msra.mxu0 0.0
      %1788 = vmatprep.subr.mxu0 0.0
      %1789 = vmatpush1.msra.mxu0 0.0
      %1790 = vmatprep.subr.mxu0 0.0
      %1791 = vmatpush1.msra.mxu0 0.0
      %1792 = vmatprep.subr.mxu0 0.0
      %1793 = vmatpush1.msra.mxu0 0.0
      %1794 = vmatprep.subr.mxu0 0.0
      %1795 = vmatpush1.msra.mxu0 %v1512
      %1796 = vmatprep.subr.mxu0 0.0
      %1797 = vmatpush1.msra.mxu0 %v1507
      %1798 = vmatprep.subr.mxu0 0.0
      %1799 = vmatpush1.msra.mxu0 %v1504
      %1800 = vmatprep.subr.mxu0 0.0
      %1801 = vmatpush1.msra.mxu0 %v1499
      %1802 = vmatprep.subr.mxu0 0.0
      %1803 = vmatpush1.msra.mxu0 %v1496
      %1804 = vmatprep.subr.mxu0 0.0
      %1805 = vmatpush2.msra.mxu0 0.0
      %1806 = vmatprep.subr.mxu0 0.0
      %1807 = vmatpush2.msra.mxu0 0.0
      %1808 = vmatprep.subr.mxu0 0.0
      %1809 = vmatpush2.msra.mxu0 0.0
      %1810 = vmatprep.subr.mxu0 0.0
      %1811 = vmatpush2.msra.mxu0 0.0
      %1812 = vmatprep.subr.mxu0 0.0
      %1813 = vmatpush2.msra.mxu0 0.0
      %1814 = vmatprep.subr.mxu0 0.0
      %1815 = vmatpush2.msra.mxu0 0.0
      %1816 = vmatprep.subr.mxu0 0.0
      %1817 = vmatpush2.msra.mxu0 0.0
      %1818 = vmatprep.subr.mxu0 0.0
      %1819 = vmatpush2.msra.mxu0 0.0
      %1820 = vmatprep.subr.mxu0 0.0
      %1821 = vmatpush2.msra.mxu0 0.0
      %1822 = vmatprep.subr.mxu0 0.0
      %1823 = vmatpush2.msra.mxu0 0.0
      %1824 = vmatprep.subr.mxu0 0.0
      %1825 = vmatpush2.msra.mxu0 0.0
      %1826 = vmatprep.subr.mxu0 0.0
      %1827 = vmatpush2.msra.mxu0 0.0
      %1828 = vmatprep.subr.mxu0 0.0
      %1829 = vmatpush2.msra.mxu0 0.0
      %1830 = vmatprep.subr.mxu0 0.0
      %1831 = vmatpush2.msra.mxu0 0.0
      %1832 = vmatprep.subr.mxu0 0.0
      %1833 = vmatpush2.msra.mxu0 0.0
      %1834 = vmatprep.subr.mxu0 0.0
      %1835 = vmatpush2.msra.mxu0 0.0
      %1836 = vmatprep.mubr.f32.mxu0 0.0
      %1837 = vmatmul.mubr.f32.gmra.mxu0 %v1668
      %v1838 = vpop.f32.mrf.mxu0
      %v1839 = vadd.f32 0.0, %v1838
      %v1840 = vpop.f32.mrf.mxu0
      %1841 = vmatprep.mubr.f32.mxu0 0.0
      %1842 = vmatmul.mubr.f32.gmra.mxu0 %v1671
      %v1843 = vpop.f32.mrf.mxu0
      %v1844 = vadd.f32 0.0, %v1843
      %v1845 = vpop.f32.mrf.mxu0
      %1846 = vmatprep.mubr.f32.mxu0 0.0
      %1847 = vmatmul.mubr.f32.gmra.mxu0 %v1674
      %v1848 = vpop.f32.mrf.mxu0
      %v1849 = vadd.f32 0.0, %v1848
      %v1850 = vpop.f32.mrf.mxu0
      %1851 = vmatprep.mubr.f32.mxu0 0.0
      %1852 = vmatmul.mubr.f32.gmra.mxu0 %v1677
      %v1853 = vpop.f32.mrf.mxu0
      %v1854 = vadd.f32 0.0, %v1853
      %v1855 = vpop.f32.mrf.mxu0
      %1856 = vmatprep.mubr.f32.mxu0 0.0
      %1857 = vmatmul.mubr.f32.gmra.mxu0 %v1680
      %v1858 = vpop.f32.mrf.mxu0
      %v1859 = vadd.f32 0.0, %v1858
      %v1860 = vpop.f32.mrf.mxu0
      %1861 = vdwg.mxu0
      %v1862 = vrcp.pop %v1749
      %v1863 = vmul.f32 1.0, %v1862
      %v1864 = vrcp.pop %v1754
      %v1865 = vmul.f32 1.0, %v1864
      %v1866 = vrcp.pop %v1759
      %v1867 = vmul.f32 1.0, %v1866
      %v1868 = vrcp.pop %v1764
      %v1869 = vmul.f32 1.0, %v1868
      %v1870 = vrcp.pop %v1769
      %v1871 = vmul.f32 1.0, %v1870
      %1873 = vset.pattern.permute.xlu0 0
      %1874 = vperm.xlu0 %1873, %v1863
      %v1875 = vpop.permute.xlu0 %1874
      %1878 = vset.pattern.permute.xlu0 0
      %1879 = vperm.xlu0 %1878, %v1865
      %v1880 = vpop.permute.xlu0 %1879
      %1883 = vset.pattern.permute.xlu0 0
      %1884 = vperm.xlu0 %1883, %v1867
      %v1885 = vpop.permute.xlu0 %1884
      %1888 = vset.pattern.permute.xlu0 0
      %1889 = vperm.xlu0 %1888, %v1869
      %v1890 = vpop.permute.xlu0 %1889
      %1893 = vset.pattern.permute.xlu0 0
      %1894 = vperm.xlu0 %1893, %v1871
      %v1895 = vpop.permute.xlu0 %1894
      %v1897 = vmul.f32 %v1839, %v1875
      %v1898 = vmul.f32 %v1844, %v1880
      %v1899 = vmul.f32 %v1849, %v1885
      %v1900 = vmul.f32 %v1854, %v1890
      %v1901 = vmul.f32 %v1859, %v1895
      %v1902 = vadd.f32 %v1897, %v1342
      %v1903 = vadd.f32 %v1898, %v1345
      %v1904 = vadd.f32 %v1899, %v1350
      %v1905 = vadd.f32 %v1900, %v1353
      %v1906 = vadd.f32 %v1901, %v1358
      %v1907 = vld [vmem:[%s1 + $0x98] sm:$0xf]
      %v1908 = vld [vmem:[%s1 + $0x9c] sm:$0xf]
      %v1909 = vpack.c.bf16 %v1903, %v1902
      %v1910 = vpack.c.bf16 %v1905, %v1904
      %v1911 = vpack.c.bf16 %v1906, %v1906
      %v1914 = vunpack.c.l.b16 %v1907
      %v1915 = vunpack.c.l.b16 %v1908
      %v1916 = vpack.c.b16 %v1915, %v1914
      %v1919 = vsel %vm889, %v1909, 0
      %v1922 = vsel %vm889, %v1910, 0
      %v1925 = vsel %vm889, %v1911, 0
      %1927 = vmatprep.subr.bf16.mxu0 0
      %1928 = vmatpush1.bf16.msra.mxu0 0
      %1929 = vmatprep.subr.bf16.mxu0 0
      %1930 = vmatpush1.bf16.msra.mxu0 0
      %1931 = vmatprep.subr.bf16.mxu0 0
      %1932 = vmatpush1.bf16.msra.mxu0 0
      %1933 = vmatprep.subr.bf16.mxu0 0
      %1934 = vmatpush1.bf16.msra.mxu0 0
      %1935 = vmatprep.subr.bf16.mxu0 0
      %1936 = vmatpush1.bf16.msra.mxu0 0
      %1937 = vmatprep.subr.bf16.mxu0 0
      %1938 = vmatpush1.bf16.msra.mxu0 0
      %1939 = vmatprep.subr.bf16.mxu0 0
      %1940 = vmatpush1.bf16.msra.mxu0 0
      %1941 = vmatprep.subr.bf16.mxu0 0
      %1942 = vmatpush1.bf16.msra.mxu0 %v1916
      %1943 = vmatprep.subr.bf16.mxu0 0
      %1944 = vmatpush2.bf16.msra.mxu0 0
      %1945 = vmatprep.subr.bf16.mxu0 0
      %1946 = vmatpush2.bf16.msra.mxu0 0
      %1947 = vmatprep.subr.bf16.mxu0 0
      %1948 = vmatpush2.bf16.msra.mxu0 0
      %1949 = vmatprep.subr.bf16.mxu0 0
      %1950 = vmatpush2.bf16.msra.mxu0 0
      %1951 = vmatprep.subr.bf16.mxu0 0
      %1952 = vmatpush2.bf16.msra.mxu0 0
      %1953 = vmatprep.subr.bf16.mxu0 0
      %1954 = vmatpush2.bf16.msra.mxu0 0
      %1955 = vmatprep.subr.bf16.mxu0 0
      %1956 = vmatpush2.bf16.msra.mxu0 0
      %1957 = vmatprep.subr.bf16.mxu0 0
      %1958 = vmatpush2.bf16.msra.mxu0 0
      %1959 = vmatprep.mubr.bf16.mxu0 0
      %1960 = vmatmul.mubr.bf16.gmra.mxu0 %v1919
      %v1961 = vpop.f32.mrf.mxu0
      %v1962 = vadd.f32 0.0, %v1961
      %v1963 = vpop.f32.mrf.mxu0
      %v1964 = vpop.f32.mrf.mxu0
      %v1965 = vadd.f32 0.0, %v1964
      %v1966 = vpop.f32.mrf.mxu0
      %1967 = vmatprep.mubr.bf16.mxu0 0
      %1968 = vmatmul.mubr.bf16.gmra.mxu0 %v1922
      %v1969 = vpop.f32.mrf.mxu0
      %v1970 = vadd.f32 0.0, %v1969
      %v1971 = vpop.f32.mrf.mxu0
      %v1972 = vpop.f32.mrf.mxu0
      %v1973 = vadd.f32 0.0, %v1972
      %v1974 = vpop.f32.mrf.mxu0
      %1975 = vmatprep.mubr.bf16.mxu0 0
      %1976 = vmatmul.mubr.bf16.gmra.mxu0 %v1925
      %v1977 = vpop.f32.mrf.mxu0
      %v1978 = vadd.f32 0.0, %v1977
      %v1979 = vpop.f32.mrf.mxu0
      %v1980 = vpop.f32.mrf.mxu0
      %v1981 = vpop.f32.mrf.mxu0
      %1982 = vdwg.mxu0
      %v1985 = vunpack.c.l.b16 %v1281
      %v1986 = vunpack.c.l.b16 %v1282
      %v1987 = vpack.c.b16 %v1986, %v1985
      %v1990 = vsel %vm889, %v1283, 0
      %v1993 = vsel %vm889, %v1284, 0
      %v1996 = vsel %vm889, %v1285, 0
      %1998 = vmatprep.subr.bf16.mxu0 0
      %1999 = vmatpush1.bf16.msra.mxu0 0
      %2000 = vmatprep.subr.bf16.mxu0 0
      %2001 = vmatpush1.bf16.msra.mxu0 0
      %2002 = vmatprep.subr.bf16.mxu0 0
      %2003 = vmatpush1.bf16.msra.mxu0 0
      %2004 = vmatprep.subr.bf16.mxu0 0
      %2005 = vmatpush1.bf16.msra.mxu0 0
      %2006 = vmatprep.subr.bf16.mxu0 0
      %2007 = vmatpush1.bf16.msra.mxu0 0
      %2008 = vmatprep.subr.bf16.mxu0 0
      %2009 = vmatpush1.bf16.msra.mxu0 0
      %2010 = vmatprep.subr.bf16.mxu0 0
      %2011 = vmatpush1.bf16.msra.mxu0 0
      %2012 = vmatprep.subr.bf16.mxu0 0
      %2013 = vmatpush1.bf16.msra.mxu0 %v1987
      %2014 = vmatprep.subr.bf16.mxu0 0
      %2015 = vmatpush2.bf16.msra.mxu0 0
      %2016 = vmatprep.subr.bf16.mxu0 0
      %2017 = vmatpush2.bf16.msra.mxu0 0
      %2018 = vmatprep.subr.bf16.mxu0 0
      %2019 = vmatpush2.bf16.msra.mxu0 0
      %2020 = vmatprep.subr.bf16.mxu0 0
      %2021 = vmatpush2.bf16.msra.mxu0 0
      %2022 = vmatprep.subr.bf16.mxu0 0
      %2023 = vmatpush2.bf16.msra.mxu0 0
      %2024 = vmatprep.subr.bf16.mxu0 0
      %2025 = vmatpush2.bf16.msra.mxu0 0
      %2026 = vmatprep.subr.bf16.mxu0 0
      %2027 = vmatpush2.bf16.msra.mxu0 0
      %2028 = vmatprep.subr.bf16.mxu0 0
      %2029 = vmatpush2.bf16.msra.mxu0 0
      %2030 = vmatprep.mubr.bf16.mxu0 0
      %2031 = vmatmul.mubr.bf16.gmra.mxu0 %v1990
      %v2032 = vpop.f32.mrf.mxu0
      %v2033 = vadd.f32 %v1962, %v2032
      %v2034 = vpop.f32.mrf.mxu0
      %v2035 = vpop.f32.mrf.mxu0
      %v2036 = vadd.f32 %v1965, %v2035
      %v2037 = vpop.f32.mrf.mxu0
      %2038 = vmatprep.mubr.bf16.mxu0 0
      %2039 = vmatmul.mubr.bf16.gmra.mxu0 %v1993
      %v2040 = vpop.f32.mrf.mxu0
      %v2041 = vadd.f32 %v1970, %v2040
      %v2042 = vpop.f32.mrf.mxu0
      %v2043 = vpop.f32.mrf.mxu0
      %v2044 = vadd.f32 %v1973, %v2043
      %v2045 = vpop.f32.mrf.mxu0
      %2046 = vmatprep.mubr.bf16.mxu0 0
      %2047 = vmatmul.mubr.bf16.gmra.mxu0 %v1996
      %v2048 = vpop.f32.mrf.mxu0
      %v2049 = vadd.f32 %v1978, %v2048
      %v2050 = vpop.f32.mrf.mxu0
      %v2051 = vpop.f32.mrf.mxu0
      %v2052 = vpop.f32.mrf.mxu0
      %2053 = vdwg.mxu0
      %v2054 = vadd.f32 %v309, %v2033
      %v2055 = vadd.f32 %v312, %v2036
      %v2056 = vadd.f32 %v317, %v2041
      %v2057 = vadd.f32 %v320, %v2044
      %v2058 = vadd.f32 %v325, %v2049
      %v2059 = vld [vmem:[%s2 + $0x8] sm:$0x1]
      %v2060 = vlaneseq
      %v2061 = vshrl.u32 %v2060, 7
      %v2062 = vsub.s32 0, %v2061
      %v2063 = vrot.slane %v2059, %v2062
      %v2064 = vadd.f32 %v2054, %v2063
      %v2065 = vadd.f32 %v2055, %v2063
      %v2066 = vadd.f32 %v2056, %v2063
      %v2067 = vadd.f32 %v2057, %v2063
      %v2068 = vadd.f32 %v2058, %v2063
      %v2070 = vsel %vm330, %v2064, 0
      %v2073 = vsel %vm330, %v2065, 0
      %v2076 = vsel %vm330, %v2066, 0
      %v2079 = vsel %vm330, %v2067, 0
      %v2082 = vsel %vm330, %v2068, 0
      %2084 = vmatprep.subr.mxu0 0.0
      %2085 = vmatpush1.msra.mxu0 0.0
      %2086 = vmatprep.subr.mxu0 0.0
      %2087 = vmatpush1.msra.mxu0 0.0
      %2088 = vmatprep.subr.mxu0 0.0
      %2089 = vmatpush1.msra.mxu0 0.0
      %2090 = vmatprep.subr.mxu0 0.0
      %2091 = vmatpush1.msra.mxu0 0.0
      %2092 = vmatprep.subr.mxu0 0.0
      %2093 = vmatpush1.msra.mxu0 0.0
      %2094 = vmatprep.subr.mxu0 0.0
      %2095 = vmatpush1.msra.mxu0 0.0
      %2096 = vmatprep.subr.mxu0 0.0
      %2097 = vmatpush1.msra.mxu0 0.0
      %2098 = vmatprep.subr.mxu0 0.0
      %2099 = vmatpush1.msra.mxu0 0.0
      %2100 = vmatprep.subr.mxu0 0.0
      %2101 = vmatpush1.msra.mxu0 0.0
      %2102 = vmatprep.subr.mxu0 0.0
      %2103 = vmatpush1.msra.mxu0 0.0
      %2104 = vmatprep.subr.mxu0 0.0
      %2105 = vmatpush1.msra.mxu0 0.0
      %2106 = vmatprep.subr.mxu0 0.0
      %2107 = vmatpush1.msra.mxu0 0.0
      %2108 = vmatprep.subr.mxu0 0.0
      %2109 = vmatpush1.msra.mxu0 1.0
      %2110 = vmatprep.subr.mxu0 0.0
      %2111 = vmatpush1.msra.mxu0 1.0
      %2112 = vmatprep.subr.mxu0 0.0
      %2113 = vmatpush1.msra.mxu0 1.0
      %2114 = vmatprep.subr.mxu0 0.0
      %2115 = vmatpush1.msra.mxu0 1.0
      %2116 = vmatprep.subr.mxu0 0.0
      %2117 = vmatpush2.msra.mxu0 0.0
      %2118 = vmatprep.subr.mxu0 0.0
      %2119 = vmatpush2.msra.mxu0 0.0
      %2120 = vmatprep.subr.mxu0 0.0
      %2121 = vmatpush2.msra.mxu0 0.0
      %2122 = vmatprep.subr.mxu0 0.0
      %2123 = vmatpush2.msra.mxu0 0.0
      %2124 = vmatprep.subr.mxu0 0.0
      %2125 = vmatpush2.msra.mxu0 0.0
      %2126 = vmatprep.subr.mxu0 0.0
      %2127 = vmatpush2.msra.mxu0 0.0
      %2128 = vmatprep.subr.mxu0 0.0
      %2129 = vmatpush2.msra.mxu0 0.0
      %2130 = vmatprep.subr.mxu0 0.0
      %2131 = vmatpush2.msra.mxu0 0.0
      %2132 = vmatprep.subr.mxu0 0.0
      %2133 = vmatpush2.msra.mxu0 0.0
      %2134 = vmatprep.subr.mxu0 0.0
      %2135 = vmatpush2.msra.mxu0 0.0
      %2136 = vmatprep.subr.mxu0 0.0
      %2137 = vmatpush2.msra.mxu0 0.0
      %2138 = vmatprep.subr.mxu0 0.0
      %2139 = vmatpush2.msra.mxu0 0.0
      %2140 = vmatprep.subr.mxu0 0.0
      %2141 = vmatpush2.msra.mxu0 0.0
      %2142 = vmatprep.subr.mxu0 0.0
      %2143 = vmatpush2.msra.mxu0 0.0
      %2144 = vmatprep.subr.mxu0 0.0
      %2145 = vmatpush2.msra.mxu0 0.0
      %2146 = vmatprep.subr.mxu0 0.0
      %2147 = vmatpush2.msra.mxu0 0.0
      %2148 = vmatprep.mubr.f32.mxu0 0.0
      %2149 = vmatmul.mubr.f32.gmra.mxu0 %v2070
      %v2150 = vpop.f32.mrf.mxu0
      %v2151 = vadd.f32 0.0, %v2150
      %v2152 = vpop.f32.mrf.mxu0
      %2153 = vmatprep.mubr.f32.mxu0 0.0
      %2154 = vmatmul.mubr.f32.gmra.mxu0 %v2073
      %v2155 = vpop.f32.mrf.mxu0
      %v2156 = vadd.f32 0.0, %v2155
      %v2157 = vpop.f32.mrf.mxu0
      %2158 = vmatprep.mubr.f32.mxu0 0.0
      %2159 = vmatmul.mubr.f32.gmra.mxu0 %v2076
      %v2160 = vpop.f32.mrf.mxu0
      %v2161 = vadd.f32 0.0, %v2160
      %v2162 = vpop.f32.mrf.mxu0
      %2163 = vmatprep.mubr.f32.mxu0 0.0
      %2164 = vmatmul.mubr.f32.gmra.mxu0 %v2079
      %v2165 = vpop.f32.mrf.mxu0
      %v2166 = vadd.f32 0.0, %v2165
      %v2167 = vpop.f32.mrf.mxu0
      %2168 = vmatprep.mubr.f32.mxu0 0.0
      %2169 = vmatmul.mubr.f32.gmra.mxu0 %v2082
      %v2170 = vpop.f32.mrf.mxu0
      %v2171 = vadd.f32 0.0, %v2170
      %v2172 = vpop.f32.mrf.mxu0
      %2173 = vdwg.mxu0
      %v2174 = vmul.f32 %v2151, 0.03125
      %v2175 = vmul.f32 %v2156, 0.03125
      %v2176 = vmul.f32 %v2161, 0.03125
      %v2177 = vmul.f32 %v2166, 0.03125
      %v2178 = vmul.f32 %v2171, 0.03125
      %2180 = vset.pattern.permute.xlu0 0
      %2181 = vperm.xlu0 %2180, %v2174
      %v2182 = vpop.permute.xlu0 %2181
      %2185 = vset.pattern.permute.xlu0 0
      %2186 = vperm.xlu0 %2185, %v2175
      %v2187 = vpop.permute.xlu0 %2186
      %2190 = vset.pattern.permute.xlu0 0
      %2191 = vperm.xlu0 %2190, %v2176
      %v2192 = vpop.permute.xlu0 %2191
      %2195 = vset.pattern.permute.xlu0 0
      %2196 = vperm.xlu0 %2195, %v2177
      %v2197 = vpop.permute.xlu0 %2196
      %2200 = vset.pattern.permute.xlu0 0
      %2201 = vperm.xlu0 %2200, %v2178
      %v2202 = vpop.permute.xlu0 %2201
      %v2204 = vsub.f32 %v2064, %v2182
      %v2205 = vsub.f32 %v2065, %v2187
      %v2206 = vsub.f32 %v2066, %v2192
      %v2207 = vsub.f32 %v2067, %v2197
      %v2208 = vsub.f32 %v2068, %v2202
      %v2209 = vmul.f32 %v2204, %v2204
      %v2210 = vmul.f32 %v2205, %v2205
      %v2211 = vmul.f32 %v2206, %v2206
      %v2212 = vmul.f32 %v2207, %v2207
      %v2213 = vmul.f32 %v2208, %v2208
      %v2215 = vsel %vm330, %v2209, 0
      %v2218 = vsel %vm330, %v2210, 0
      %v2221 = vsel %vm330, %v2211, 0
      %v2224 = vsel %vm330, %v2212, 0
      %v2227 = vsel %vm330, %v2213, 0
      %2229 = vmatprep.subr.mxu0 0.0
      %2230 = vmatpush1.msra.mxu0 0.0
      %2231 = vmatprep.subr.mxu0 0.0
      %2232 = vmatpush1.msra.mxu0 0.0
      %2233 = vmatprep.subr.mxu0 0.0
      %2234 = vmatpush1.msra.mxu0 0.0
      %2235 = vmatprep.subr.mxu0 0.0
      %2236 = vmatpush1.msra.mxu0 0.0
      %2237 = vmatprep.subr.mxu0 0.0
      %2238 = vmatpush1.msra.mxu0 0.0
      %2239 = vmatprep.subr.mxu0 0.0
      %2240 = vmatpush1.msra.mxu0 0.0
      %2241 = vmatprep.subr.mxu0 0.0
      %2242 = vmatpush1.msra.mxu0 0.0
      %2243 = vmatprep.subr.mxu0 0.0
      %2244 = vmatpush1.msra.mxu0 0.0
      %2245 = vmatprep.subr.mxu0 0.0
      %2246 = vmatpush1.msra.mxu0 0.0
      %2247 = vmatprep.subr.mxu0 0.0
      %2248 = vmatpush1.msra.mxu0 0.0
      %2249 = vmatprep.subr.mxu0 0.0
      %2250 = vmatpush1.msra.mxu0 0.0
      %2251 = vmatprep.subr.mxu0 0.0
      %2252 = vmatpush1.msra.mxu0 0.0
      %2253 = vmatprep.subr.mxu0 0.0
      %2254 = vmatpush1.msra.mxu0 1.0
      %2255 = vmatprep.subr.mxu0 0.0
      %2256 = vmatpush1.msra.mxu0 1.0
      %2257 = vmatprep.subr.mxu0 0.0
      %2258 = vmatpush1.msra.mxu0 1.0
      %2259 = vmatprep.subr.mxu0 0.0
      %2260 = vmatpush1.msra.mxu0 1.0
      %2261 = vmatprep.subr.mxu0 0.0
      %2262 = vmatpush2.msra.mxu0 0.0
      %2263 = vmatprep.subr.mxu0 0.0
      %2264 = vmatpush2.msra.mxu0 0.0
      %2265 = vmatprep.subr.mxu0 0.0
      %2266 = vmatpush2.msra.mxu0 0.0
      %2267 = vmatprep.subr.mxu0 0.0
      %2268 = vmatpush2.msra.mxu0 0.0
      %2269 = vmatprep.subr.mxu0 0.0
      %2270 = vmatpush2.msra.mxu0 0.0
      %2271 = vmatprep.subr.mxu0 0.0
      %2272 = vmatpush2.msra.mxu0 0.0
      %2273 = vmatprep.subr.mxu0 0.0
      %2274 = vmatpush2.msra.mxu0 0.0
      %2275 = vmatprep.subr.mxu0 0.0
      %2276 = vmatpush2.msra.mxu0 0.0
      %2277 = vmatprep.subr.mxu0 0.0
      %2278 = vmatpush2.msra.mxu0 0.0
      %2279 = vmatprep.subr.mxu0 0.0
      %2280 = vmatpush2.msra.mxu0 0.0
      %2281 = vmatprep.subr.mxu0 0.0
      %2282 = vmatpush2.msra.mxu0 0.0
      %2283 = vmatprep.subr.mxu0 0.0
      %2284 = vmatpush2.msra.mxu0 0.0
      %2285 = vmatprep.subr.mxu0 0.0
      %2286 = vmatpush2.msra.mxu0 0.0
      %2287 = vmatprep.subr.mxu0 0.0
      %2288 = vmatpush2.msra.mxu0 0.0
      %2289 = vmatprep.subr.mxu0 0.0
      %2290 = vmatpush2.msra.mxu0 0.0
      %2291 = vmatprep.subr.mxu0 0.0
      %2292 = vmatpush2.msra.mxu0 0.0
      %2293 = vmatprep.mubr.f32.mxu0 0.0
      %2294 = vmatmul.mubr.f32.gmra.mxu0 %v2215
      %v2295 = vpop.f32.mrf.mxu0
      %v2296 = vadd.f32 0.0, %v2295
      %v2297 = vpop.f32.mrf.mxu0
      %2298 = vmatprep.mubr.f32.mxu0 0.0
      %2299 = vmatmul.mubr.f32.gmra.mxu0 %v2218
      %v2300 = vpop.f32.mrf.mxu0
      %v2301 = vadd.f32 0.0, %v2300
      %v2302 = vpop.f32.mrf.mxu0
      %2303 = vmatprep.mubr.f32.mxu0 0.0
      %2304 = vmatmul.mubr.f32.gmra.mxu0 %v2221
      %v2305 = vpop.f32.mrf.mxu0
      %v2306 = vadd.f32 0.0, %v2305
      %v2307 = vpop.f32.mrf.mxu0
      %2308 = vmatprep.mubr.f32.mxu0 0.0
      %2309 = vmatmul.mubr.f32.gmra.mxu0 %v2224
      %v2310 = vpop.f32.mrf.mxu0
      %v2311 = vadd.f32 0.0, %v2310
      %v2312 = vpop.f32.mrf.mxu0
      %2313 = vmatprep.mubr.f32.mxu0 0.0
      %2314 = vmatmul.mubr.f32.gmra.mxu0 %v2227
      %v2315 = vpop.f32.mrf.mxu0
      %v2316 = vadd.f32 0.0, %v2315
      %v2317 = vpop.f32.mrf.mxu0
      %2318 = vdwg.mxu0
      %v2319 = vmul.f32 %v2296, 0.03125
      %v2320 = vmul.f32 %v2301, 0.03125
      %v2321 = vmul.f32 %v2306, 0.03125
      %v2322 = vmul.f32 %v2311, 0.03125
      %v2323 = vmul.f32 %v2316, 0.03125
      %v2324 = vadd.f32 %v2319, 1e-06
      %v2325 = vadd.f32 %v2320, 1e-06
      %v2326 = vadd.f32 %v2321, 1e-06
      %v2327 = vadd.f32 %v2322, 1e-06
      %v2328 = vadd.f32 %v2323, 1e-06
      %v2329 = vrsqrt.pop %v2324
      %v2330 = vrsqrt.pop %v2325
      %v2331 = vrsqrt.pop %v2326
      %v2332 = vrsqrt.pop %v2327
      %v2333 = vrsqrt.pop %v2328
      %2335 = vset.pattern.permute.xlu0 0
      %2336 = vperm.xlu0 %2335, %v2329
      %v2337 = vpop.permute.xlu0 %2336
      %2340 = vset.pattern.permute.xlu0 0
      %2341 = vperm.xlu0 %2340, %v2330
      %v2342 = vpop.permute.xlu0 %2341
      %2345 = vset.pattern.permute.xlu0 0
      %2346 = vperm.xlu0 %2345, %v2331
      %v2347 = vpop.permute.xlu0 %2346
      %2350 = vset.pattern.permute.xlu0 0
      %2351 = vperm.xlu0 %2350, %v2332
      %v2352 = vpop.permute.xlu0 %2351
      %2355 = vset.pattern.permute.xlu0 0
      %2356 = vperm.xlu0 %2355, %v2333
      %v2357 = vpop.permute.xlu0 %2356
      %v2359 = vmul.f32 %v2204, %v2337
      %v2360 = vmul.f32 %v2205, %v2342
      %v2361 = vmul.f32 %v2206, %v2347
      %v2362 = vmul.f32 %v2207, %v2352
      %v2363 = vmul.f32 %v2208, %v2357
      %v2364 = vld [vmem:[%s2 + $0x9] sm:$0x1]
      %v2365 = vlaneseq
      %v2366 = vshrl.u32 %v2365, 7
      %v2367 = vsub.s32 0, %v2366
      %v2368 = vrot.slane %v2364, %v2367
      %v2369 = vmul.f32 %v2359, %v2368
      %v2370 = vmul.f32 %v2360, %v2368
      %v2371 = vmul.f32 %v2361, %v2368
      %v2372 = vmul.f32 %v2362, %v2368
      %v2373 = vmul.f32 %v2363, %v2368
      %v2374 = vld [vmem:[%s2 + $0xa] sm:$0x1]
      %v2375 = vlaneseq
      %v2376 = vshrl.u32 %v2375, 7
      %v2377 = vsub.s32 0, %v2376
      %v2378 = vrot.slane %v2374, %v2377
      %v2379 = vadd.f32 %v2369, %v2378
      %v2380 = vadd.f32 %v2370, %v2378
      %v2381 = vadd.f32 %v2371, %v2378
      %v2382 = vadd.f32 %v2372, %v2378
      %v2383 = vadd.f32 %v2373, %v2378
      %v2384 = vld [vmem:[%s1 + $0xa0] sm:$0xf]
      %v2385 = vld [vmem:[%s1 + $0xa4] sm:$0xf]
      %v2386 = vld [vmem:[%s1 + $0xa8] sm:$0xf]
      %v2387 = vld [vmem:[%s1 + $0xac] sm:$0xf]
      %v2388 = vpack.c.bf16 %v2380, %v2379
      %v2389 = vpack.c.bf16 %v2382, %v2381
      %v2390 = vpack.c.bf16 %v2383, %v2383
      %v2391 = vld [vmem:[%s2 + $0xb] sm:$0x1]
      %v2392 = vlaneseq
      %v2393 = vshrl.u32 %v2392, 7
      %v2394 = vsub.s32 0, %v2393
      %v2395 = vrot.slane %v2391, %v2394
      %v2400 = vunpack.c.l.b16 %v2384
      %v2401 = vunpack.c.l.b16 %v2385
      %v2402 = vunpack.c.l.b16 %v2386
      %v2403 = vunpack.c.l.b16 %v2387
      %v2404 = vpack.c.b16 %v2401, %v2400
      %v2405 = vpack.c.b16 %v2403, %v2402
      %v2409 = vsel %vm330, %v2388, 0
      %v2412 = vsel %vm330, %v2389, 0
      %v2415 = vsel %vm330, %v2390, 0
      %2417 = vmatprep.subr.bf16.mxu0 0
      %2418 = vmatpush1.bf16.msra.mxu0 0
      %2419 = vmatprep.subr.bf16.mxu0 0
      %2420 = vmatpush1.bf16.msra.mxu0 0
      %2421 = vmatprep.subr.bf16.mxu0 0
      %2422 = vmatpush1.bf16.msra.mxu0 0
      %2423 = vmatprep.subr.bf16.mxu0 0
      %2424 = vmatpush1.bf16.msra.mxu0 0
      %2425 = vmatprep.subr.bf16.mxu0 0
      %2426 = vmatpush1.bf16.msra.mxu0 0
      %2427 = vmatprep.subr.bf16.mxu0 0
      %2428 = vmatpush1.bf16.msra.mxu0 0
      %2429 = vmatprep.subr.bf16.mxu0 0
      %2430 = vmatpush1.bf16.msra.mxu0 %v2405
      %2431 = vmatprep.subr.bf16.mxu0 0
      %2432 = vmatpush1.bf16.msra.mxu0 %v2404
      %2433 = vmatprep.subr.bf16.mxu0 0
      %2434 = vmatpush2.bf16.msra.mxu0 0
      %2435 = vmatprep.subr.bf16.mxu0 0
      %2436 = vmatpush2.bf16.msra.mxu0 0
      %2437 = vmatprep.subr.bf16.mxu0 0
      %2438 = vmatpush2.bf16.msra.mxu0 0
      %2439 = vmatprep.subr.bf16.mxu0 0
      %2440 = vmatpush2.bf16.msra.mxu0 0
      %2441 = vmatprep.subr.bf16.mxu0 0
      %2442 = vmatpush2.bf16.msra.mxu0 0
      %2443 = vmatprep.subr.bf16.mxu0 0
      %2444 = vmatpush2.bf16.msra.mxu0 0
      %2445 = vmatprep.subr.bf16.mxu0 0
      %2446 = vmatpush2.bf16.msra.mxu0 0
      %2447 = vmatprep.subr.bf16.mxu0 0
      %2448 = vmatpush2.bf16.msra.mxu0 0
      %2449 = vmatprep.mubr.bf16.mxu0 0
      %2450 = vmatmul.mubr.bf16.gmra.mxu0 %v2409
      %v2451 = vpop.f32.mrf.mxu0
      %v2452 = vadd.f32 %v2395, %v2451
      %v2453 = vpop.f32.mrf.mxu0
      %v2454 = vpop.f32.mrf.mxu0
      %v2455 = vadd.f32 %v2395, %v2454
      %v2456 = vpop.f32.mrf.mxu0
      %2457 = vmatprep.mubr.bf16.mxu0 0
      %2458 = vmatmul.mubr.bf16.gmra.mxu0 %v2412
      %v2459 = vpop.f32.mrf.mxu0
      %v2460 = vadd.f32 %v2395, %v2459
      %v2461 = vpop.f32.mrf.mxu0
      %v2462 = vpop.f32.mrf.mxu0
      %v2463 = vadd.f32 %v2395, %v2462
      %v2464 = vpop.f32.mrf.mxu0
      %2465 = vmatprep.mubr.bf16.mxu0 0
      %2466 = vmatmul.mubr.bf16.gmra.mxu0 %v2415
      %v2467 = vpop.f32.mrf.mxu0
      %v2468 = vadd.f32 %v2395, %v2467
      %v2469 = vpop.f32.mrf.mxu0
      %v2470 = vpop.f32.mrf.mxu0
      %v2471 = vpop.f32.mrf.mxu0
      %2472 = vdwg.mxu0
      %v2473 = vmul.f32 %v2452, 0.70710677
      %v2474 = vmul.f32 %v2455, 0.70710677
      %v2475 = vmul.f32 %v2460, 0.70710677
      %v2476 = vmul.f32 %v2463, 0.70710677
      %v2477 = vmul.f32 %v2468, 0.70710677
      %vm2478 = vcmp.ge.f32.partialorder %v2473, 0.0
      %vm2479 = vcmp.ge.f32.partialorder %v2474, 0.0
      %vm2480 = vcmp.ge.f32.partialorder %v2475, 0.0
      %vm2481 = vcmp.ge.f32.partialorder %v2476, 0.0
      %vm2482 = vcmp.ge.f32.partialorder %v2477, 0.0
      %v2483 = vsel %vm2478, 1.0, -1.0
      %v2484 = vsel %vm2479, 1.0, -1.0
      %v2485 = vsel %vm2480, 1.0, -1.0
      %v2486 = vsel %vm2481, 1.0, -1.0
      %v2487 = vsel %vm2482, 1.0, -1.0
      %v2488 = vand.u32 2147483647, %v2473
      %v2489 = vand.u32 2147483647, %v2474
      %v2490 = vand.u32 2147483647, %v2475
      %v2491 = vand.u32 2147483647, %v2476
      %v2492 = vand.u32 2147483647, %v2477
      %v2493 = vmul.f32 %v2488, 0.3275911
      %v2494 = vmul.f32 %v2489, 0.3275911
      %v2495 = vmul.f32 %v2490, 0.3275911
      %v2496 = vmul.f32 %v2491, 0.3275911
      %v2497 = vmul.f32 %v2492, 0.3275911
      %v2498 = vadd.f32 %v2493, 1.0
      %v2499 = vadd.f32 %v2494, 1.0
      %v2500 = vadd.f32 %v2495, 1.0
      %v2501 = vadd.f32 %v2496, 1.0
      %v2502 = vadd.f32 %v2497, 1.0
      %v2503 = vrcp.pop %v2498
      %v2504 = vmul.f32 1.0, %v2503
      %v2505 = vrcp.pop %v2499
      %v2506 = vmul.f32 1.0, %v2505
      %v2507 = vrcp.pop %v2500
      %v2508 = vmul.f32 1.0, %v2507
      %v2509 = vrcp.pop %v2501
      %v2510 = vmul.f32 1.0, %v2509
      %v2511 = vrcp.pop %v2502
      %v2512 = vmul.f32 1.0, %v2511
      %v2513 = vmul.f32 %v2504, 1.0614054
      %v2514 = vmul.f32 %v2506, 1.0614054
      %v2515 = vmul.f32 %v2508, 1.0614054
      %v2516 = vmul.f32 %v2510, 1.0614054
      %v2517 = vmul.f32 %v2512, 1.0614054
      %v2518 = vsub.f32 %v2513, 1.4531521
      %v2519 = vsub.f32 %v2514, 1.4531521
      %v2520 = vsub.f32 %v2515, 1.4531521
      %v2521 = vsub.f32 %v2516, 1.4531521
      %v2522 = vsub.f32 %v2517, 1.4531521
      %v2523 = vmul.f32 %v2518, %v2504
      %v2524 = vmul.f32 %v2519, %v2506
      %v2525 = vmul.f32 %v2520, %v2508
      %v2526 = vmul.f32 %v2521, %v2510
      %v2527 = vmul.f32 %v2522, %v2512
      %v2528 = vadd.f32 %v2523, 1.4214138
      %v2529 = vadd.f32 %v2524, 1.4214138
      %v2530 = vadd.f32 %v2525, 1.4214138
      %v2531 = vadd.f32 %v2526, 1.4214138
      %v2532 = vadd.f32 %v2527, 1.4214138
      %v2533 = vmul.f32 %v2528, %v2504
      %v2534 = vmul.f32 %v2529, %v2506
      %v2535 = vmul.f32 %v2530, %v2508
      %v2536 = vmul.f32 %v2531, %v2510
      %v2537 = vmul.f32 %v2532, %v2512
      %v2538 = vsub.f32 %v2533, 0.28449672
      %v2539 = vsub.f32 %v2534, 0.28449672
      %v2540 = vsub.f32 %v2535, 0.28449672
      %v2541 = vsub.f32 %v2536, 0.28449672
      %v2542 = vsub.f32 %v2537, 0.28449672
      %v2543 = vmul.f32 %v2538, %v2504
      %v2544 = vmul.f32 %v2539, %v2506
      %v2545 = vmul.f32 %v2540, %v2508
      %v2546 = vmul.f32 %v2541, %v2510
      %v2547 = vmul.f32 %v2542, %v2512
      %v2548 = vadd.f32 %v2543, 0.2548296
      %v2549 = vadd.f32 %v2544, 0.2548296
      %v2550 = vadd.f32 %v2545, 0.2548296
      %v2551 = vadd.f32 %v2546, 0.2548296
      %v2552 = vadd.f32 %v2547, 0.2548296
      %v2553 = vmul.f32 %v2548, %v2504
      %v2554 = vmul.f32 %v2549, %v2506
      %v2555 = vmul.f32 %v2550, %v2508
      %v2556 = vmul.f32 %v2551, %v2510
      %v2557 = vmul.f32 %v2552, %v2512
      %v2558 = vsub.f32 0.0, %v2488
      %v2559 = vsub.f32 0.0, %v2489
      %v2560 = vsub.f32 0.0, %v2490
      %v2561 = vsub.f32 0.0, %v2491
      %v2562 = vsub.f32 0.0, %v2492
      %v2563 = vmul.f32 %v2558, %v2488
      %v2564 = vmul.f32 %v2559, %v2489
      %v2565 = vmul.f32 %v2560, %v2490
      %v2566 = vmul.f32 %v2561, %v2491
      %v2567 = vmul.f32 %v2562, %v2492
      %v2568 = vmul.f32 %v2563, 1.442695
      %v2569 = vpow.pop %v2568
      %v2570 = vmul.f32 %v2564, 1.442695
      %v2571 = vpow.pop %v2570
      %v2572 = vmul.f32 %v2565, 1.442695
      %v2573 = vpow.pop %v2572
      %v2574 = vmul.f32 %v2566, 1.442695
      %v2575 = vpow.pop %v2574
      %v2576 = vmul.f32 %v2567, 1.442695
      %v2577 = vpow.pop %v2576
      %v2578 = vmul.f32 %v2553, %v2569
      %v2579 = vmul.f32 %v2554, %v2571
      %v2580 = vmul.f32 %v2555, %v2573
      %v2581 = vmul.f32 %v2556, %v2575
      %v2582 = vmul.f32 %v2557, %v2577
      %v2583 = vsub.f32 1.0, %v2578
      %v2584 = vsub.f32 1.0, %v2579
      %v2585 = vsub.f32 1.0, %v2580
      %v2586 = vsub.f32 1.0, %v2581
      %v2587 = vsub.f32 1.0, %v2582
      %v2588 = vmul.f32 %v2483, %v2583
      %v2589 = vmul.f32 %v2484, %v2584
      %v2590 = vmul.f32 %v2485, %v2585
      %v2591 = vmul.f32 %v2486, %v2586
      %v2592 = vmul.f32 %v2487, %v2587
      %v2593 = vmul.f32 %v2452, 0.5
      %v2594 = vmul.f32 %v2455, 0.5
      %v2595 = vmul.f32 %v2460, 0.5
      %v2596 = vmul.f32 %v2463, 0.5
      %v2597 = vmul.f32 %v2468, 0.5
      %v2598 = vadd.f32 %v2588, 1.0
      %v2599 = vadd.f32 %v2589, 1.0
      %v2600 = vadd.f32 %v2590, 1.0
      %v2601 = vadd.f32 %v2591, 1.0
      %v2602 = vadd.f32 %v2592, 1.0
      %v2603 = vmul.f32 %v2593, %v2598
      %v2604 = vmul.f32 %v2594, %v2599
      %v2605 = vmul.f32 %v2595, %v2600
      %v2606 = vmul.f32 %v2596, %v2601
      %v2607 = vmul.f32 %v2597, %v2602
      %v2608 = vld [vmem:[%s1 + $0xb0] sm:$0xf]
      %v2609 = vld [vmem:[%s1 + $0xb4] sm:$0xf]
      %v2610 = vld [vmem:[%s1 + $0xb8] sm:$0xf]
      %v2611 = vld [vmem:[%s1 + $0xbc] sm:$0xf]
      %v2612 = vld [vmem:[%s1 + $0xc0] sm:$0xf]
      %v2613 = vld [vmem:[%s1 + $0xc4] sm:$0xf]
      %v2614 = vld [vmem:[%s1 + $0xc8] sm:$0xf]
      %v2615 = vld [vmem:[%s1 + $0xcc] sm:$0xf]
      %v2616 = vld [vmem:[%s1 + $0xd0] sm:$0xf]
      %v2617 = vld [vmem:[%s1 + $0xd4] sm:$0xf]
      %v2618 = vld [vmem:[%s1 + $0xd8] sm:$0xf]
      %v2619 = vld [vmem:[%s1 + $0xdc] sm:$0xf]
      %v2620 = vld [vmem:[%s1 + $0xe0] sm:$0xf]
      %v2621 = vld [vmem:[%s1 + $0xe4] sm:$0xf]
      %v2622 = vld [vmem:[%s1 + $0xe8] sm:$0xf]
      %v2623 = vld [vmem:[%s1 + $0xec] sm:$0xf]
      %v2624 = vpack.c.bf16 %v2604, %v2603
      %v2625 = vpack.c.bf16 %v2606, %v2605
      %v2626 = vpack.c.bf16 %v2607, %v2607
      %v2643 = vunpack.c.l.b16 %v2608
      %v2644 = vunpack.c.l.b16 %v2609
      %v2645 = vunpack.c.l.b16 %v2610
      %v2646 = vunpack.c.l.b16 %v2611
      %v2647 = vunpack.c.l.b16 %v2612
      %v2648 = vunpack.c.l.b16 %v2613
      %v2649 = vunpack.c.l.b16 %v2614
      %v2650 = vunpack.c.l.b16 %v2615
      %v2651 = vunpack.c.l.b16 %v2616
      %v2652 = vunpack.c.l.b16 %v2617
      %v2653 = vunpack.c.l.b16 %v2618
      %v2654 = vunpack.c.l.b16 %v2619
      %v2655 = vunpack.c.l.b16 %v2620
      %v2656 = vunpack.c.l.b16 %v2621
      %v2657 = vunpack.c.l.b16 %v2622
      %v2658 = vunpack.c.l.b16 %v2623
      %v2659 = vpack.c.b16 %v2644, %v2643
      %v2660 = vpack.c.b16 %v2646, %v2645
      %v2661 = vpack.c.b16 %v2648, %v2647
      %v2662 = vpack.c.b16 %v2650, %v2649
      %v2663 = vpack.c.b16 %v2652, %v2651
      %v2664 = vpack.c.b16 %v2654, %v2653
      %v2665 = vpack.c.b16 %v2656, %v2655
      %v2666 = vpack.c.b16 %v2658, %v2657
      %2675 = vmatprep.subr.bf16.mxu0 0
      %2676 = vmatpush1.bf16.msra.mxu0 %v2666
      %2677 = vmatprep.subr.bf16.mxu0 0
      %2678 = vmatpush1.bf16.msra.mxu0 %v2665
      %2679 = vmatprep.subr.bf16.mxu0 0
      %2680 = vmatpush1.bf16.msra.mxu0 %v2664
      %2681 = vmatprep.subr.bf16.mxu0 0
      %2682 = vmatpush1.bf16.msra.mxu0 %v2663
      %2683 = vmatprep.subr.bf16.mxu0 0
      %2684 = vmatpush1.bf16.msra.mxu0 %v2662
      %2685 = vmatprep.subr.bf16.mxu0 0
      %2686 = vmatpush1.bf16.msra.mxu0 %v2661
      %2687 = vmatprep.subr.bf16.mxu0 0
      %2688 = vmatpush1.bf16.msra.mxu0 %v2660
      %2689 = vmatprep.subr.bf16.mxu0 0
      %2690 = vmatpush1.bf16.msra.mxu0 %v2659
      %2691 = vmatprep.subr.bf16.mxu0 0
      %2692 = vmatpush2.bf16.msra.mxu0 0
      %2693 = vmatprep.subr.bf16.mxu0 0
      %2694 = vmatpush2.bf16.msra.mxu0 0
      %2695 = vmatprep.subr.bf16.mxu0 0
      %2696 = vmatpush2.bf16.msra.mxu0 0
      %2697 = vmatprep.subr.bf16.mxu0 0
      %2698 = vmatpush2.bf16.msra.mxu0 0
      %2699 = vmatprep.subr.bf16.mxu0 0
      %2700 = vmatpush2.bf16.msra.mxu0 0
      %2701 = vmatprep.subr.bf16.mxu0 0
      %2702 = vmatpush2.bf16.msra.mxu0 0
      %2703 = vmatprep.subr.bf16.mxu0 0
      %2704 = vmatpush2.bf16.msra.mxu0 0
      %2705 = vmatprep.subr.bf16.mxu0 0
      %2706 = vmatpush2.bf16.msra.mxu0 0
      %2707 = vmatprep.mubr.bf16.mxu0 0
      %2708 = vmatmul.mubr.bf16.gmra.mxu0 %v2624
      %v2709 = vpop.f32.mrf.mxu0
      %v2710 = vadd.f32 0.0, %v2709
      %v2711 = vpop.f32.mrf.mxu0
      %v2712 = vpop.f32.mrf.mxu0
      %v2713 = vadd.f32 0.0, %v2712
      %v2714 = vpop.f32.mrf.mxu0
      %2715 = vmatprep.mubr.bf16.mxu0 0
      %2716 = vmatmul.mubr.bf16.gmra.mxu0 %v2625
      %v2717 = vpop.f32.mrf.mxu0
      %v2718 = vadd.f32 0.0, %v2717
      %v2719 = vpop.f32.mrf.mxu0
      %v2720 = vpop.f32.mrf.mxu0
      %v2721 = vadd.f32 0.0, %v2720
      %v2722 = vpop.f32.mrf.mxu0
      %2723 = vmatprep.mubr.bf16.mxu0 0
      %2724 = vmatmul.mubr.bf16.gmra.mxu0 %v2626
      %v2725 = vpop.f32.mrf.mxu0
      %v2726 = vadd.f32 0.0, %v2725
      %v2727 = vpop.f32.mrf.mxu0
      %v2728 = vpop.f32.mrf.mxu0
      %v2729 = vpop.f32.mrf.mxu0
      %2730 = vdwg.mxu0
      %v2731 = vadd.f32 %v2064, %v2710
      %v2732 = vadd.f32 %v2065, %v2713
      %v2733 = vadd.f32 %v2066, %v2718
      %v2734 = vadd.f32 %v2067, %v2721
      %v2735 = vadd.f32 %v2068, %v2726
      %v2736 = vld [vmem:[%s2 + $0xc] sm:$0x1]
      %v2737 = vlaneseq
      %v2738 = vshrl.u32 %v2737, 7
      %v2739 = vsub.s32 0, %v2738
      %v2740 = vrot.slane %v2736, %v2739
      %v2741 = vadd.f32 %v2731, %v2740
      %v2742 = vadd.f32 %v2732, %v2740
      %v2743 = vadd.f32 %v2733, %v2740
      %v2744 = vadd.f32 %v2734, %v2740
      %v2745 = vadd.f32 %v2735, %v2740
      %v2747 = vsel %vm330, %v2741, 0
      %v2750 = vsel %vm330, %v2742, 0
      %v2753 = vsel %vm330, %v2743, 0
      %v2756 = vsel %vm330, %v2744, 0
      %v2759 = vsel %vm330, %v2745, 0
      %2761 = vmatprep.subr.mxu0 0.0
      %2762 = vmatpush1.msra.mxu0 0.0
      %2763 = vmatprep.subr.mxu0 0.0
      %2764 = vmatpush1.msra.mxu0 0.0
      %2765 = vmatprep.subr.mxu0 0.0
      %2766 = vmatpush1.msra.mxu0 0.0
      %2767 = vmatprep.subr.mxu0 0.0
      %2768 = vmatpush1.msra.mxu0 0.0
      %2769 = vmatprep.subr.mxu0 0.0
      %2770 = vmatpush1.msra.mxu0 0.0
      %2771 = vmatprep.subr.mxu0 0.0
      %2772 = vmatpush1.msra.mxu0 0.0
      %2773 = vmatprep.subr.mxu0 0.0
      %2774 = vmatpush1.msra.mxu0 0.0
      %2775 = vmatprep.subr.mxu0 0.0
      %2776 = vmatpush1.msra.mxu0 0.0
      %2777 = vmatprep.subr.mxu0 0.0
      %2778 = vmatpush1.msra.mxu0 0.0
      %2779 = vmatprep.subr.mxu0 0.0
      %2780 = vmatpush1.msra.mxu0 0.0
      %2781 = vmatprep.subr.mxu0 0.0
      %2782 = vmatpush1.msra.mxu0 0.0
      %2783 = vmatprep.subr.mxu0 0.0
      %2784 = vmatpush1.msra.mxu0 0.0
      %2785 = vmatprep.subr.mxu0 0.0
      %2786 = vmatpush1.msra.mxu0 1.0
      %2787 = vmatprep.subr.mxu0 0.0
      %2788 = vmatpush1.msra.mxu0 1.0
      %2789 = vmatprep.subr.mxu0 0.0
      %2790 = vmatpush1.msra.mxu0 1.0
      %2791 = vmatprep.subr.mxu0 0.0
      %2792 = vmatpush1.msra.mxu0 1.0
      %2793 = vmatprep.subr.mxu0 0.0
      %2794 = vmatpush2.msra.mxu0 0.0
      %2795 = vmatprep.subr.mxu0 0.0
      %2796 = vmatpush2.msra.mxu0 0.0
      %2797 = vmatprep.subr.mxu0 0.0
      %2798 = vmatpush2.msra.mxu0 0.0
      %2799 = vmatprep.subr.mxu0 0.0
      %2800 = vmatpush2.msra.mxu0 0.0
      %2801 = vmatprep.subr.mxu0 0.0
      %2802 = vmatpush2.msra.mxu0 0.0
      %2803 = vmatprep.subr.mxu0 0.0
      %2804 = vmatpush2.msra.mxu0 0.0
      %2805 = vmatprep.subr.mxu0 0.0
      %2806 = vmatpush2.msra.mxu0 0.0
      %2807 = vmatprep.subr.mxu0 0.0
      %2808 = vmatpush2.msra.mxu0 0.0
      %2809 = vmatprep.subr.mxu0 0.0
      %2810 = vmatpush2.msra.mxu0 0.0
      %2811 = vmatprep.subr.mxu0 0.0
      %2812 = vmatpush2.msra.mxu0 0.0
      %2813 = vmatprep.subr.mxu0 0.0
      %2814 = vmatpush2.msra.mxu0 0.0
      %2815 = vmatprep.subr.mxu0 0.0
      %2816 = vmatpush2.msra.mxu0 0.0
      %2817 = vmatprep.subr.mxu0 0.0
      %2818 = vmatpush2.msra.mxu0 0.0
      %2819 = vmatprep.subr.mxu0 0.0
      %2820 = vmatpush2.msra.mxu0 0.0
      %2821 = vmatprep.subr.mxu0 0.0
      %2822 = vmatpush2.msra.mxu0 0.0
      %2823 = vmatprep.subr.mxu0 0.0
      %2824 = vmatpush2.msra.mxu0 0.0
      %2825 = vmatprep.mubr.f32.mxu0 0.0
      %2826 = vmatmul.mubr.f32.gmra.mxu0 %v2747
      %v2827 = vpop.f32.mrf.mxu0
      %v2828 = vadd.f32 0.0, %v2827
      %v2829 = vpop.f32.mrf.mxu0
      %2830 = vmatprep.mubr.f32.mxu0 0.0
      %2831 = vmatmul.mubr.f32.gmra.mxu0 %v2750
      %v2832 = vpop.f32.mrf.mxu0
      %v2833 = vadd.f32 0.0, %v2832
      %v2834 = vpop.f32.mrf.mxu0
      %2835 = vmatprep.mubr.f32.mxu0 0.0
      %2836 = vmatmul.mubr.f32.gmra.mxu0 %v2753
      %v2837 = vpop.f32.mrf.mxu0
      %v2838 = vadd.f32 0.0, %v2837
      %v2839 = vpop.f32.mrf.mxu0
      %2840 = vmatprep.mubr.f32.mxu0 0.0
      %2841 = vmatmul.mubr.f32.gmra.mxu0 %v2756
      %v2842 = vpop.f32.mrf.mxu0
      %v2843 = vadd.f32 0.0, %v2842
      %v2844 = vpop.f32.mrf.mxu0
      %2845 = vmatprep.mubr.f32.mxu0 0.0
      %2846 = vmatmul.mubr.f32.gmra.mxu0 %v2759
      %v2847 = vpop.f32.mrf.mxu0
      %v2848 = vadd.f32 0.0, %v2847
      %v2849 = vpop.f32.mrf.mxu0
      %2850 = vdwg.mxu0
      %v2851 = vmul.f32 %v2828, 0.03125
      %v2852 = vmul.f32 %v2833, 0.03125
      %v2853 = vmul.f32 %v2838, 0.03125
      %v2854 = vmul.f32 %v2843, 0.03125
      %v2855 = vmul.f32 %v2848, 0.03125
      %2857 = vset.pattern.permute.xlu0 0
      %2858 = vperm.xlu0 %2857, %v2851
      %v2859 = vpop.permute.xlu0 %2858
      %2862 = vset.pattern.permute.xlu0 0
      %2863 = vperm.xlu0 %2862, %v2852
      %v2864 = vpop.permute.xlu0 %2863
      %2867 = vset.pattern.permute.xlu0 0
      %2868 = vperm.xlu0 %2867, %v2853
      %v2869 = vpop.permute.xlu0 %2868
      %2872 = vset.pattern.permute.xlu0 0
      %2873 = vperm.xlu0 %2872, %v2854
      %v2874 = vpop.permute.xlu0 %2873
      %2877 = vset.pattern.permute.xlu0 0
      %2878 = vperm.xlu0 %2877, %v2855
      %v2879 = vpop.permute.xlu0 %2878
      %v2881 = vsub.f32 %v2741, %v2859
      %v2882 = vsub.f32 %v2742, %v2864
      %v2883 = vsub.f32 %v2743, %v2869
      %v2884 = vsub.f32 %v2744, %v2874
      %v2885 = vsub.f32 %v2745, %v2879
      %v2886 = vmul.f32 %v2881, %v2881
      %v2887 = vmul.f32 %v2882, %v2882
      %v2888 = vmul.f32 %v2883, %v2883
      %v2889 = vmul.f32 %v2884, %v2884
      %v2890 = vmul.f32 %v2885, %v2885
      %v2892 = vsel %vm330, %v2886, 0
      %v2895 = vsel %vm330, %v2887, 0
      %v2898 = vsel %vm330, %v2888, 0
      %v2901 = vsel %vm330, %v2889, 0
      %v2904 = vsel %vm330, %v2890, 0
      %2906 = vmatprep.subr.mxu0 0.0
      %2907 = vmatpush1.msra.mxu0 0.0
      %2908 = vmatprep.subr.mxu0 0.0
      %2909 = vmatpush1.msra.mxu0 0.0
      %2910 = vmatprep.subr.mxu0 0.0
      %2911 = vmatpush1.msra.mxu0 0.0
      %2912 = vmatprep.subr.mxu0 0.0
      %2913 = vmatpush1.msra.mxu0 0.0
      %2914 = vmatprep.subr.mxu0 0.0
      %2915 = vmatpush1.msra.mxu0 0.0
      %2916 = vmatprep.subr.mxu0 0.0
      %2917 = vmatpush1.msra.mxu0 0.0
      %2918 = vmatprep.subr.mxu0 0.0
      %2919 = vmatpush1.msra.mxu0 0.0
      %2920 = vmatprep.subr.mxu0 0.0
      %2921 = vmatpush1.msra.mxu0 0.0
      %2922 = vmatprep.subr.mxu0 0.0
      %2923 = vmatpush1.msra.mxu0 0.0
      %2924 = vmatprep.subr.mxu0 0.0
      %2925 = vmatpush1.msra.mxu0 0.0
      %2926 = vmatprep.subr.mxu0 0.0
      %2927 = vmatpush1.msra.mxu0 0.0
      %2928 = vmatprep.subr.mxu0 0.0
      %2929 = vmatpush1.msra.mxu0 0.0
      %2930 = vmatprep.subr.mxu0 0.0
      %2931 = vmatpush1.msra.mxu0 1.0
      %2932 = vmatprep.subr.mxu0 0.0
      %2933 = vmatpush1.msra.mxu0 1.0
      %2934 = vmatprep.subr.mxu0 0.0
      %2935 = vmatpush1.msra.mxu0 1.0
      %2936 = vmatprep.subr.mxu0 0.0
      %2937 = vmatpush1.msra.mxu0 1.0
      %2938 = vmatprep.subr.mxu0 0.0
      %2939 = vmatpush2.msra.mxu0 0.0
      %2940 = vmatprep.subr.mxu0 0.0
      %2941 = vmatpush2.msra.mxu0 0.0
      %2942 = vmatprep.subr.mxu0 0.0
      %2943 = vmatpush2.msra.mxu0 0.0
      %2944 = vmatprep.subr.mxu0 0.0
      %2945 = vmatpush2.msra.mxu0 0.0
      %2946 = vmatprep.subr.mxu0 0.0
      %2947 = vmatpush2.msra.mxu0 0.0
      %2948 = vmatprep.subr.mxu0 0.0
      %2949 = vmatpush2.msra.mxu0 0.0
      %2950 = vmatprep.subr.mxu0 0.0
      %2951 = vmatpush2.msra.mxu0 0.0
      %2952 = vmatprep.subr.mxu0 0.0
      %2953 = vmatpush2.msra.mxu0 0.0
      %2954 = vmatprep.subr.mxu0 0.0
      %2955 = vmatpush2.msra.mxu0 0.0
      %2956 = vmatprep.subr.mxu0 0.0
      %2957 = vmatpush2.msra.mxu0 0.0
      %2958 = vmatprep.subr.mxu0 0.0
      %2959 = vmatpush2.msra.mxu0 0.0
      %2960 = vmatprep.subr.mxu0 0.0
      %2961 = vmatpush2.msra.mxu0 0.0
      %2962 = vmatprep.subr.mxu0 0.0
      %2963 = vmatpush2.msra.mxu0 0.0
      %2964 = vmatprep.subr.mxu0 0.0
      %2965 = vmatpush2.msra.mxu0 0.0
      %2966 = vmatprep.subr.mxu0 0.0
      %2967 = vmatpush2.msra.mxu0 0.0
      %2968 = vmatprep.subr.mxu0 0.0
      %2969 = vmatpush2.msra.mxu0 0.0
      %2970 = vmatprep.mubr.f32.mxu0 0.0
      %2971 = vmatmul.mubr.f32.gmra.mxu0 %v2892
      %v2972 = vpop.f32.mrf.mxu0
      %v2973 = vadd.f32 0.0, %v2972
      %v2974 = vpop.f32.mrf.mxu0
      %2975 = vmatprep.mubr.f32.mxu0 0.0
      %2976 = vmatmul.mubr.f32.gmra.mxu0 %v2895
      %v2977 = vpop.f32.mrf.mxu0
      %v2978 = vadd.f32 0.0, %v2977
      %v2979 = vpop.f32.mrf.mxu0
      %2980 = vmatprep.mubr.f32.mxu0 0.0
      %2981 = vmatmul.mubr.f32.gmra.mxu0 %v2898
      %v2982 = vpop.f32.mrf.mxu0
      %v2983 = vadd.f32 0.0, %v2982
      %v2984 = vpop.f32.mrf.mxu0
      %2985 = vmatprep.mubr.f32.mxu0 0.0
      %2986 = vmatmul.mubr.f32.gmra.mxu0 %v2901
      %v2987 = vpop.f32.mrf.mxu0
      %v2988 = vadd.f32 0.0, %v2987
      %v2989 = vpop.f32.mrf.mxu0
      %2990 = vmatprep.mubr.f32.mxu0 0.0
      %2991 = vmatmul.mubr.f32.gmra.mxu0 %v2904
      %v2992 = vpop.f32.mrf.mxu0
      %v2993 = vadd.f32 0.0, %v2992
      %v2994 = vpop.f32.mrf.mxu0
      %2995 = vdwg.mxu0
      %v2996 = vmul.f32 %v2973, 0.03125
      %v2997 = vmul.f32 %v2978, 0.03125
      %v2998 = vmul.f32 %v2983, 0.03125
      %v2999 = vmul.f32 %v2988, 0.03125
      %v3000 = vmul.f32 %v2993, 0.03125
      %v3001 = vadd.f32 %v2996, 1e-06
      %v3002 = vadd.f32 %v2997, 1e-06
      %v3003 = vadd.f32 %v2998, 1e-06
      %v3004 = vadd.f32 %v2999, 1e-06
      %v3005 = vadd.f32 %v3000, 1e-06
      %v3006 = vrsqrt.pop %v3001
      %v3007 = vrsqrt.pop %v3002
      %v3008 = vrsqrt.pop %v3003
      %v3009 = vrsqrt.pop %v3004
      %v3010 = vrsqrt.pop %v3005
      %3012 = vset.pattern.permute.xlu0 0
      %3013 = vperm.xlu0 %3012, %v3006
      %v3014 = vpop.permute.xlu0 %3013
      %3017 = vset.pattern.permute.xlu0 0
      %3018 = vperm.xlu0 %3017, %v3007
      %v3019 = vpop.permute.xlu0 %3018
      %3022 = vset.pattern.permute.xlu0 0
      %3023 = vperm.xlu0 %3022, %v3008
      %v3024 = vpop.permute.xlu0 %3023
      %3027 = vset.pattern.permute.xlu0 0
      %3028 = vperm.xlu0 %3027, %v3009
      %v3029 = vpop.permute.xlu0 %3028
      %3032 = vset.pattern.permute.xlu0 0
      %3033 = vperm.xlu0 %3032, %v3010
      %v3034 = vpop.permute.xlu0 %3033
      %v3036 = vmul.f32 %v2881, %v3014
      %v3037 = vmul.f32 %v2882, %v3019
      %v3038 = vmul.f32 %v2883, %v3024
      %v3039 = vmul.f32 %v2884, %v3029
      %v3040 = vmul.f32 %v2885, %v3034
      %v3041 = vld [vmem:[%s2 + $0xd] sm:$0x1]
      %v3042 = vlaneseq
      %v3043 = vshrl.u32 %v3042, 7
      %v3044 = vsub.s32 0, %v3043
      %v3045 = vrot.slane %v3041, %v3044
      %v3046 = vmul.f32 %v3036, %v3045
      %v3047 = vmul.f32 %v3037, %v3045
      %v3048 = vmul.f32 %v3038, %v3045
      %v3049 = vmul.f32 %v3039, %v3045
      %v3050 = vmul.f32 %v3040, %v3045
      %v3051 = vld [vmem:[%s2 + $0xe] sm:$0x1]
      %v3052 = vlaneseq
      %v3053 = vshrl.u32 %v3052, 7
      %v3054 = vsub.s32 0, %v3053
      %v3055 = vrot.slane %v3051, %v3054
      %v3056 = vadd.f32 %v3046, %v3055
      %v3057 = vadd.f32 %v3047, %v3055
      %v3058 = vadd.f32 %v3048, %v3055
      %v3059 = vadd.f32 %v3049, %v3055
      %v3060 = vadd.f32 %v3050, %v3055
      %v3061 = vld [vmem:[%s1 + $0xf0] sm:$0xf]
      %v3062 = vld [vmem:[%s1 + $0xf4] sm:$0xf]
      %v3063 = vld [vmem:[%s1 + $0xf8] sm:$0xf]
      %v3064 = vld [vmem:[%s1 + $0xfc] sm:$0xf]
      %v3065 = vpack.c.bf16 %v3057, %v3056
      %v3066 = vpack.c.bf16 %v3059, %v3058
      %v3067 = vpack.c.bf16 %v3060, %v3060
      %v3068 = vld [vmem:[%s2 + $0xf] sm:$0x1]
      %v3069 = vlaneseq
      %v3070 = vshrl.u32 %v3069, 7
      %v3071 = vsub.s32 0, %v3070
      %v3072 = vrot.slane %v3068, %v3071
      %v3077 = vunpack.c.l.b16 %v3061
      %v3078 = vunpack.c.l.b16 %v3062
      %v3079 = vunpack.c.l.b16 %v3063
      %v3080 = vunpack.c.l.b16 %v3064
      %v3081 = vpack.c.b16 %v3078, %v3077
      %v3082 = vpack.c.b16 %v3080, %v3079
      %v3086 = vsel %vm330, %v3065, 0
      %v3089 = vsel %vm330, %v3066, 0
      %v3092 = vsel %vm330, %v3067, 0
      %3094 = vmatprep.subr.bf16.mxu0 0
      %3095 = vmatpush1.bf16.msra.mxu0 0
      %3096 = vmatprep.subr.bf16.mxu0 0
      %3097 = vmatpush1.bf16.msra.mxu0 0
      %3098 = vmatprep.subr.bf16.mxu0 0
      %3099 = vmatpush1.bf16.msra.mxu0 0
      %3100 = vmatprep.subr.bf16.mxu0 0
      %3101 = vmatpush1.bf16.msra.mxu0 0
      %3102 = vmatprep.subr.bf16.mxu0 0
      %3103 = vmatpush1.bf16.msra.mxu0 0
      %3104 = vmatprep.subr.bf16.mxu0 0
      %3105 = vmatpush1.bf16.msra.mxu0 0
      %3106 = vmatprep.subr.bf16.mxu0 0
      %3107 = vmatpush1.bf16.msra.mxu0 %v3082
      %3108 = vmatprep.subr.bf16.mxu0 0
      %3109 = vmatpush1.bf16.msra.mxu0 %v3081
      %3110 = vmatprep.subr.bf16.mxu0 0
      %3111 = vmatpush2.bf16.msra.mxu0 0
      %3112 = vmatprep.subr.bf16.mxu0 0
      %3113 = vmatpush2.bf16.msra.mxu0 0
      %3114 = vmatprep.subr.bf16.mxu0 0
      %3115 = vmatpush2.bf16.msra.mxu0 0
      %3116 = vmatprep.subr.bf16.mxu0 0
      %3117 = vmatpush2.bf16.msra.mxu0 0
      %3118 = vmatprep.subr.bf16.mxu0 0
      %3119 = vmatpush2.bf16.msra.mxu0 0
      %3120 = vmatprep.subr.bf16.mxu0 0
      %3121 = vmatpush2.bf16.msra.mxu0 0
      %3122 = vmatprep.subr.bf16.mxu0 0
      %3123 = vmatpush2.bf16.msra.mxu0 0
      %3124 = vmatprep.subr.bf16.mxu0 0
      %3125 = vmatpush2.bf16.msra.mxu0 0
      %3126 = vmatprep.mubr.bf16.mxu0 0
      %3127 = vmatmul.mubr.bf16.gmra.mxu0 %v3086
      %v3128 = vpop.f32.mrf.mxu0
      %v3129 = vadd.f32 %v3072, %v3128
      %v3130 = vpop.f32.mrf.mxu0
      %v3131 = vpop.f32.mrf.mxu0
      %v3132 = vadd.f32 %v3072, %v3131
      %v3133 = vpop.f32.mrf.mxu0
      %3134 = vmatprep.mubr.bf16.mxu0 0
      %3135 = vmatmul.mubr.bf16.gmra.mxu0 %v3089
      %v3136 = vpop.f32.mrf.mxu0
      %v3137 = vadd.f32 %v3072, %v3136
      %v3138 = vpop.f32.mrf.mxu0
      %v3139 = vpop.f32.mrf.mxu0
      %v3140 = vadd.f32 %v3072, %v3139
      %v3141 = vpop.f32.mrf.mxu0
      %3142 = vmatprep.mubr.bf16.mxu0 0
      %3143 = vmatmul.mubr.bf16.gmra.mxu0 %v3092
      %v3144 = vpop.f32.mrf.mxu0
      %v3145 = vadd.f32 %v3072, %v3144
      %v3146 = vpop.f32.mrf.mxu0
      %v3147 = vpop.f32.mrf.mxu0
      %v3148 = vpop.f32.mrf.mxu0
      %3149 = vdwg.mxu0
      %v3150 = vld [vmem:[%s1 + $0x100] sm:$0xf]
      %v3151 = vld [vmem:[%s1 + $0x104] sm:$0xf]
      %v3152 = vld [vmem:[%s1 + $0x108] sm:$0xf]
      %v3153 = vld [vmem:[%s1 + $0x10c] sm:$0xf]
      %v3154 = vld [vmem:[%s2 + $0x10] sm:$0x1]
      %v3155 = vlaneseq
      %v3156 = vshrl.u32 %v3155, 7
      %v3157 = vsub.s32 0, %v3156
      %v3158 = vrot.slane %v3154, %v3157
      %v3163 = vunpack.c.l.b16 %v3150
      %v3164 = vunpack.c.l.b16 %v3151
      %v3165 = vunpack.c.l.b16 %v3152
      %v3166 = vunpack.c.l.b16 %v3153
      %v3167 = vpack.c.b16 %v3164, %v3163
      %v3168 = vpack.c.b16 %v3166, %v3165
      %3171 = vmatprep.subr.bf16.mxu0 0
      %3172 = vmatpush1.bf16.msra.mxu0 0
      %3173 = vmatprep.subr.bf16.mxu0 0
      %3174 = vmatpush1.bf16.msra.mxu0 0
      %3175 = vmatprep.subr.bf16.mxu0 0
      %3176 = vmatpush1.bf16.msra.mxu0 0
      %3177 = vmatprep.subr.bf16.mxu0 0
      %3178 = vmatpush1.bf16.msra.mxu0 0
      %3179 = vmatprep.subr.bf16.mxu0 0
      %3180 = vmatpush1.bf16.msra.mxu0 0
      %3181 = vmatprep.subr.bf16.mxu0 0
      %3182 = vmatpush1.bf16.msra.mxu0 0
      %3183 = vmatprep.subr.bf16.mxu0 0
      %3184 = vmatpush1.bf16.msra.mxu0 %v3168
      %3185 = vmatprep.subr.bf16.mxu0 0
      %3186 = vmatpush1.bf16.msra.mxu0 %v3167
      %3187 = vmatprep.subr.bf16.mxu0 0
      %3188 = vmatpush2.bf16.msra.mxu0 0
      %3189 = vmatprep.subr.bf16.mxu0 0
      %3190 = vmatpush2.bf16.msra.mxu0 0
      %3191 = vmatprep.subr.bf16.mxu0 0
      %3192 = vmatpush2.bf16.msra.mxu0 0
      %3193 = vmatprep.subr.bf16.mxu0 0
      %3194 = vmatpush2.bf16.msra.mxu0 0
      %3195 = vmatprep.subr.bf16.mxu0 0
      %3196 = vmatpush2.bf16.msra.mxu0 0
      %3197 = vmatprep.subr.bf16.mxu0 0
      %3198 = vmatpush2.bf16.msra.mxu0 0
      %3199 = vmatprep.subr.bf16.mxu0 0
      %3200 = vmatpush2.bf16.msra.mxu0 0
      %3201 = vmatprep.subr.bf16.mxu0 0
      %3202 = vmatpush2.bf16.msra.mxu0 0
      %3203 = vmatprep.mubr.bf16.mxu0 0
      %3204 = vmatmul.mubr.bf16.gmra.mxu0 %v3086
      %v3205 = vpop.f32.mrf.mxu0
      %v3206 = vadd.f32 %v3158, %v3205
      %v3207 = vpop.f32.mrf.mxu0
      %v3208 = vpop.f32.mrf.mxu0
      %v3209 = vadd.f32 %v3158, %v3208
      %v3210 = vpop.f32.mrf.mxu0
      %3211 = vmatprep.mubr.bf16.mxu0 0
      %3212 = vmatmul.mubr.bf16.gmra.mxu0 %v3089
      %v3213 = vpop.f32.mrf.mxu0
      %v3214 = vadd.f32 %v3158, %v3213
      %v3215 = vpop.f32.mrf.mxu0
      %v3216 = vpop.f32.mrf.mxu0
      %v3217 = vadd.f32 %v3158, %v3216
      %v3218 = vpop.f32.mrf.mxu0
      %3219 = vmatprep.mubr.bf16.mxu0 0
      %3220 = vmatmul.mubr.bf16.gmra.mxu0 %v3092
      %v3221 = vpop.f32.mrf.mxu0
      %v3222 = vadd.f32 %v3158, %v3221
      %v3223 = vpop.f32.mrf.mxu0
      %v3224 = vpop.f32.mrf.mxu0
      %v3225 = vpop.f32.mrf.mxu0
      %3226 = vdwg.mxu0
      %v3227 = vld [vmem:[%s1 + $0x110] sm:$0xf]
      %v3228 = vld [vmem:[%s1 + $0x114] sm:$0xf]
      %v3229 = vld [vmem:[%s1 + $0x118] sm:$0xf]
      %v3230 = vld [vmem:[%s1 + $0x11c] sm:$0xf]
      %v3231 = vld [vmem:[%s2 + $0x11] sm:$0x1]
      %v3232 = vlaneseq
      %v3233 = vshrl.u32 %v3232, 7
      %v3234 = vsub.s32 0, %v3233
      %v3235 = vrot.slane %v3231, %v3234
      %v3240 = vunpack.c.l.b16 %v3227
      %v3241 = vunpack.c.l.b16 %v3228
      %v3242 = vunpack.c.l.b16 %v3229
      %v3243 = vunpack.c.l.b16 %v3230
      %v3244 = vpack.c.b16 %v3241, %v3240
      %v3245 = vpack.c.b16 %v3243, %v3242
      %3248 = vmatprep.subr.bf16.mxu0 0
      %3249 = vmatpush1.bf16.msra.mxu0 0
      %3250 = vmatprep.subr.bf16.mxu0 0
      %3251 = vmatpush1.bf16.msra.mxu0 0
      %3252 = vmatprep.subr.bf16.mxu0 0
      %3253 = vmatpush1.bf16.msra.mxu0 0
      %3254 = vmatprep.subr.bf16.mxu0 0
      %3255 = vmatpush1.bf16.msra.mxu0 0
      %3256 = vmatprep.subr.bf16.mxu0 0
      %3257 = vmatpush1.bf16.msra.mxu0 0
      %3258 = vmatprep.subr.bf16.mxu0 0
      %3259 = vmatpush1.bf16.msra.mxu0 0
      %3260 = vmatprep.subr.bf16.mxu0 0
      %3261 = vmatpush1.bf16.msra.mxu0 %v3245
      %3262 = vmatprep.subr.bf16.mxu0 0
      %3263 = vmatpush1.bf16.msra.mxu0 %v3244
      %3264 = vmatprep.subr.bf16.mxu0 0
      %3265 = vmatpush2.bf16.msra.mxu0 0
      %3266 = vmatprep.subr.bf16.mxu0 0
      %3267 = vmatpush2.bf16.msra.mxu0 0
      %3268 = vmatprep.subr.bf16.mxu0 0
      %3269 = vmatpush2.bf16.msra.mxu0 0
      %3270 = vmatprep.subr.bf16.mxu0 0
      %3271 = vmatpush2.bf16.msra.mxu0 0
      %3272 = vmatprep.subr.bf16.mxu0 0
      %3273 = vmatpush2.bf16.msra.mxu0 0
      %3274 = vmatprep.subr.bf16.mxu0 0
      %3275 = vmatpush2.bf16.msra.mxu0 0
      %3276 = vmatprep.subr.bf16.mxu0 0
      %3277 = vmatpush2.bf16.msra.mxu0 0
      %3278 = vmatprep.subr.bf16.mxu0 0
      %3279 = vmatpush2.bf16.msra.mxu0 0
      %3280 = vmatprep.mubr.bf16.mxu0 0
      %3281 = vmatmul.mubr.bf16.gmra.mxu0 %v3086
      %v3282 = vpop.f32.mrf.mxu0
      %v3283 = vadd.f32 %v3235, %v3282
      %v3284 = vpop.f32.mrf.mxu0
      %v3285 = vpop.f32.mrf.mxu0
      %v3286 = vadd.f32 %v3235, %v3285
      %v3287 = vpop.f32.mrf.mxu0
      %3288 = vmatprep.mubr.bf16.mxu0 0
      %3289 = vmatmul.mubr.bf16.gmra.mxu0 %v3089
      %v3290 = vpop.f32.mrf.mxu0
      %v3291 = vadd.f32 %v3235, %v3290
      %v3292 = vpop.f32.mrf.mxu0
      %v3293 = vpop.f32.mrf.mxu0
      %v3294 = vadd.f32 %v3235, %v3293
      %v3295 = vpop.f32.mrf.mxu0
      %3296 = vmatprep.mubr.bf16.mxu0 0
      %3297 = vmatmul.mubr.bf16.gmra.mxu0 %v3092
      %v3298 = vpop.f32.mrf.mxu0
      %v3299 = vadd.f32 %v3235, %v3298
      %v3300 = vpop.f32.mrf.mxu0
      %v3301 = vpop.f32.mrf.mxu0
      %v3302 = vpop.f32.mrf.mxu0
      %3303 = vdwg.mxu0
      %v3305 = vsel %vm889, %v3129, 0
      %v3308 = vsel %vm889, %v3132, 0
      %v3311 = vsel %vm889, %v3137, 0
      %v3314 = vsel %vm889, %v3140, 0
      %v3317 = vsel %vm889, %v3145, 0
      %v3320 = vsel %vm889, %v3206, 0
      %v3323 = vsel %vm889, %v3209, 0
      %v3326 = vsel %vm889, %v3214, 0
      %v3329 = vsel %vm889, %v3217, 0
      %v3332 = vsel %vm889, %v3222, 0
      %3334 = vmatprep.subr.mxu0 0.0
      %3335 = vmatpush1.xpose.msra.mxu0 0.0
      %3336 = vmatprep.subr.mxu0 0.0
      %3337 = vmatpush1.xpose.msra.mxu0 0.0
      %3338 = vmatprep.subr.mxu0 0.0
      %3339 = vmatpush1.xpose.msra.mxu0 0.0
      %3340 = vmatprep.subr.mxu0 0.0
      %3341 = vmatpush1.xpose.msra.mxu0 0.0
      %3342 = vmatprep.subr.mxu0 0.0
      %3343 = vmatpush1.xpose.msra.mxu0 0.0
      %3344 = vmatprep.subr.mxu0 0.0
      %3345 = vmatpush1.xpose.msra.mxu0 0.0
      %3346 = vmatprep.subr.mxu0 0.0
      %3347 = vmatpush1.xpose.msra.mxu0 0.0
      %3348 = vmatprep.subr.mxu0 0.0
      %3349 = vmatpush1.xpose.msra.mxu0 0.0
      %3350 = vmatprep.subr.mxu0 0.0
      %3351 = vmatpush1.xpose.msra.mxu0 0.0
      %3352 = vmatprep.subr.mxu0 0.0
      %3353 = vmatpush1.xpose.msra.mxu0 0.0
      %3354 = vmatprep.subr.mxu0 0.0
      %3355 = vmatpush1.xpose.msra.mxu0 0.0
      %3356 = vmatprep.subr.mxu0 0.0
      %3357 = vmatpush1.xpose.msra.mxu0 %v3332
      %3358 = vmatprep.subr.mxu0 0.0
      %3359 = vmatpush1.xpose.msra.mxu0 %v3329
      %3360 = vmatprep.subr.mxu0 0.0
      %3361 = vmatpush1.xpose.msra.mxu0 %v3326
      %3362 = vmatprep.subr.mxu0 0.0
      %3363 = vmatpush1.xpose.msra.mxu0 %v3323
      %3364 = vmatprep.subr.mxu0 0.0
      %3365 = vmatpush1.xpose.msra.mxu0 %v3320
      %3366 = vmatprep.subr.mxu0 0.0
      %3367 = vmatpush2.xpose.msra.mxu0 0.0
      %3368 = vmatprep.subr.mxu0 0.0
      %3369 = vmatpush2.xpose.msra.mxu0 0.0
      %3370 = vmatprep.subr.mxu0 0.0
      %3371 = vmatpush2.xpose.msra.mxu0 0.0
      %3372 = vmatprep.subr.mxu0 0.0
      %3373 = vmatpush2.xpose.msra.mxu0 0.0
      %3374 = vmatprep.subr.mxu0 0.0
      %3375 = vmatpush2.xpose.msra.mxu0 0.0
      %3376 = vmatprep.subr.mxu0 0.0
      %3377 = vmatpush2.xpose.msra.mxu0 0.0
      %3378 = vmatprep.subr.mxu0 0.0
      %3379 = vmatpush2.xpose.msra.mxu0 0.0
      %3380 = vmatprep.subr.mxu0 0.0
      %3381 = vmatpush2.xpose.msra.mxu0 0.0
      %3382 = vmatprep.subr.mxu0 0.0
      %3383 = vmatpush2.xpose.msra.mxu0 0.0
      %3384 = vmatprep.subr.mxu0 0.0
      %3385 = vmatpush2.xpose.msra.mxu0 0.0
      %3386 = vmatprep.subr.mxu0 0.0
      %3387 = vmatpush2.xpose.msra.mxu0 0.0
      %3388 = vmatprep.subr.mxu0 0.0
      %3389 = vmatpush2.xpose.msra.mxu0 0.0
      %3390 = vmatprep.subr.mxu0 0.0
      %3391 = vmatpush2.xpose.msra.mxu0 0.0
      %3392 = vmatprep.subr.mxu0 0.0
      %3393 = vmatpush2.xpose.msra.mxu0 0.0
      %3394 = vmatprep.subr.mxu0 0.0
      %3395 = vmatpush2.xpose.msra.mxu0 0.0
      %3396 = vmatprep.subr.mxu0 0.0
      %3397 = vmatpush2.xpose.msra.mxu0 0.0
      %3398 = vmatprep.mubr.f32.mxu0 0.0
      %3399 = vmatmul.mubr.f32.gmra.mxu0 %v3305
      %v3400 = vpop.f32.mrf.mxu0
      %v3401 = vadd.f32 %v202, %v3400
      %v3402 = vpop.f32.mrf.mxu0
      %3403 = vmatprep.mubr.f32.mxu0 0.0
      %3404 = vmatmul.mubr.f32.gmra.mxu0 %v3308
      %v3405 = vpop.f32.mrf.mxu0
      %v3406 = vadd.f32 %v202, %v3405
      %v3407 = vpop.f32.mrf.mxu0
      %3408 = vmatprep.mubr.f32.mxu0 0.0
      %3409 = vmatmul.mubr.f32.gmra.mxu0 %v3311
      %v3410 = vpop.f32.mrf.mxu0
      %v3411 = vadd.f32 %v202, %v3410
      %v3412 = vpop.f32.mrf.mxu0
      %3413 = vmatprep.mubr.f32.mxu0 0.0
      %3414 = vmatmul.mubr.f32.gmra.mxu0 %v3314
      %v3415 = vpop.f32.mrf.mxu0
      %v3416 = vadd.f32 %v202, %v3415
      %v3417 = vpop.f32.mrf.mxu0
      %3418 = vmatprep.mubr.f32.mxu0 0.0
      %3419 = vmatmul.mubr.f32.gmra.mxu0 %v3317
      %v3420 = vpop.f32.mrf.mxu0
      %v3421 = vadd.f32 %v202, %v3420
      %v3422 = vpop.f32.mrf.mxu0
      %3423 = vdwg.mxu0
      %v3424 = vsel %vm1010, %v3401, -inf
      %3425 = vmax.xlane.f32.xlu0 %v3424
      %v3426 = vpop.xlane.xlu0 %3425
      %v3427 = vsel %vm1010, %v3406, -inf
      %3428 = vmax.xlane.f32.xlu0 %v3427
      %v3429 = vpop.xlane.xlu0 %3428
      %v3430 = vsel %vm1010, %v3411, -inf
      %3431 = vmax.xlane.f32.xlu0 %v3430
      %v3432 = vpop.xlane.xlu0 %3431
      %v3433 = vsel %vm1010, %v3416, -inf
      %3434 = vmax.xlane.f32.xlu0 %v3433
      %v3435 = vpop.xlane.xlu0 %3434
      %v3436 = vsel %vm1010, %v3421, -inf
      %3437 = vmax.xlane.f32.xlu0 %v3436
      %v3438 = vpop.xlane.xlu0 %3437
      %v3439 = vsub.f32 %v3401, %v3426
      %v3440 = vsub.f32 %v3406, %v3429
      %v3441 = vsub.f32 %v3411, %v3432
      %v3442 = vsub.f32 %v3416, %v3435
      %v3443 = vsub.f32 %v3421, %v3438
      %v3444 = vmul.f32 %v3439, 1.442695
      %v3445 = vpow.pop %v3444
      %v3446 = vmul.f32 %v3440, 1.442695
      %v3447 = vpow.pop %v3446
      %v3448 = vmul.f32 %v3441, 1.442695
      %v3449 = vpow.pop %v3448
      %v3450 = vmul.f32 %v3442, 1.442695
      %v3451 = vpow.pop %v3450
      %v3452 = vmul.f32 %v3443, 1.442695
      %v3453 = vpow.pop %v3452
      %v3455 = vsel %vm1010, %v3445, 0
      %v3458 = vsel %vm1010, %v3447, 0
      %v3461 = vsel %vm1010, %v3449, 0
      %v3464 = vsel %vm1010, %v3451, 0
      %v3467 = vsel %vm1010, %v3453, 0
      %3469 = vmatprep.subr.mxu0 0.0
      %3470 = vmatpush1.msra.mxu0 0.0
      %3471 = vmatprep.subr.mxu0 0.0
      %3472 = vmatpush1.msra.mxu0 0.0
      %3473 = vmatprep.subr.mxu0 0.0
      %3474 = vmatpush1.msra.mxu0 0.0
      %3475 = vmatprep.subr.mxu0 0.0
      %3476 = vmatpush1.msra.mxu0 0.0
      %3477 = vmatprep.subr.mxu0 0.0
      %3478 = vmatpush1.msra.mxu0 0.0
      %3479 = vmatprep.subr.mxu0 0.0
      %3480 = vmatpush1.msra.mxu0 0.0
      %3481 = vmatprep.subr.mxu0 0.0
      %3482 = vmatpush1.msra.mxu0 0.0
      %3483 = vmatprep.subr.mxu0 0.0
      %3484 = vmatpush1.msra.mxu0 0.0
      %3485 = vmatprep.subr.mxu0 0.0
      %3486 = vmatpush1.msra.mxu0 0.0
      %3487 = vmatprep.subr.mxu0 0.0
      %3488 = vmatpush1.msra.mxu0 0.0
      %3489 = vmatprep.subr.mxu0 0.0
      %3490 = vmatpush1.msra.mxu0 0.0
      %3491 = vmatprep.subr.mxu0 0.0
      %3492 = vmatpush1.msra.mxu0 1.0
      %3493 = vmatprep.subr.mxu0 0.0
      %3494 = vmatpush1.msra.mxu0 1.0
      %3495 = vmatprep.subr.mxu0 0.0
      %3496 = vmatpush1.msra.mxu0 1.0
      %3497 = vmatprep.subr.mxu0 0.0
      %3498 = vmatpush1.msra.mxu0 1.0
      %3499 = vmatprep.subr.mxu0 0.0
      %3500 = vmatpush1.msra.mxu0 1.0
      %3501 = vmatprep.subr.mxu0 0.0
      %3502 = vmatpush2.msra.mxu0 0.0
      %3503 = vmatprep.subr.mxu0 0.0
      %3504 = vmatpush2.msra.mxu0 0.0
      %3505 = vmatprep.subr.mxu0 0.0
      %3506 = vmatpush2.msra.mxu0 0.0
      %3507 = vmatprep.subr.mxu0 0.0
      %3508 = vmatpush2.msra.mxu0 0.0
      %3509 = vmatprep.subr.mxu0 0.0
      %3510 = vmatpush2.msra.mxu0 0.0
      %3511 = vmatprep.subr.mxu0 0.0
      %3512 = vmatpush2.msra.mxu0 0.0
      %3513 = vmatprep.subr.mxu0 0.0
      %3514 = vmatpush2.msra.mxu0 0.0
      %3515 = vmatprep.subr.mxu0 0.0
      %3516 = vmatpush2.msra.mxu0 0.0
      %3517 = vmatprep.subr.mxu0 0.0
      %3518 = vmatpush2.msra.mxu0 0.0
      %3519 = vmatprep.subr.mxu0 0.0
      %3520 = vmatpush2.msra.mxu0 0.0
      %3521 = vmatprep.subr.mxu0 0.0
      %3522 = vmatpush2.msra.mxu0 0.0
      %3523 = vmatprep.subr.mxu0 0.0
      %3524 = vmatpush2.msra.mxu0 0.0
      %3525 = vmatprep.subr.mxu0 0.0
      %3526 = vmatpush2.msra.mxu0 0.0
      %3527 = vmatprep.subr.mxu0 0.0
      %3528 = vmatpush2.msra.mxu0 0.0
      %3529 = vmatprep.subr.mxu0 0.0
      %3530 = vmatpush2.msra.mxu0 0.0
      %3531 = vmatprep.subr.mxu0 0.0
      %3532 = vmatpush2.msra.mxu0 0.0
      %3533 = vmatprep.mubr.f32.mxu0 0.0
      %3534 = vmatmul.mubr.f32.gmra.mxu0 %v3455
      %v3535 = vpop.f32.mrf.mxu0
      %v3536 = vadd.f32 0.0, %v3535
      %v3537 = vpop.f32.mrf.mxu0
      %3538 = vmatprep.mubr.f32.mxu0 0.0
      %3539 = vmatmul.mubr.f32.gmra.mxu0 %v3458
      %v3540 = vpop.f32.mrf.mxu0
      %v3541 = vadd.f32 0.0, %v3540
      %v3542 = vpop.f32.mrf.mxu0
      %3543 = vmatprep.mubr.f32.mxu0 0.0
      %3544 = vmatmul.mubr.f32.gmra.mxu0 %v3461
      %v3545 = vpop.f32.mrf.mxu0
      %v3546 = vadd.f32 0.0, %v3545
      %v3547 = vpop.f32.mrf.mxu0
      %3548 = vmatprep.mubr.f32.mxu0 0.0
      %3549 = vmatmul.mubr.f32.gmra.mxu0 %v3464
      %v3550 = vpop.f32.mrf.mxu0
      %v3551 = vadd.f32 0.0, %v3550
      %v3552 = vpop.f32.mrf.mxu0
      %3553 = vmatprep.mubr.f32.mxu0 0.0
      %3554 = vmatmul.mubr.f32.gmra.mxu0 %v3467
      %v3555 = vpop.f32.mrf.mxu0
      %v3556 = vadd.f32 0.0, %v3555
      %v3557 = vpop.f32.mrf.mxu0
      %3558 = vdwg.mxu0
      %3559 = vmatprep.subr.mxu0 0.0
      %3560 = vmatpush1.msra.mxu0 0.0
      %3561 = vmatprep.subr.mxu0 0.0
      %3562 = vmatpush1.msra.mxu0 0.0
      %3563 = vmatprep.subr.mxu0 0.0
      %3564 = vmatpush1.msra.mxu0 0.0
      %3565 = vmatprep.subr.mxu0 0.0
      %3566 = vmatpush1.msra.mxu0 0.0
      %3567 = vmatprep.subr.mxu0 0.0
      %3568 = vmatpush1.msra.mxu0 0.0
      %3569 = vmatprep.subr.mxu0 0.0
      %3570 = vmatpush1.msra.mxu0 0.0
      %3571 = vmatprep.subr.mxu0 0.0
      %3572 = vmatpush1.msra.mxu0 0.0
      %3573 = vmatprep.subr.mxu0 0.0
      %3574 = vmatpush1.msra.mxu0 0.0
      %3575 = vmatprep.subr.mxu0 0.0
      %3576 = vmatpush1.msra.mxu0 0.0
      %3577 = vmatprep.subr.mxu0 0.0
      %3578 = vmatpush1.msra.mxu0 0.0
      %3579 = vmatprep.subr.mxu0 0.0
      %3580 = vmatpush1.msra.mxu0 0.0
      %3581 = vmatprep.subr.mxu0 0.0
      %3582 = vmatpush1.msra.mxu0 %v3299
      %3583 = vmatprep.subr.mxu0 0.0
      %3584 = vmatpush1.msra.mxu0 %v3294
      %3585 = vmatprep.subr.mxu0 0.0
      %3586 = vmatpush1.msra.mxu0 %v3291
      %3587 = vmatprep.subr.mxu0 0.0
      %3588 = vmatpush1.msra.mxu0 %v3286
      %3589 = vmatprep.subr.mxu0 0.0
      %3590 = vmatpush1.msra.mxu0 %v3283
      %3591 = vmatprep.subr.mxu0 0.0
      %3592 = vmatpush2.msra.mxu0 0.0
      %3593 = vmatprep.subr.mxu0 0.0
      %3594 = vmatpush2.msra.mxu0 0.0
      %3595 = vmatprep.subr.mxu0 0.0
      %3596 = vmatpush2.msra.mxu0 0.0
      %3597 = vmatprep.subr.mxu0 0.0
      %3598 = vmatpush2.msra.mxu0 0.0
      %3599 = vmatprep.subr.mxu0 0.0
      %3600 = vmatpush2.msra.mxu0 0.0
      %3601 = vmatprep.subr.mxu0 0.0
      %3602 = vmatpush2.msra.mxu0 0.0
      %3603 = vmatprep.subr.mxu0 0.0
      %3604 = vmatpush2.msra.mxu0 0.0
      %3605 = vmatprep.subr.mxu0 0.0
      %3606 = vmatpush2.msra.mxu0 0.0
      %3607 = vmatprep.subr.mxu0 0.0
      %3608 = vmatpush2.msra.mxu0 0.0
      %3609 = vmatprep.subr.mxu0 0.0
      %3610 = vmatpush2.msra.mxu0 0.0
      %3611 = vmatprep.subr.mxu0 0.0
      %3612 = vmatpush2.msra.mxu0 0.0
      %3613 = vmatprep.subr.mxu0 0.0
      %3614 = vmatpush2.msra.mxu0 0.0
      %3615 = vmatprep.subr.mxu0 0.0
      %3616 = vmatpush2.msra.mxu0 0.0
      %3617 = vmatprep.subr.mxu0 0.0
      %3618 = vmatpush2.msra.mxu0 0.0
      %3619 = vmatprep.subr.mxu0 0.0
      %3620 = vmatpush2.msra.mxu0 0.0
      %3621 = vmatprep.subr.mxu0 0.0
      %3622 = vmatpush2.msra.mxu0 0.0
      %3623 = vmatprep.mubr.f32.mxu0 0.0
      %3624 = vmatmul.mubr.f32.gmra.mxu0 %v3455
      %v3625 = vpop.f32.mrf.mxu0
      %v3626 = vadd.f32 0.0, %v3625
      %v3627 = vpop.f32.mrf.mxu0
      %3628 = vmatprep.mubr.f32.mxu0 0.0
      %3629 = vmatmul.mubr.f32.gmra.mxu0 %v3458
      %v3630 = vpop.f32.mrf.mxu0
      %v3631 = vadd.f32 0.0, %v3630
      %v3632 = vpop.f32.mrf.mxu0
      %3633 = vmatprep.mubr.f32.mxu0 0.0
      %3634 = vmatmul.mubr.f32.gmra.mxu0 %v3461
      %v3635 = vpop.f32.mrf.mxu0
      %v3636 = vadd.f32 0.0, %v3635
      %v3637 = vpop.f32.mrf.mxu0
      %3638 = vmatprep.mubr.f32.mxu0 0.0
      %3639 = vmatmul.mubr.f32.gmra.mxu0 %v3464
      %v3640 = vpop.f32.mrf.mxu0
      %v3641 = vadd.f32 0.0, %v3640
      %v3642 = vpop.f32.mrf.mxu0
      %3643 = vmatprep.mubr.f32.mxu0 0.0
      %3644 = vmatmul.mubr.f32.gmra.mxu0 %v3467
      %v3645 = vpop.f32.mrf.mxu0
      %v3646 = vadd.f32 0.0, %v3645
      %v3647 = vpop.f32.mrf.mxu0
      %3648 = vdwg.mxu0
      %v3649 = vrcp.pop %v3536
      %v3650 = vmul.f32 1.0, %v3649
      %v3651 = vrcp.pop %v3541
      %v3652 = vmul.f32 1.0, %v3651
      %v3653 = vrcp.pop %v3546
      %v3654 = vmul.f32 1.0, %v3653
      %v3655 = vrcp.pop %v3551
      %v3656 = vmul.f32 1.0, %v3655
      %v3657 = vrcp.pop %v3556
      %v3658 = vmul.f32 1.0, %v3657
      %3660 = vset.pattern.permute.xlu0 0
      %3661 = vperm.xlu0 %3660, %v3650
      %v3662 = vpop.permute.xlu0 %3661
      %3665 = vset.pattern.permute.xlu0 0
      %3666 = vperm.xlu0 %3665, %v3652
      %v3667 = vpop.permute.xlu0 %3666
      %3670 = vset.pattern.permute.xlu0 0
      %3671 = vperm.xlu0 %3670, %v3654
      %v3672 = vpop.permute.xlu0 %3671
      %3675 = vset.pattern.permute.xlu0 0
      %3676 = vperm.xlu0 %3675, %v3656
      %v3677 = vpop.permute.xlu0 %3676
      %3680 = vset.pattern.permute.xlu0 0
      %3681 = vperm.xlu0 %3680, %v3658
      %v3682 = vpop.permute.xlu0 %3681
      %v3684 = vmul.f32 %v3626, %v3662
      %v3685 = vmul.f32 %v3631, %v3667
      %v3686 = vmul.f32 %v3636, %v3672
      %v3687 = vmul.f32 %v3641, %v3677
      %v3688 = vmul.f32 %v3646, %v3682
      %v3689 = vadd.f32 %v3684, %v3129
      %v3690 = vadd.f32 %v3685, %v3132
      %v3691 = vadd.f32 %v3686, %v3137
      %v3692 = vadd.f32 %v3687, %v3140
      %v3693 = vadd.f32 %v3688, %v3145
      %v3694 = vld [vmem:[%s1 + $0x120] sm:$0xf]
      %v3695 = vld [vmem:[%s1 + $0x124] sm:$0xf]
      %v3696 = vpack.c.bf16 %v3690, %v3689
      %v3697 = vpack.c.bf16 %v3692, %v3691
      %v3698 = vpack.c.bf16 %v3693, %v3693
      %v3699 = vld [vmem:[%s1 + $0x128] sm:$0xf]
      %v3700 = vld [vmem:[%s1 + $0x12c] sm:$0xf]
      %v3701 = vld [vmem:[%s1 + $0x130] sm:$0xf]
      %v3702 = vld [vmem:[%s1 + $0x134] sm:$0xf]
      %v3703 = vld [vmem:[%s2 + $0x12] sm:$0x1]
      %v3704 = vlaneseq
      %v3705 = vshrl.u32 %v3704, 7
      %v3706 = vsub.s32 0, %v3705
      %v3707 = vrot.slane %v3703, %v3706
      %v3712 = vunpack.c.l.b16 %v3699
      %v3713 = vunpack.c.l.b16 %v3700
      %v3714 = vunpack.c.l.b16 %v3701
      %v3715 = vunpack.c.l.b16 %v3702
      %v3716 = vpack.c.b16 %v3713, %v3712
      %v3717 = vpack.c.b16 %v3715, %v3714
      %3720 = vmatprep.subr.bf16.mxu0 0
      %3721 = vmatpush1.bf16.msra.mxu0 0
      %3722 = vmatprep.subr.bf16.mxu0 0
      %3723 = vmatpush1.bf16.msra.mxu0 0
      %3724 = vmatprep.subr.bf16.mxu0 0
      %3725 = vmatpush1.bf16.msra.mxu0 0
      %3726 = vmatprep.subr.bf16.mxu0 0
      %3727 = vmatpush1.bf16.msra.mxu0 0
      %3728 = vmatprep.subr.bf16.mxu0 0
      %3729 = vmatpush1.bf16.msra.mxu0 0
      %3730 = vmatprep.subr.bf16.mxu0 0
      %3731 = vmatpush1.bf16.msra.mxu0 0
      %3732 = vmatprep.subr.bf16.mxu0 0
      %3733 = vmatpush1.bf16.msra.mxu0 %v3717
      %3734 = vmatprep.subr.bf16.mxu0 0
      %3735 = vmatpush1.bf16.msra.mxu0 %v3716
      %3736 = vmatprep.subr.bf16.mxu0 0
      %3737 = vmatpush2.bf16.msra.mxu0 0
      %3738 = vmatprep.subr.bf16.mxu0 0
      %3739 = vmatpush2.bf16.msra.mxu0 0
      %3740 = vmatprep.subr.bf16.mxu0 0
      %3741 = vmatpush2.bf16.msra.mxu0 0
      %3742 = vmatprep.subr.bf16.mxu0 0
      %3743 = vmatpush2.bf16.msra.mxu0 0
      %3744 = vmatprep.subr.bf16.mxu0 0
      %3745 = vmatpush2.bf16.msra.mxu0 0
      %3746 = vmatprep.subr.bf16.mxu0 0
      %3747 = vmatpush2.bf16.msra.mxu0 0
      %3748 = vmatprep.subr.bf16.mxu0 0
      %3749 = vmatpush2.bf16.msra.mxu0 0
      %3750 = vmatprep.subr.bf16.mxu0 0
      %3751 = vmatpush2.bf16.msra.mxu0 0
      %3752 = vmatprep.mubr.bf16.mxu0 0
      %3753 = vmatmul.mubr.bf16.gmra.mxu0 %v3086
      %v3754 = vpop.f32.mrf.mxu0
      %v3755 = vadd.f32 %v3707, %v3754
      %v3756 = vpop.f32.mrf.mxu0
      %v3757 = vpop.f32.mrf.mxu0
      %v3758 = vadd.f32 %v3707, %v3757
      %v3759 = vpop.f32.mrf.mxu0
      %3760 = vmatprep.mubr.bf16.mxu0 0
      %3761 = vmatmul.mubr.bf16.gmra.mxu0 %v3089
      %v3762 = vpop.f32.mrf.mxu0
      %v3763 = vadd.f32 %v3707, %v3762
      %v3764 = vpop.f32.mrf.mxu0
      %v3765 = vpop.f32.mrf.mxu0
      %v3766 = vadd.f32 %v3707, %v3765
      %v3767 = vpop.f32.mrf.mxu0
      %3768 = vmatprep.mubr.bf16.mxu0 0
      %3769 = vmatmul.mubr.bf16.gmra.mxu0 %v3092
      %v3770 = vpop.f32.mrf.mxu0
      %v3771 = vadd.f32 %v3707, %v3770
      %v3772 = vpop.f32.mrf.mxu0
      %v3773 = vpop.f32.mrf.mxu0
      %v3774 = vpop.f32.mrf.mxu0
      %3775 = vdwg.mxu0
      %v3776 = vld [vmem:[%s1 + $0x138] sm:$0xf]
      %v3777 = vld [vmem:[%s1 + $0x13c] sm:$0xf]
      %v3778 = vld [vmem:[%s1 + $0x140] sm:$0xf]
      %v3779 = vld [vmem:[%s1 + $0x144] sm:$0xf]
      %v3780 = vld [vmem:[%s2 + $0x13] sm:$0x1]
      %v3781 = vlaneseq
      %v3782 = vshrl.u32 %v3781, 7
      %v3783 = vsub.s32 0, %v3782
      %v3784 = vrot.slane %v3780, %v3783
      %v3789 = vunpack.c.l.b16 %v3776
      %v3790 = vunpack.c.l.b16 %v3777
      %v3791 = vunpack.c.l.b16 %v3778
      %v3792 = vunpack.c.l.b16 %v3779
      %v3793 = vpack.c.b16 %v3790, %v3789
      %v3794 = vpack.c.b16 %v3792, %v3791
      %3797 = vmatprep.subr.bf16.mxu0 0
      %3798 = vmatpush1.bf16.msra.mxu0 0
      %3799 = vmatprep.subr.bf16.mxu0 0
      %3800 = vmatpush1.bf16.msra.mxu0 0
      %3801 = vmatprep.subr.bf16.mxu0 0
      %3802 = vmatpush1.bf16.msra.mxu0 0
      %3803 = vmatprep.subr.bf16.mxu0 0
      %3804 = vmatpush1.bf16.msra.mxu0 0
      %3805 = vmatprep.subr.bf16.mxu0 0
      %3806 = vmatpush1.bf16.msra.mxu0 0
      %3807 = vmatprep.subr.bf16.mxu0 0
      %3808 = vmatpush1.bf16.msra.mxu0 0
      %3809 = vmatprep.subr.bf16.mxu0 0
      %3810 = vmatpush1.bf16.msra.mxu0 %v3794
      %3811 = vmatprep.subr.bf16.mxu0 0
      %3812 = vmatpush1.bf16.msra.mxu0 %v3793
      %3813 = vmatprep.subr.bf16.mxu0 0
      %3814 = vmatpush2.bf16.msra.mxu0 0
      %3815 = vmatprep.subr.bf16.mxu0 0
      %3816 = vmatpush2.bf16.msra.mxu0 0
      %3817 = vmatprep.subr.bf16.mxu0 0
      %3818 = vmatpush2.bf16.msra.mxu0 0
      %3819 = vmatprep.subr.bf16.mxu0 0
      %3820 = vmatpush2.bf16.msra.mxu0 0
      %3821 = vmatprep.subr.bf16.mxu0 0
      %3822 = vmatpush2.bf16.msra.mxu0 0
      %3823 = vmatprep.subr.bf16.mxu0 0
      %3824 = vmatpush2.bf16.msra.mxu0 0
      %3825 = vmatprep.subr.bf16.mxu0 0
      %3826 = vmatpush2.bf16.msra.mxu0 0
      %3827 = vmatprep.subr.bf16.mxu0 0
      %3828 = vmatpush2.bf16.msra.mxu0 0
      %3829 = vmatprep.mubr.bf16.mxu0 0
      %3830 = vmatmul.mubr.bf16.gmra.mxu0 %v3086
      %v3831 = vpop.f32.mrf.mxu0
      %v3832 = vadd.f32 %v3784, %v3831
      %v3833 = vpop.f32.mrf.mxu0
      %v3834 = vpop.f32.mrf.mxu0
      %v3835 = vadd.f32 %v3784, %v3834
      %v3836 = vpop.f32.mrf.mxu0
      %3837 = vmatprep.mubr.bf16.mxu0 0
      %3838 = vmatmul.mubr.bf16.gmra.mxu0 %v3089
      %v3839 = vpop.f32.mrf.mxu0
      %v3840 = vadd.f32 %v3784, %v3839
      %v3841 = vpop.f32.mrf.mxu0
      %v3842 = vpop.f32.mrf.mxu0
      %v3843 = vadd.f32 %v3784, %v3842
      %v3844 = vpop.f32.mrf.mxu0
      %3845 = vmatprep.mubr.bf16.mxu0 0
      %3846 = vmatmul.mubr.bf16.gmra.mxu0 %v3092
      %v3847 = vpop.f32.mrf.mxu0
      %v3848 = vadd.f32 %v3784, %v3847
      %v3849 = vpop.f32.mrf.mxu0
      %v3850 = vpop.f32.mrf.mxu0
      %v3851 = vpop.f32.mrf.mxu0
      %3852 = vdwg.mxu0
      %v3853 = vld [vmem:[%s1 + $0x148] sm:$0xf]
      %v3854 = vld [vmem:[%s1 + $0x14c] sm:$0xf]
      %v3855 = vld [vmem:[%s1 + $0x150] sm:$0xf]
      %v3856 = vld [vmem:[%s1 + $0x154] sm:$0xf]
      %v3857 = vld [vmem:[%s2 + $0x14] sm:$0x1]
      %v3858 = vlaneseq
      %v3859 = vshrl.u32 %v3858, 7
      %v3860 = vsub.s32 0, %v3859
      %v3861 = vrot.slane %v3857, %v3860
      %v3866 = vunpack.c.l.b16 %v3853
      %v3867 = vunpack.c.l.b16 %v3854
      %v3868 = vunpack.c.l.b16 %v3855
      %v3869 = vunpack.c.l.b16 %v3856
      %v3870 = vpack.c.b16 %v3867, %v3866
      %v3871 = vpack.c.b16 %v3869, %v3868
      %3874 = vmatprep.subr.bf16.mxu0 0
      %3875 = vmatpush1.bf16.msra.mxu0 0
      %3876 = vmatprep.subr.bf16.mxu0 0
      %3877 = vmatpush1.bf16.msra.mxu0 0
      %3878 = vmatprep.subr.bf16.mxu0 0
      %3879 = vmatpush1.bf16.msra.mxu0 0
      %3880 = vmatprep.subr.bf16.mxu0 0
      %3881 = vmatpush1.bf16.msra.mxu0 0
      %3882 = vmatprep.subr.bf16.mxu0 0
      %3883 = vmatpush1.bf16.msra.mxu0 0
      %3884 = vmatprep.subr.bf16.mxu0 0
      %3885 = vmatpush1.bf16.msra.mxu0 0
      %3886 = vmatprep.subr.bf16.mxu0 0
      %3887 = vmatpush1.bf16.msra.mxu0 %v3871
      %3888 = vmatprep.subr.bf16.mxu0 0
      %3889 = vmatpush1.bf16.msra.mxu0 %v3870
      %3890 = vmatprep.subr.bf16.mxu0 0
      %3891 = vmatpush2.bf16.msra.mxu0 0
      %3892 = vmatprep.subr.bf16.mxu0 0
      %3893 = vmatpush2.bf16.msra.mxu0 0
      %3894 = vmatprep.subr.bf16.mxu0 0
      %3895 = vmatpush2.bf16.msra.mxu0 0
      %3896 = vmatprep.subr.bf16.mxu0 0
      %3897 = vmatpush2.bf16.msra.mxu0 0
      %3898 = vmatprep.subr.bf16.mxu0 0
      %3899 = vmatpush2.bf16.msra.mxu0 0
      %3900 = vmatprep.subr.bf16.mxu0 0
      %3901 = vmatpush2.bf16.msra.mxu0 0
      %3902 = vmatprep.subr.bf16.mxu0 0
      %3903 = vmatpush2.bf16.msra.mxu0 0
      %3904 = vmatprep.subr.bf16.mxu0 0
      %3905 = vmatpush2.bf16.msra.mxu0 0
      %3906 = vmatprep.mubr.bf16.mxu0 0
      %3907 = vmatmul.mubr.bf16.gmra.mxu0 %v3086
      %v3908 = vpop.f32.mrf.mxu0
      %v3909 = vadd.f32 %v3861, %v3908
      %v3910 = vpop.f32.mrf.mxu0
      %v3911 = vpop.f32.mrf.mxu0
      %v3912 = vadd.f32 %v3861, %v3911
      %v3913 = vpop.f32.mrf.mxu0
      %3914 = vmatprep.mubr.bf16.mxu0 0
      %3915 = vmatmul.mubr.bf16.gmra.mxu0 %v3089
      %v3916 = vpop.f32.mrf.mxu0
      %v3917 = vadd.f32 %v3861, %v3916
      %v3918 = vpop.f32.mrf.mxu0
      %v3919 = vpop.f32.mrf.mxu0
      %v3920 = vadd.f32 %v3861, %v3919
      %v3921 = vpop.f32.mrf.mxu0
      %3922 = vmatprep.mubr.bf16.mxu0 0
      %3923 = vmatmul.mubr.bf16.gmra.mxu0 %v3092
      %v3924 = vpop.f32.mrf.mxu0
      %v3925 = vadd.f32 %v3861, %v3924
      %v3926 = vpop.f32.mrf.mxu0
      %v3927 = vpop.f32.mrf.mxu0
      %v3928 = vpop.f32.mrf.mxu0
      %3929 = vdwg.mxu0
      %v3931 = vsel %vm889, %v3755, 0
      %v3934 = vsel %vm889, %v3758, 0
      %v3937 = vsel %vm889, %v3763, 0
      %v3940 = vsel %vm889, %v3766, 0
      %v3943 = vsel %vm889, %v3771, 0
      %v3946 = vsel %vm889, %v3832, 0
      %v3949 = vsel %vm889, %v3835, 0
      %v3952 = vsel %vm889, %v3840, 0
      %v3955 = vsel %vm889, %v3843, 0
      %v3958 = vsel %vm889, %v3848, 0
      %3960 = vmatprep.subr.mxu0 0.0
      %3961 = vmatpush1.xpose.msra.mxu0 0.0
      %3962 = vmatprep.subr.mxu0 0.0
      %3963 = vmatpush1.xpose.msra.mxu0 0.0
      %3964 = vmatprep.subr.mxu0 0.0
      %3965 = vmatpush1.xpose.msra.mxu0 0.0
      %3966 = vmatprep.subr.mxu0 0.0
      %3967 = vmatpush1.xpose.msra.mxu0 0.0
      %3968 = vmatprep.subr.mxu0 0.0
      %3969 = vmatpush1.xpose.msra.mxu0 0.0
      %3970 = vmatprep.subr.mxu0 0.0
      %3971 = vmatpush1.xpose.msra.mxu0 0.0
      %3972 = vmatprep.subr.mxu0 0.0
      %3973 = vmatpush1.xpose.msra.mxu0 0.0
      %3974 = vmatprep.subr.mxu0 0.0
      %3975 = vmatpush1.xpose.msra.mxu0 0.0
      %3976 = vmatprep.subr.mxu0 0.0
      %3977 = vmatpush1.xpose.msra.mxu0 0.0
      %3978 = vmatprep.subr.mxu0 0.0
      %3979 = vmatpush1.xpose.msra.mxu0 0.0
      %3980 = vmatprep.subr.mxu0 0.0
      %3981 = vmatpush1.xpose.msra.mxu0 0.0
      %3982 = vmatprep.subr.mxu0 0.0
      %3983 = vmatpush1.xpose.msra.mxu0 %v3958
      %3984 = vmatprep.subr.mxu0 0.0
      %3985 = vmatpush1.xpose.msra.mxu0 %v3955
      %3986 = vmatprep.subr.mxu0 0.0
      %3987 = vmatpush1.xpose.msra.mxu0 %v3952
      %3988 = vmatprep.subr.mxu0 0.0
      %3989 = vmatpush1.xpose.msra.mxu0 %v3949
      %3990 = vmatprep.subr.mxu0 0.0
      %3991 = vmatpush1.xpose.msra.mxu0 %v3946
      %3992 = vmatprep.subr.mxu0 0.0
      %3993 = vmatpush2.xpose.msra.mxu0 0.0
      %3994 = vmatprep.subr.mxu0 0.0
      %3995 = vmatpush2.xpose.msra.mxu0 0.0
      %3996 = vmatprep.subr.mxu0 0.0
      %3997 = vmatpush2.xpose.msra.mxu0 0.0
      %3998 = vmatprep.subr.mxu0 0.0
      %3999 = vmatpush2.xpose.msra.mxu0 0.0
      %4000 = vmatprep.subr.mxu0 0.0
      %4001 = vmatpush2.xpose.msra.mxu0 0.0
      %4002 = vmatprep.subr.mxu0 0.0
      %4003 = vmatpush2.xpose.msra.mxu0 0.0
      %4004 = vmatprep.subr.mxu0 0.0
      %4005 = vmatpush2.xpose.msra.mxu0 0.0
      %4006 = vmatprep.subr.mxu0 0.0
      %4007 = vmatpush2.xpose.msra.mxu0 0.0
      %4008 = vmatprep.subr.mxu0 0.0
      %4009 = vmatpush2.xpose.msra.mxu0 0.0
      %4010 = vmatprep.subr.mxu0 0.0
      %4011 = vmatpush2.xpose.msra.mxu0 0.0
      %4012 = vmatprep.subr.mxu0 0.0
      %4013 = vmatpush2.xpose.msra.mxu0 0.0
      %4014 = vmatprep.subr.mxu0 0.0
      %4015 = vmatpush2.xpose.msra.mxu0 0.0
      %4016 = vmatprep.subr.mxu0 0.0
      %4017 = vmatpush2.xpose.msra.mxu0 0.0
      %4018 = vmatprep.subr.mxu0 0.0
      %4019 = vmatpush2.xpose.msra.mxu0 0.0
      %4020 = vmatprep.subr.mxu0 0.0
      %4021 = vmatpush2.xpose.msra.mxu0 0.0
      %4022 = vmatprep.subr.mxu0 0.0
      %4023 = vmatpush2.xpose.msra.mxu0 0.0
      %4024 = vmatprep.mubr.f32.mxu0 0.0
      %4025 = vmatmul.mubr.f32.gmra.mxu0 %v3931
      %v4026 = vpop.f32.mrf.mxu0
      %v4027 = vadd.f32 %v202, %v4026
      %v4028 = vpop.f32.mrf.mxu0
      %4029 = vmatprep.mubr.f32.mxu0 0.0
      %4030 = vmatmul.mubr.f32.gmra.mxu0 %v3934
      %v4031 = vpop.f32.mrf.mxu0
      %v4032 = vadd.f32 %v202, %v4031
      %v4033 = vpop.f32.mrf.mxu0
      %4034 = vmatprep.mubr.f32.mxu0 0.0
      %4035 = vmatmul.mubr.f32.gmra.mxu0 %v3937
      %v4036 = vpop.f32.mrf.mxu0
      %v4037 = vadd.f32 %v202, %v4036
      %v4038 = vpop.f32.mrf.mxu0
      %4039 = vmatprep.mubr.f32.mxu0 0.0
      %4040 = vmatmul.mubr.f32.gmra.mxu0 %v3940
      %v4041 = vpop.f32.mrf.mxu0
      %v4042 = vadd.f32 %v202, %v4041
      %v4043 = vpop.f32.mrf.mxu0
      %4044 = vmatprep.mubr.f32.mxu0 0.0
      %4045 = vmatmul.mubr.f32.gmra.mxu0 %v3943
      %v4046 = vpop.f32.mrf.mxu0
      %v4047 = vadd.f32 %v202, %v4046
      %v4048 = vpop.f32.mrf.mxu0
      %4049 = vdwg.mxu0
      %v4050 = vsel %vm1010, %v4027, -inf
      %4051 = vmax.xlane.f32.xlu0 %v4050
      %v4052 = vpop.xlane.xlu0 %4051
      %v4053 = vsel %vm1010, %v4032, -inf
      %4054 = vmax.xlane.f32.xlu0 %v4053
      %v4055 = vpop.xlane.xlu0 %4054
      %v4056 = vsel %vm1010, %v4037, -inf
      %4057 = vmax.xlane.f32.xlu0 %v4056
      %v4058 = vpop.xlane.xlu0 %4057
      %v4059 = vsel %vm1010, %v4042, -inf
      %4060 = vmax.xlane.f32.xlu0 %v4059
      %v4061 = vpop.xlane.xlu0 %4060
      %v4062 = vsel %vm1010, %v4047, -inf
      %4063 = vmax.xlane.f32.xlu0 %v4062
      %v4064 = vpop.xlane.xlu0 %4063
      %v4065 = vsub.f32 %v4027, %v4052
      %v4066 = vsub.f32 %v4032, %v4055
      %v4067 = vsub.f32 %v4037, %v4058
      %v4068 = vsub.f32 %v4042, %v4061
      %v4069 = vsub.f32 %v4047, %v4064
      %v4070 = vmul.f32 %v4065, 1.442695
      %v4071 = vpow.pop %v4070
      %v4072 = vmul.f32 %v4066, 1.442695
      %v4073 = vpow.pop %v4072
      %v4074 = vmul.f32 %v4067, 1.442695
      %v4075 = vpow.pop %v4074
      %v4076 = vmul.f32 %v4068, 1.442695
      %v4077 = vpow.pop %v4076
      %v4078 = vmul.f32 %v4069, 1.442695
      %v4079 = vpow.pop %v4078
      %v4081 = vsel %vm1010, %v4071, 0
      %v4084 = vsel %vm1010, %v4073, 0
      %v4087 = vsel %vm1010, %v4075, 0
      %v4090 = vsel %vm1010, %v4077, 0
      %v4093 = vsel %vm1010, %v4079, 0
      %4095 = vmatprep.subr.mxu0 0.0
      %4096 = vmatpush1.msra.mxu0 0.0
      %4097 = vmatprep.subr.mxu0 0.0
      %4098 = vmatpush1.msra.mxu0 0.0
      %4099 = vmatprep.subr.mxu0 0.0
      %4100 = vmatpush1.msra.mxu0 0.0
      %4101 = vmatprep.subr.mxu0 0.0
      %4102 = vmatpush1.msra.mxu0 0.0
      %4103 = vmatprep.subr.mxu0 0.0
      %4104 = vmatpush1.msra.mxu0 0.0
      %4105 = vmatprep.subr.mxu0 0.0
      %4106 = vmatpush1.msra.mxu0 0.0
      %4107 = vmatprep.subr.mxu0 0.0
      %4108 = vmatpush1.msra.mxu0 0.0
      %4109 = vmatprep.subr.mxu0 0.0
      %4110 = vmatpush1.msra.mxu0 0.0
      %4111 = vmatprep.subr.mxu0 0.0
      %4112 = vmatpush1.msra.mxu0 0.0
      %4113 = vmatprep.subr.mxu0 0.0
      %4114 = vmatpush1.msra.mxu0 0.0
      %4115 = vmatprep.subr.mxu0 0.0
      %4116 = vmatpush1.msra.mxu0 0.0
      %4117 = vmatprep.subr.mxu0 0.0
      %4118 = vmatpush1.msra.mxu0 1.0
      %4119 = vmatprep.subr.mxu0 0.0
      %4120 = vmatpush1.msra.mxu0 1.0
      %4121 = vmatprep.subr.mxu0 0.0
      %4122 = vmatpush1.msra.mxu0 1.0
      %4123 = vmatprep.subr.mxu0 0.0
      %4124 = vmatpush1.msra.mxu0 1.0
      %4125 = vmatprep.subr.mxu0 0.0
      %4126 = vmatpush1.msra.mxu0 1.0
      %4127 = vmatprep.subr.mxu0 0.0
      %4128 = vmatpush2.msra.mxu0 0.0
      %4129 = vmatprep.subr.mxu0 0.0
      %4130 = vmatpush2.msra.mxu0 0.0
      %4131 = vmatprep.subr.mxu0 0.0
      %4132 = vmatpush2.msra.mxu0 0.0
      %4133 = vmatprep.subr.mxu0 0.0
      %4134 = vmatpush2.msra.mxu0 0.0
      %4135 = vmatprep.subr.mxu0 0.0
      %4136 = vmatpush2.msra.mxu0 0.0
      %4137 = vmatprep.subr.mxu0 0.0
      %4138 = vmatpush2.msra.mxu0 0.0
      %4139 = vmatprep.subr.mxu0 0.0
      %4140 = vmatpush2.msra.mxu0 0.0
      %4141 = vmatprep.subr.mxu0 0.0
      %4142 = vmatpush2.msra.mxu0 0.0
      %4143 = vmatprep.subr.mxu0 0.0
      %4144 = vmatpush2.msra.mxu0 0.0
      %4145 = vmatprep.subr.mxu0 0.0
      %4146 = vmatpush2.msra.mxu0 0.0
      %4147 = vmatprep.subr.mxu0 0.0
      %4148 = vmatpush2.msra.mxu0 0.0
      %4149 = vmatprep.subr.mxu0 0.0
      %4150 = vmatpush2.msra.mxu0 0.0
      %4151 = vmatprep.subr.mxu0 0.0
      %4152 = vmatpush2.msra.mxu0 0.0
      %4153 = vmatprep.subr.mxu0 0.0
      %4154 = vmatpush2.msra.mxu0 0.0
      %4155 = vmatprep.subr.mxu0 0.0
      %4156 = vmatpush2.msra.mxu0 0.0
      %4157 = vmatprep.subr.mxu0 0.0
      %4158 = vmatpush2.msra.mxu0 0.0
      %4159 = vmatprep.mubr.f32.mxu0 0.0
      %4160 = vmatmul.mubr.f32.gmra.mxu0 %v4081
      %v4161 = vpop.f32.mrf.mxu0
      %v4162 = vadd.f32 0.0, %v4161
      %v4163 = vpop.f32.mrf.mxu0
      %4164 = vmatprep.mubr.f32.mxu0 0.0
      %4165 = vmatmul.mubr.f32.gmra.mxu0 %v4084
      %v4166 = vpop.f32.mrf.mxu0
      %v4167 = vadd.f32 0.0, %v4166
      %v4168 = vpop.f32.mrf.mxu0
      %4169 = vmatprep.mubr.f32.mxu0 0.0
      %4170 = vmatmul.mubr.f32.gmra.mxu0 %v4087
      %v4171 = vpop.f32.mrf.mxu0
      %v4172 = vadd.f32 0.0, %v4171
      %v4173 = vpop.f32.mrf.mxu0
      %4174 = vmatprep.mubr.f32.mxu0 0.0
      %4175 = vmatmul.mubr.f32.gmra.mxu0 %v4090
      %v4176 = vpop.f32.mrf.mxu0
      %v4177 = vadd.f32 0.0, %v4176
      %v4178 = vpop.f32.mrf.mxu0
      %4179 = vmatprep.mubr.f32.mxu0 0.0
      %4180 = vmatmul.mubr.f32.gmra.mxu0 %v4093
      %v4181 = vpop.f32.mrf.mxu0
      %v4182 = vadd.f32 0.0, %v4181
      %v4183 = vpop.f32.mrf.mxu0
      %4184 = vdwg.mxu0
      %4185 = vmatprep.subr.mxu0 0.0
      %4186 = vmatpush1.msra.mxu0 0.0
      %4187 = vmatprep.subr.mxu0 0.0
      %4188 = vmatpush1.msra.mxu0 0.0
      %4189 = vmatprep.subr.mxu0 0.0
      %4190 = vmatpush1.msra.mxu0 0.0
      %4191 = vmatprep.subr.mxu0 0.0
      %4192 = vmatpush1.msra.mxu0 0.0
      %4193 = vmatprep.subr.mxu0 0.0
      %4194 = vmatpush1.msra.mxu0 0.0
      %4195 = vmatprep.subr.mxu0 0.0
      %4196 = vmatpush1.msra.mxu0 0.0
      %4197 = vmatprep.subr.mxu0 0.0
      %4198 = vmatpush1.msra.mxu0 0.0
      %4199 = vmatprep.subr.mxu0 0.0
      %4200 = vmatpush1.msra.mxu0 0.0
      %4201 = vmatprep.subr.mxu0 0.0
      %4202 = vmatpush1.msra.mxu0 0.0
      %4203 = vmatprep.subr.mxu0 0.0
      %4204 = vmatpush1.msra.mxu0 0.0
      %4205 = vmatprep.subr.mxu0 0.0
      %4206 = vmatpush1.msra.mxu0 0.0
      %4207 = vmatprep.subr.mxu0 0.0
      %4208 = vmatpush1.msra.mxu0 %v3925
      %4209 = vmatprep.subr.mxu0 0.0
      %4210 = vmatpush1.msra.mxu0 %v3920
      %4211 = vmatprep.subr.mxu0 0.0
      %4212 = vmatpush1.msra.mxu0 %v3917
      %4213 = vmatprep.subr.mxu0 0.0
      %4214 = vmatpush1.msra.mxu0 %v3912
      %4215 = vmatprep.subr.mxu0 0.0
      %4216 = vmatpush1.msra.mxu0 %v3909
      %4217 = vmatprep.subr.mxu0 0.0
      %4218 = vmatpush2.msra.mxu0 0.0
      %4219 = vmatprep.subr.mxu0 0.0
      %4220 = vmatpush2.msra.mxu0 0.0
      %4221 = vmatprep.subr.mxu0 0.0
      %4222 = vmatpush2.msra.mxu0 0.0
      %4223 = vmatprep.subr.mxu0 0.0
      %4224 = vmatpush2.msra.mxu0 0.0
      %4225 = vmatprep.subr.mxu0 0.0
      %4226 = vmatpush2.msra.mxu0 0.0
      %4227 = vmatprep.subr.mxu0 0.0
      %4228 = vmatpush2.msra.mxu0 0.0
      %4229 = vmatprep.subr.mxu0 0.0
      %4230 = vmatpush2.msra.mxu0 0.0
      %4231 = vmatprep.subr.mxu0 0.0
      %4232 = vmatpush2.msra.mxu0 0.0
      %4233 = vmatprep.subr.mxu0 0.0
      %4234 = vmatpush2.msra.mxu0 0.0
      %4235 = vmatprep.subr.mxu0 0.0
      %4236 = vmatpush2.msra.mxu0 0.0
      %4237 = vmatprep.subr.mxu0 0.0
      %4238 = vmatpush2.msra.mxu0 0.0
      %4239 = vmatprep.subr.mxu0 0.0
      %4240 = vmatpush2.msra.mxu0 0.0
      %4241 = vmatprep.subr.mxu0 0.0
      %4242 = vmatpush2.msra.mxu0 0.0
      %4243 = vmatprep.subr.mxu0 0.0
      %4244 = vmatpush2.msra.mxu0 0.0
      %4245 = vmatprep.subr.mxu0 0.0
      %4246 = vmatpush2.msra.mxu0 0.0
      %4247 = vmatprep.subr.mxu0 0.0
      %4248 = vmatpush2.msra.mxu0 0.0
      %4249 = vmatprep.mubr.f32.mxu0 0.0
      %4250 = vmatmul.mubr.f32.gmra.mxu0 %v4081
      %v4251 = vpop.f32.mrf.mxu0
      %v4252 = vadd.f32 0.0, %v4251
      %v4253 = vpop.f32.mrf.mxu0
      %4254 = vmatprep.mubr.f32.mxu0 0.0
      %4255 = vmatmul.mubr.f32.gmra.mxu0 %v4084
      %v4256 = vpop.f32.mrf.mxu0
      %v4257 = vadd.f32 0.0, %v4256
      %v4258 = vpop.f32.mrf.mxu0
      %4259 = vmatprep.mubr.f32.mxu0 0.0
      %4260 = vmatmul.mubr.f32.gmra.mxu0 %v4087
      %v4261 = vpop.f32.mrf.mxu0
      %v4262 = vadd.f32 0.0, %v4261
      %v4263 = vpop.f32.mrf.mxu0
      %4264 = vmatprep.mubr.f32.mxu0 0.0
      %4265 = vmatmul.mubr.f32.gmra.mxu0 %v4090
      %v4266 = vpop.f32.mrf.mxu0
      %v4267 = vadd.f32 0.0, %v4266
      %v4268 = vpop.f32.mrf.mxu0
      %4269 = vmatprep.mubr.f32.mxu0 0.0
      %4270 = vmatmul.mubr.f32.gmra.mxu0 %v4093
      %v4271 = vpop.f32.mrf.mxu0
      %v4272 = vadd.f32 0.0, %v4271
      %v4273 = vpop.f32.mrf.mxu0
      %4274 = vdwg.mxu0
      %v4275 = vrcp.pop %v4162
      %v4276 = vmul.f32 1.0, %v4275
      %v4277 = vrcp.pop %v4167
      %v4278 = vmul.f32 1.0, %v4277
      %v4279 = vrcp.pop %v4172
      %v4280 = vmul.f32 1.0, %v4279
      %v4281 = vrcp.pop %v4177
      %v4282 = vmul.f32 1.0, %v4281
      %v4283 = vrcp.pop %v4182
      %v4284 = vmul.f32 1.0, %v4283
      %4286 = vset.pattern.permute.xlu0 0
      %4287 = vperm.xlu0 %4286, %v4276
      %v4288 = vpop.permute.xlu0 %4287
      %4291 = vset.pattern.permute.xlu0 0
      %4292 = vperm.xlu0 %4291, %v4278
      %v4293 = vpop.permute.xlu0 %4292
      %4296 = vset.pattern.permute.xlu0 0
      %4297 = vperm.xlu0 %4296, %v4280
      %v4298 = vpop.permute.xlu0 %4297
      %4301 = vset.pattern.permute.xlu0 0
      %4302 = vperm.xlu0 %4301, %v4282
      %v4303 = vpop.permute.xlu0 %4302
      %4306 = vset.pattern.permute.xlu0 0
      %4307 = vperm.xlu0 %4306, %v4284
      %v4308 = vpop.permute.xlu0 %4307
      %v4310 = vmul.f32 %v4252, %v4288
      %v4311 = vmul.f32 %v4257, %v4293
      %v4312 = vmul.f32 %v4262, %v4298
      %v4313 = vmul.f32 %v4267, %v4303
      %v4314 = vmul.f32 %v4272, %v4308
      %v4315 = vadd.f32 %v4310, %v3755
      %v4316 = vadd.f32 %v4311, %v3758
      %v4317 = vadd.f32 %v4312, %v3763
      %v4318 = vadd.f32 %v4313, %v3766
      %v4319 = vadd.f32 %v4314, %v3771
      %v4320 = vld [vmem:[%s1 + $0x158] sm:$0xf]
      %v4321 = vld [vmem:[%s1 + $0x15c] sm:$0xf]
      %v4322 = vpack.c.bf16 %v4316, %v4315
      %v4323 = vpack.c.bf16 %v4318, %v4317
      %v4324 = vpack.c.bf16 %v4319, %v4319
      %v4327 = vunpack.c.l.b16 %v4320
      %v4328 = vunpack.c.l.b16 %v4321
      %v4329 = vpack.c.b16 %v4328, %v4327
      %v4332 = vsel %vm889, %v4322, 0
      %v4335 = vsel %vm889, %v4323, 0
      %v4338 = vsel %vm889, %v4324, 0
      %4340 = vmatprep.subr.bf16.mxu0 0
      %4341 = vmatpush1.bf16.msra.mxu0 0
      %4342 = vmatprep.subr.bf16.mxu0 0
      %4343 = vmatpush1.bf16.msra.mxu0 0
      %4344 = vmatprep.subr.bf16.mxu0 0
      %4345 = vmatpush1.bf16.msra.mxu0 0
      %4346 = vmatprep.subr.bf16.mxu0 0
      %4347 = vmatpush1.bf16.msra.mxu0 0
      %4348 = vmatprep.subr.bf16.mxu0 0
      %4349 = vmatpush1.bf16.msra.mxu0 0
      %4350 = vmatprep.subr.bf16.mxu0 0
      %4351 = vmatpush1.bf16.msra.mxu0 0
      %4352 = vmatprep.subr.bf16.mxu0 0
      %4353 = vmatpush1.bf16.msra.mxu0 0
      %4354 = vmatprep.subr.bf16.mxu0 0
      %4355 = vmatpush1.bf16.msra.mxu0 %v4329
      %4356 = vmatprep.subr.bf16.mxu0 0
      %4357 = vmatpush2.bf16.msra.mxu0 0
      %4358 = vmatprep.subr.bf16.mxu0 0
      %4359 = vmatpush2.bf16.msra.mxu0 0
      %4360 = vmatprep.subr.bf16.mxu0 0
      %4361 = vmatpush2.bf16.msra.mxu0 0
      %4362 = vmatprep.subr.bf16.mxu0 0
      %4363 = vmatpush2.bf16.msra.mxu0 0
      %4364 = vmatprep.subr.bf16.mxu0 0
      %4365 = vmatpush2.bf16.msra.mxu0 0
      %4366 = vmatprep.subr.bf16.mxu0 0
      %4367 = vmatpush2.bf16.msra.mxu0 0
      %4368 = vmatprep.subr.bf16.mxu0 0
      %4369 = vmatpush2.bf16.msra.mxu0 0
      %4370 = vmatprep.subr.bf16.mxu0 0
      %4371 = vmatpush2.bf16.msra.mxu0 0
      %4372 = vmatprep.mubr.bf16.mxu0 0
      %4373 = vmatmul.mubr.bf16.gmra.mxu0 %v4332
      %v4374 = vpop.f32.mrf.mxu0
      %v4375 = vadd.f32 0.0, %v4374
      %v4376 = vpop.f32.mrf.mxu0
      %v4377 = vpop.f32.mrf.mxu0
      %v4378 = vadd.f32 0.0, %v4377
      %v4379 = vpop.f32.mrf.mxu0
      %4380 = vmatprep.mubr.bf16.mxu0 0
      %4381 = vmatmul.mubr.bf16.gmra.mxu0 %v4335
      %v4382 = vpop.f32.mrf.mxu0
      %v4383 = vadd.f32 0.0, %v4382
      %v4384 = vpop.f32.mrf.mxu0
      %v4385 = vpop.f32.mrf.mxu0
      %v4386 = vadd.f32 0.0, %v4385
      %v4387 = vpop.f32.mrf.mxu0
      %4388 = vmatprep.mubr.bf16.mxu0 0
      %4389 = vmatmul.mubr.bf16.gmra.mxu0 %v4338
      %v4390 = vpop.f32.mrf.mxu0
      %v4391 = vadd.f32 0.0, %v4390
      %v4392 = vpop.f32.mrf.mxu0
      %v4393 = vpop.f32.mrf.mxu0
      %v4394 = vpop.f32.mrf.mxu0
      %4395 = vdwg.mxu0
      %v4398 = vunpack.c.l.b16 %v3694
      %v4399 = vunpack.c.l.b16 %v3695
      %v4400 = vpack.c.b16 %v4399, %v4398
      %v4403 = vsel %vm889, %v3696, 0
      %v4406 = vsel %vm889, %v3697, 0
      %v4409 = vsel %vm889, %v3698, 0
      %4411 = vmatprep.subr.bf16.mxu0 0
      %4412 = vmatpush1.bf16.msra.mxu0 0
      %4413 = vmatprep.subr.bf16.mxu0 0
      %4414 = vmatpush1.bf16.msra.mxu0 0
      %4415 = vmatprep.subr.bf16.mxu0 0
      %4416 = vmatpush1.bf16.msra.mxu0 0
      %4417 = vmatprep.subr.bf16.mxu0 0
      %4418 = vmatpush1.bf16.msra.mxu0 0
      %4419 = vmatprep.subr.bf16.mxu0 0
      %4420 = vmatpush1.bf16.msra.mxu0 0
      %4421 = vmatprep.subr.bf16.mxu0 0
      %4422 = vmatpush1.bf16.msra.mxu0 0
      %4423 = vmatprep.subr.bf16.mxu0 0
      %4424 = vmatpush1.bf16.msra.mxu0 0
      %4425 = vmatprep.subr.bf16.mxu0 0
      %4426 = vmatpush1.bf16.msra.mxu0 %v4400
      %4427 = vmatprep.subr.bf16.mxu0 0
      %4428 = vmatpush2.bf16.msra.mxu0 0
      %4429 = vmatprep.subr.bf16.mxu0 0
      %4430 = vmatpush2.bf16.msra.mxu0 0
      %4431 = vmatprep.subr.bf16.mxu0 0
      %4432 = vmatpush2.bf16.msra.mxu0 0
      %4433 = vmatprep.subr.bf16.mxu0 0
      %4434 = vmatpush2.bf16.msra.mxu0 0
      %4435 = vmatprep.subr.bf16.mxu0 0
      %4436 = vmatpush2.bf16.msra.mxu0 0
      %4437 = vmatprep.subr.bf16.mxu0 0
      %4438 = vmatpush2.bf16.msra.mxu0 0
      %4439 = vmatprep.subr.bf16.mxu0 0
      %4440 = vmatpush2.bf16.msra.mxu0 0
      %4441 = vmatprep.subr.bf16.mxu0 0
      %4442 = vmatpush2.bf16.msra.mxu0 0
      %4443 = vmatprep.mubr.bf16.mxu0 0
      %4444 = vmatmul.mubr.bf16.gmra.mxu0 %v4403
      %v4445 = vpop.f32.mrf.mxu0
      %v4446 = vadd.f32 %v4375, %v4445
      %v4447 = vpop.f32.mrf.mxu0
      %v4448 = vpop.f32.mrf.mxu0
      %v4449 = vadd.f32 %v4378, %v4448
      %v4450 = vpop.f32.mrf.mxu0
      %4451 = vmatprep.mubr.bf16.mxu0 0
      %4452 = vmatmul.mubr.bf16.gmra.mxu0 %v4406
      %v4453 = vpop.f32.mrf.mxu0
      %v4454 = vadd.f32 %v4383, %v4453
      %v4455 = vpop.f32.mrf.mxu0
      %v4456 = vpop.f32.mrf.mxu0
      %v4457 = vadd.f32 %v4386, %v4456
      %v4458 = vpop.f32.mrf.mxu0
      %4459 = vmatprep.mubr.bf16.mxu0 0
      %4460 = vmatmul.mubr.bf16.gmra.mxu0 %v4409
      %v4461 = vpop.f32.mrf.mxu0
      %v4462 = vadd.f32 %v4391, %v4461
      %v4463 = vpop.f32.mrf.mxu0
      %v4464 = vpop.f32.mrf.mxu0
      %v4465 = vpop.f32.mrf.mxu0
      %4466 = vdwg.mxu0
      %v4467 = vadd.f32 %v2741, %v4446
      %v4468 = vadd.f32 %v2742, %v4449
      %v4469 = vadd.f32 %v2743, %v4454
      %v4470 = vadd.f32 %v2744, %v4457
      %v4471 = vadd.f32 %v2745, %v4462
      %v4472 = vld [vmem:[%s2 + $0x15] sm:$0x1]
      %v4473 = vlaneseq
      %v4474 = vshrl.u32 %v4473, 7
      %v4475 = vsub.s32 0, %v4474
      %v4476 = vrot.slane %v4472, %v4475
      %v4477 = vadd.f32 %v4467, %v4476
      %v4478 = vadd.f32 %v4468, %v4476
      %v4479 = vadd.f32 %v4469, %v4476
      %v4480 = vadd.f32 %v4470, %v4476
      %v4481 = vadd.f32 %v4471, %v4476
      %v4483 = vsel %vm330, %v4477, 0
      %v4486 = vsel %vm330, %v4478, 0
      %v4489 = vsel %vm330, %v4479, 0
      %v4492 = vsel %vm330, %v4480, 0
      %v4495 = vsel %vm330, %v4481, 0
      %4497 = vmatprep.subr.mxu0 0.0
      %4498 = vmatpush1.msra.mxu0 0.0
      %4499 = vmatprep.subr.mxu0 0.0
      %4500 = vmatpush1.msra.mxu0 0.0
      %4501 = vmatprep.subr.mxu0 0.0
      %4502 = vmatpush1.msra.mxu0 0.0
      %4503 = vmatprep.subr.mxu0 0.0
      %4504 = vmatpush1.msra.mxu0 0.0
      %4505 = vmatprep.subr.mxu0 0.0
      %4506 = vmatpush1.msra.mxu0 0.0
      %4507 = vmatprep.subr.mxu0 0.0
      %4508 = vmatpush1.msra.mxu0 0.0
      %4509 = vmatprep.subr.mxu0 0.0
      %4510 = vmatpush1.msra.mxu0 0.0
      %4511 = vmatprep.subr.mxu0 0.0
      %4512 = vmatpush1.msra.mxu0 0.0
      %4513 = vmatprep.subr.mxu0 0.0
      %4514 = vmatpush1.msra.mxu0 0.0
      %4515 = vmatprep.subr.mxu0 0.0
      %4516 = vmatpush1.msra.mxu0 0.0
      %4517 = vmatprep.subr.mxu0 0.0
      %4518 = vmatpush1.msra.mxu0 0.0
      %4519 = vmatprep.subr.mxu0 0.0
      %4520 = vmatpush1.msra.mxu0 0.0
      %4521 = vmatprep.subr.mxu0 0.0
      %4522 = vmatpush1.msra.mxu0 1.0
      %4523 = vmatprep.subr.mxu0 0.0
      %4524 = vmatpush1.msra.mxu0 1.0
      %4525 = vmatprep.subr.mxu0 0.0
      %4526 = vmatpush1.msra.mxu0 1.0
      %4527 = vmatprep.subr.mxu0 0.0
      %4528 = vmatpush1.msra.mxu0 1.0
      %4529 = vmatprep.subr.mxu0 0.0
      %4530 = vmatpush2.msra.mxu0 0.0
      %4531 = vmatprep.subr.mxu0 0.0
      %4532 = vmatpush2.msra.mxu0 0.0
      %4533 = vmatprep.subr.mxu0 0.0
      %4534 = vmatpush2.msra.mxu0 0.0
      %4535 = vmatprep.subr.mxu0 0.0
      %4536 = vmatpush2.msra.mxu0 0.0
      %4537 = vmatprep.subr.mxu0 0.0
      %4538 = vmatpush2.msra.mxu0 0.0
      %4539 = vmatprep.subr.mxu0 0.0
      %4540 = vmatpush2.msra.mxu0 0.0
      %4541 = vmatprep.subr.mxu0 0.0
      %4542 = vmatpush2.msra.mxu0 0.0
      %4543 = vmatprep.subr.mxu0 0.0
      %4544 = vmatpush2.msra.mxu0 0.0
      %4545 = vmatprep.subr.mxu0 0.0
      %4546 = vmatpush2.msra.mxu0 0.0
      %4547 = vmatprep.subr.mxu0 0.0
      %4548 = vmatpush2.msra.mxu0 0.0
      %4549 = vmatprep.subr.mxu0 0.0
      %4550 = vmatpush2.msra.mxu0 0.0
      %4551 = vmatprep.subr.mxu0 0.0
      %4552 = vmatpush2.msra.mxu0 0.0
      %4553 = vmatprep.subr.mxu0 0.0
      %4554 = vmatpush2.msra.mxu0 0.0
      %4555 = vmatprep.subr.mxu0 0.0
      %4556 = vmatpush2.msra.mxu0 0.0
      %4557 = vmatprep.subr.mxu0 0.0
      %4558 = vmatpush2.msra.mxu0 0.0
      %4559 = vmatprep.subr.mxu0 0.0
      %4560 = vmatpush2.msra.mxu0 0.0
      %4561 = vmatprep.mubr.f32.mxu0 0.0
      %4562 = vmatmul.mubr.f32.gmra.mxu0 %v4483
      %v4563 = vpop.f32.mrf.mxu0
      %v4564 = vadd.f32 0.0, %v4563
      %v4565 = vpop.f32.mrf.mxu0
      %4566 = vmatprep.mubr.f32.mxu0 0.0
      %4567 = vmatmul.mubr.f32.gmra.mxu0 %v4486
      %v4568 = vpop.f32.mrf.mxu0
      %v4569 = vadd.f32 0.0, %v4568
      %v4570 = vpop.f32.mrf.mxu0
      %4571 = vmatprep.mubr.f32.mxu0 0.0
      %4572 = vmatmul.mubr.f32.gmra.mxu0 %v4489
      %v4573 = vpop.f32.mrf.mxu0
      %v4574 = vadd.f32 0.0, %v4573
      %v4575 = vpop.f32.mrf.mxu0
      %4576 = vmatprep.mubr.f32.mxu0 0.0
      %4577 = vmatmul.mubr.f32.gmra.mxu0 %v4492
      %v4578 = vpop.f32.mrf.mxu0
      %v4579 = vadd.f32 0.0, %v4578
      %v4580 = vpop.f32.mrf.mxu0
      %4581 = vmatprep.mubr.f32.mxu0 0.0
      %4582 = vmatmul.mubr.f32.gmra.mxu0 %v4495
      %v4583 = vpop.f32.mrf.mxu0
      %v4584 = vadd.f32 0.0, %v4583
      %v4585 = vpop.f32.mrf.mxu0
      %4586 = vdwg.mxu0
      %v4587 = vmul.f32 %v4564, 0.03125
      %v4588 = vmul.f32 %v4569, 0.03125
      %v4589 = vmul.f32 %v4574, 0.03125
      %v4590 = vmul.f32 %v4579, 0.03125
      %v4591 = vmul.f32 %v4584, 0.03125
      %4593 = vset.pattern.permute.xlu0 0
      %4594 = vperm.xlu0 %4593, %v4587
      %v4595 = vpop.permute.xlu0 %4594
      %4598 = vset.pattern.permute.xlu0 0
      %4599 = vperm.xlu0 %4598, %v4588
      %v4600 = vpop.permute.xlu0 %4599
      %4603 = vset.pattern.permute.xlu0 0
      %4604 = vperm.xlu0 %4603, %v4589
      %v4605 = vpop.permute.xlu0 %4604
      %4608 = vset.pattern.permute.xlu0 0
      %4609 = vperm.xlu0 %4608, %v4590
      %v4610 = vpop.permute.xlu0 %4609
      %4613 = vset.pattern.permute.xlu0 0
      %4614 = vperm.xlu0 %4613, %v4591
      %v4615 = vpop.permute.xlu0 %4614
      %v4617 = vsub.f32 %v4477, %v4595
      %v4618 = vsub.f32 %v4478, %v4600
      %v4619 = vsub.f32 %v4479, %v4605
      %v4620 = vsub.f32 %v4480, %v4610
      %v4621 = vsub.f32 %v4481, %v4615
      %v4622 = vmul.f32 %v4617, %v4617
      %v4623 = vmul.f32 %v4618, %v4618
      %v4624 = vmul.f32 %v4619, %v4619
      %v4625 = vmul.f32 %v4620, %v4620
      %v4626 = vmul.f32 %v4621, %v4621
      %v4628 = vsel %vm330, %v4622, 0
      %v4631 = vsel %vm330, %v4623, 0
      %v4634 = vsel %vm330, %v4624, 0
      %v4637 = vsel %vm330, %v4625, 0
      %v4640 = vsel %vm330, %v4626, 0
      %4642 = vmatprep.subr.mxu0 0.0
      %4643 = vmatpush1.msra.mxu0 0.0
      %4644 = vmatprep.subr.mxu0 0.0
      %4645 = vmatpush1.msra.mxu0 0.0
      %4646 = vmatprep.subr.mxu0 0.0
      %4647 = vmatpush1.msra.mxu0 0.0
      %4648 = vmatprep.subr.mxu0 0.0
      %4649 = vmatpush1.msra.mxu0 0.0
      %4650 = vmatprep.subr.mxu0 0.0
      %4651 = vmatpush1.msra.mxu0 0.0
      %4652 = vmatprep.subr.mxu0 0.0
      %4653 = vmatpush1.msra.mxu0 0.0
      %4654 = vmatprep.subr.mxu0 0.0
      %4655 = vmatpush1.msra.mxu0 0.0
      %4656 = vmatprep.subr.mxu0 0.0
      %4657 = vmatpush1.msra.mxu0 0.0
      %4658 = vmatprep.subr.mxu0 0.0
      %4659 = vmatpush1.msra.mxu0 0.0
      %4660 = vmatprep.subr.mxu0 0.0
      %4661 = vmatpush1.msra.mxu0 0.0
      %4662 = vmatprep.subr.mxu0 0.0
      %4663 = vmatpush1.msra.mxu0 0.0
      %4664 = vmatprep.subr.mxu0 0.0
      %4665 = vmatpush1.msra.mxu0 0.0
      %4666 = vmatprep.subr.mxu0 0.0
      %4667 = vmatpush1.msra.mxu0 1.0
      %4668 = vmatprep.subr.mxu0 0.0
      %4669 = vmatpush1.msra.mxu0 1.0
      %4670 = vmatprep.subr.mxu0 0.0
      %4671 = vmatpush1.msra.mxu0 1.0
      %4672 = vmatprep.subr.mxu0 0.0
      %4673 = vmatpush1.msra.mxu0 1.0
      %4674 = vmatprep.subr.mxu0 0.0
      %4675 = vmatpush2.msra.mxu0 0.0
      %4676 = vmatprep.subr.mxu0 0.0
      %4677 = vmatpush2.msra.mxu0 0.0
      %4678 = vmatprep.subr.mxu0 0.0
      %4679 = vmatpush2.msra.mxu0 0.0
      %4680 = vmatprep.subr.mxu0 0.0
      %4681 = vmatpush2.msra.mxu0 0.0
      %4682 = vmatprep.subr.mxu0 0.0
      %4683 = vmatpush2.msra.mxu0 0.0
      %4684 = vmatprep.subr.mxu0 0.0
      %4685 = vmatpush2.msra.mxu0 0.0
      %4686 = vmatprep.subr.mxu0 0.0
      %4687 = vmatpush2.msra.mxu0 0.0
      %4688 = vmatprep.subr.mxu0 0.0
      %4689 = vmatpush2.msra.mxu0 0.0
      %4690 = vmatprep.subr.mxu0 0.0
      %4691 = vmatpush2.msra.mxu0 0.0
      %4692 = vmatprep.subr.mxu0 0.0
      %4693 = vmatpush2.msra.mxu0 0.0
      %4694 = vmatprep.subr.mxu0 0.0
      %4695 = vmatpush2.msra.mxu0 0.0
      %4696 = vmatprep.subr.mxu0 0.0
      %4697 = vmatpush2.msra.mxu0 0.0
      %4698 = vmatprep.subr.mxu0 0.0
      %4699 = vmatpush2.msra.mxu0 0.0
      %4700 = vmatprep.subr.mxu0 0.0
      %4701 = vmatpush2.msra.mxu0 0.0
      %4702 = vmatprep.subr.mxu0 0.0
      %4703 = vmatpush2.msra.mxu0 0.0
      %4704 = vmatprep.subr.mxu0 0.0
      %4705 = vmatpush2.msra.mxu0 0.0
      %4706 = vmatprep.mubr.f32.mxu0 0.0
      %4707 = vmatmul.mubr.f32.gmra.mxu0 %v4628
      %v4708 = vpop.f32.mrf.mxu0
      %v4709 = vadd.f32 0.0, %v4708
      %v4710 = vpop.f32.mrf.mxu0
      %4711 = vmatprep.mubr.f32.mxu0 0.0
      %4712 = vmatmul.mubr.f32.gmra.mxu0 %v4631
      %v4713 = vpop.f32.mrf.mxu0
      %v4714 = vadd.f32 0.0, %v4713
      %v4715 = vpop.f32.mrf.mxu0
      %4716 = vmatprep.mubr.f32.mxu0 0.0
      %4717 = vmatmul.mubr.f32.gmra.mxu0 %v4634
      %v4718 = vpop.f32.mrf.mxu0
      %v4719 = vadd.f32 0.0, %v4718
      %v4720 = vpop.f32.mrf.mxu0
      %4721 = vmatprep.mubr.f32.mxu0 0.0
      %4722 = vmatmul.mubr.f32.gmra.mxu0 %v4637
      %v4723 = vpop.f32.mrf.mxu0
      %v4724 = vadd.f32 0.0, %v4723
      %v4725 = vpop.f32.mrf.mxu0
      %4726 = vmatprep.mubr.f32.mxu0 0.0
      %4727 = vmatmul.mubr.f32.gmra.mxu0 %v4640
      %v4728 = vpop.f32.mrf.mxu0
      %v4729 = vadd.f32 0.0, %v4728
      %v4730 = vpop.f32.mrf.mxu0
      %4731 = vdwg.mxu0
      %v4732 = vmul.f32 %v4709, 0.03125
      %v4733 = vmul.f32 %v4714, 0.03125
      %v4734 = vmul.f32 %v4719, 0.03125
      %v4735 = vmul.f32 %v4724, 0.03125
      %v4736 = vmul.f32 %v4729, 0.03125
      %v4737 = vadd.f32 %v4732, 1e-06
      %v4738 = vadd.f32 %v4733, 1e-06
      %v4739 = vadd.f32 %v4734, 1e-06
      %v4740 = vadd.f32 %v4735, 1e-06
      %v4741 = vadd.f32 %v4736, 1e-06
      %v4742 = vrsqrt.pop %v4737
      %v4743 = vrsqrt.pop %v4738
      %v4744 = vrsqrt.pop %v4739
      %v4745 = vrsqrt.pop %v4740
      %v4746 = vrsqrt.pop %v4741
      %4748 = vset.pattern.permute.xlu0 0
      %4749 = vperm.xlu0 %4748, %v4742
      %v4750 = vpop.permute.xlu0 %4749
      %4753 = vset.pattern.permute.xlu0 0
      %4754 = vperm.xlu0 %4753, %v4743
      %v4755 = vpop.permute.xlu0 %4754
      %4758 = vset.pattern.permute.xlu0 0
      %4759 = vperm.xlu0 %4758, %v4744
      %v4760 = vpop.permute.xlu0 %4759
      %4763 = vset.pattern.permute.xlu0 0
      %4764 = vperm.xlu0 %4763, %v4745
      %v4765 = vpop.permute.xlu0 %4764
      %4768 = vset.pattern.permute.xlu0 0
      %4769 = vperm.xlu0 %4768, %v4746
      %v4770 = vpop.permute.xlu0 %4769
      %v4772 = vmul.f32 %v4617, %v4750
      %v4773 = vmul.f32 %v4618, %v4755
      %v4774 = vmul.f32 %v4619, %v4760
      %v4775 = vmul.f32 %v4620, %v4765
      %v4776 = vmul.f32 %v4621, %v4770
      %v4777 = vld [vmem:[%s2 + $0x16] sm:$0x1]
      %v4778 = vlaneseq
      %v4779 = vshrl.u32 %v4778, 7
      %v4780 = vsub.s32 0, %v4779
      %v4781 = vrot.slane %v4777, %v4780
      %v4782 = vmul.f32 %v4772, %v4781
      %v4783 = vmul.f32 %v4773, %v4781
      %v4784 = vmul.f32 %v4774, %v4781
      %v4785 = vmul.f32 %v4775, %v4781
      %v4786 = vmul.f32 %v4776, %v4781
      %v4787 = vld [vmem:[%s2 + $0x17] sm:$0x1]
      %v4788 = vlaneseq
      %v4789 = vshrl.u32 %v4788, 7
      %v4790 = vsub.s32 0, %v4789
      %v4791 = vrot.slane %v4787, %v4790
      %v4792 = vadd.f32 %v4782, %v4791
      %v4793 = vadd.f32 %v4783, %v4791
      %v4794 = vadd.f32 %v4784, %v4791
      %v4795 = vadd.f32 %v4785, %v4791
      %v4796 = vadd.f32 %v4786, %v4791
      %v4797 = vld [vmem:[%s1 + $0x160] sm:$0xf]
      %v4798 = vld [vmem:[%s1 + $0x164] sm:$0xf]
      %v4799 = vld [vmem:[%s1 + $0x168] sm:$0xf]
      %v4800 = vld [vmem:[%s1 + $0x16c] sm:$0xf]
      %v4801 = vpack.c.bf16 %v4793, %v4792
      %v4802 = vpack.c.bf16 %v4795, %v4794
      %v4803 = vpack.c.bf16 %v4796, %v4796
      %v4804 = vld [vmem:[%s2 + $0x18] sm:$0x1]
      %v4805 = vlaneseq
      %v4806 = vshrl.u32 %v4805, 7
      %v4807 = vsub.s32 0, %v4806
      %v4808 = vrot.slane %v4804, %v4807
      %v4813 = vunpack.c.l.b16 %v4797
      %v4814 = vunpack.c.l.b16 %v4798
      %v4815 = vunpack.c.l.b16 %v4799
      %v4816 = vunpack.c.l.b16 %v4800
      %v4817 = vpack.c.b16 %v4814, %v4813
      %v4818 = vpack.c.b16 %v4816, %v4815
      %v4822 = vsel %vm330, %v4801, 0
      %v4825 = vsel %vm330, %v4802, 0
      %v4828 = vsel %vm330, %v4803, 0
      %4830 = vmatprep.subr.bf16.mxu0 0
      %4831 = vmatpush1.bf16.msra.mxu0 0
      %4832 = vmatprep.subr.bf16.mxu0 0
      %4833 = vmatpush1.bf16.msra.mxu0 0
      %4834 = vmatprep.subr.bf16.mxu0 0
      %4835 = vmatpush1.bf16.msra.mxu0 0
      %4836 = vmatprep.subr.bf16.mxu0 0
      %4837 = vmatpush1.bf16.msra.mxu0 0
      %4838 = vmatprep.subr.bf16.mxu0 0
      %4839 = vmatpush1.bf16.msra.mxu0 0
      %4840 = vmatprep.subr.bf16.mxu0 0
      %4841 = vmatpush1.bf16.msra.mxu0 0
      %4842 = vmatprep.subr.bf16.mxu0 0
      %4843 = vmatpush1.bf16.msra.mxu0 %v4818
      %4844 = vmatprep.subr.bf16.mxu0 0
      %4845 = vmatpush1.bf16.msra.mxu0 %v4817
      %4846 = vmatprep.subr.bf16.mxu0 0
      %4847 = vmatpush2.bf16.msra.mxu0 0
      %4848 = vmatprep.subr.bf16.mxu0 0
      %4849 = vmatpush2.bf16.msra.mxu0 0
      %4850 = vmatprep.subr.bf16.mxu0 0
      %4851 = vmatpush2.bf16.msra.mxu0 0
      %4852 = vmatprep.subr.bf16.mxu0 0
      %4853 = vmatpush2.bf16.msra.mxu0 0
      %4854 = vmatprep.subr.bf16.mxu0 0
      %4855 = vmatpush2.bf16.msra.mxu0 0
      %4856 = vmatprep.subr.bf16.mxu0 0
      %4857 = vmatpush2.bf16.msra.mxu0 0
      %4858 = vmatprep.subr.bf16.mxu0 0
      %4859 = vmatpush2.bf16.msra.mxu0 0
      %4860 = vmatprep.subr.bf16.mxu0 0
      %4861 = vmatpush2.bf16.msra.mxu0 0
      %4862 = vmatprep.mubr.bf16.mxu0 0
      %4863 = vmatmul.mubr.bf16.gmra.mxu0 %v4822
      %v4864 = vpop.f32.mrf.mxu0
      %v4865 = vadd.f32 %v4808, %v4864
      %v4866 = vpop.f32.mrf.mxu0
      %v4867 = vpop.f32.mrf.mxu0
      %v4868 = vadd.f32 %v4808, %v4867
      %v4869 = vpop.f32.mrf.mxu0
      %4870 = vmatprep.mubr.bf16.mxu0 0
      %4871 = vmatmul.mubr.bf16.gmra.mxu0 %v4825
      %v4872 = vpop.f32.mrf.mxu0
      %v4873 = vadd.f32 %v4808, %v4872
      %v4874 = vpop.f32.mrf.mxu0
      %v4875 = vpop.f32.mrf.mxu0
      %v4876 = vadd.f32 %v4808, %v4875
      %v4877 = vpop.f32.mrf.mxu0
      %4878 = vmatprep.mubr.bf16.mxu0 0
      %4879 = vmatmul.mubr.bf16.gmra.mxu0 %v4828
      %v4880 = vpop.f32.mrf.mxu0
      %v4881 = vadd.f32 %v4808, %v4880
      %v4882 = vpop.f32.mrf.mxu0
      %v4883 = vpop.f32.mrf.mxu0
      %v4884 = vpop.f32.mrf.mxu0
      %4885 = vdwg.mxu0
      %v4886 = vmul.f32 %v4865, 0.70710677
      %v4887 = vmul.f32 %v4868, 0.70710677
      %v4888 = vmul.f32 %v4873, 0.70710677
      %v4889 = vmul.f32 %v4876, 0.70710677
      %v4890 = vmul.f32 %v4881, 0.70710677
      %vm4891 = vcmp.ge.f32.partialorder %v4886, 0.0
      %vm4892 = vcmp.ge.f32.partialorder %v4887, 0.0
      %vm4893 = vcmp.ge.f32.partialorder %v4888, 0.0
      %vm4894 = vcmp.ge.f32.partialorder %v4889, 0.0
      %vm4895 = vcmp.ge.f32.partialorder %v4890, 0.0
      %v4896 = vsel %vm4891, 1.0, -1.0
      %v4897 = vsel %vm4892, 1.0, -1.0
      %v4898 = vsel %vm4893, 1.0, -1.0
      %v4899 = vsel %vm4894, 1.0, -1.0
      %v4900 = vsel %vm4895, 1.0, -1.0
      %v4901 = vand.u32 2147483647, %v4886
      %v4902 = vand.u32 2147483647, %v4887
      %v4903 = vand.u32 2147483647, %v4888
      %v4904 = vand.u32 2147483647, %v4889
      %v4905 = vand.u32 2147483647, %v4890
      %v4906 = vmul.f32 %v4901, 0.3275911
      %v4907 = vmul.f32 %v4902, 0.3275911
      %v4908 = vmul.f32 %v4903, 0.3275911
      %v4909 = vmul.f32 %v4904, 0.3275911
      %v4910 = vmul.f32 %v4905, 0.3275911
      %v4911 = vadd.f32 %v4906, 1.0
      %v4912 = vadd.f32 %v4907, 1.0
      %v4913 = vadd.f32 %v4908, 1.0
      %v4914 = vadd.f32 %v4909, 1.0
      %v4915 = vadd.f32 %v4910, 1.0
      %v4916 = vrcp.pop %v4911
      %v4917 = vmul.f32 1.0, %v4916
      %v4918 = vrcp.pop %v4912
      %v4919 = vmul.f32 1.0, %v4918
      %v4920 = vrcp.pop %v4913
      %v4921 = vmul.f32 1.0, %v4920
      %v4922 = vrcp.pop %v4914
      %v4923 = vmul.f32 1.0, %v4922
      %v4924 = vrcp.pop %v4915
      %v4925 = vmul.f32 1.0, %v4924
      %v4926 = vmul.f32 %v4917, 1.0614054
      %v4927 = vmul.f32 %v4919, 1.0614054
      %v4928 = vmul.f32 %v4921, 1.0614054
      %v4929 = vmul.f32 %v4923, 1.0614054
      %v4930 = vmul.f32 %v4925, 1.0614054
      %v4931 = vsub.f32 %v4926, 1.4531521
      %v4932 = vsub.f32 %v4927, 1.4531521
      %v4933 = vsub.f32 %v4928, 1.4531521
      %v4934 = vsub.f32 %v4929, 1.4531521
      %v4935 = vsub.f32 %v4930, 1.4531521
      %v4936 = vmul.f32 %v4931, %v4917
      %v4937 = vmul.f32 %v4932, %v4919
      %v4938 = vmul.f32 %v4933, %v4921
      %v4939 = vmul.f32 %v4934, %v4923
      %v4940 = vmul.f32 %v4935, %v4925
      %v4941 = vadd.f32 %v4936, 1.4214138
      %v4942 = vadd.f32 %v4937, 1.4214138
      %v4943 = vadd.f32 %v4938, 1.4214138
      %v4944 = vadd.f32 %v4939, 1.4214138
      %v4945 = vadd.f32 %v4940, 1.4214138
      %v4946 = vmul.f32 %v4941, %v4917
      %v4947 = vmul.f32 %v4942, %v4919
      %v4948 = vmul.f32 %v4943, %v4921
      %v4949 = vmul.f32 %v4944, %v4923
      %v4950 = vmul.f32 %v4945, %v4925
      %v4951 = vsub.f32 %v4946, 0.28449672
      %v4952 = vsub.f32 %v4947, 0.28449672
      %v4953 = vsub.f32 %v4948, 0.28449672
      %v4954 = vsub.f32 %v4949, 0.28449672
      %v4955 = vsub.f32 %v4950, 0.28449672
      %v4956 = vmul.f32 %v4951, %v4917
      %v4957 = vmul.f32 %v4952, %v4919
      %v4958 = vmul.f32 %v4953, %v4921
      %v4959 = vmul.f32 %v4954, %v4923
      %v4960 = vmul.f32 %v4955, %v4925
      %v4961 = vadd.f32 %v4956, 0.2548296
      %v4962 = vadd.f32 %v4957, 0.2548296
      %v4963 = vadd.f32 %v4958, 0.2548296
      %v4964 = vadd.f32 %v4959, 0.2548296
      %v4965 = vadd.f32 %v4960, 0.2548296
      %v4966 = vmul.f32 %v4961, %v4917
      %v4967 = vmul.f32 %v4962, %v4919
      %v4968 = vmul.f32 %v4963, %v4921
      %v4969 = vmul.f32 %v4964, %v4923
      %v4970 = vmul.f32 %v4965, %v4925
      %v4971 = vsub.f32 0.0, %v4901
      %v4972 = vsub.f32 0.0, %v4902
      %v4973 = vsub.f32 0.0, %v4903
      %v4974 = vsub.f32 0.0, %v4904
      %v4975 = vsub.f32 0.0, %v4905
      %v4976 = vmul.f32 %v4971, %v4901
      %v4977 = vmul.f32 %v4972, %v4902
      %v4978 = vmul.f32 %v4973, %v4903
      %v4979 = vmul.f32 %v4974, %v4904
      %v4980 = vmul.f32 %v4975, %v4905
      %v4981 = vmul.f32 %v4976, 1.442695
      %v4982 = vpow.pop %v4981
      %v4983 = vmul.f32 %v4977, 1.442695
      %v4984 = vpow.pop %v4983
      %v4985 = vmul.f32 %v4978, 1.442695
      %v4986 = vpow.pop %v4985
      %v4987 = vmul.f32 %v4979, 1.442695
      %v4988 = vpow.pop %v4987
      %v4989 = vmul.f32 %v4980, 1.442695
      %v4990 = vpow.pop %v4989
      %v4991 = vmul.f32 %v4966, %v4982
      %v4992 = vmul.f32 %v4967, %v4984
      %v4993 = vmul.f32 %v4968, %v4986
      %v4994 = vmul.f32 %v4969, %v4988
      %v4995 = vmul.f32 %v4970, %v4990
      %v4996 = vsub.f32 1.0, %v4991
      %v4997 = vsub.f32 1.0, %v4992
      %v4998 = vsub.f32 1.0, %v4993
      %v4999 = vsub.f32 1.0, %v4994
      %v5000 = vsub.f32 1.0, %v4995
      %v5001 = vmul.f32 %v4896, %v4996
      %v5002 = vmul.f32 %v4897, %v4997
      %v5003 = vmul.f32 %v4898, %v4998
      %v5004 = vmul.f32 %v4899, %v4999
      %v5005 = vmul.f32 %v4900, %v5000
      %v5006 = vmul.f32 %v4865, 0.5
      %v5007 = vmul.f32 %v4868, 0.5
      %v5008 = vmul.f32 %v4873, 0.5
      %v5009 = vmul.f32 %v4876, 0.5
      %v5010 = vmul.f32 %v4881, 0.5
      %v5011 = vadd.f32 %v5001, 1.0
      %v5012 = vadd.f32 %v5002, 1.0
      %v5013 = vadd.f32 %v5003, 1.0
      %v5014 = vadd.f32 %v5004, 1.0
      %v5015 = vadd.f32 %v5005, 1.0
      %v5016 = vmul.f32 %v5006, %v5011
      %v5017 = vmul.f32 %v5007, %v5012
      %v5018 = vmul.f32 %v5008, %v5013
      %v5019 = vmul.f32 %v5009, %v5014
      %v5020 = vmul.f32 %v5010, %v5015
      %v5021 = vld [vmem:[%s1 + $0x170] sm:$0xf]
      %v5022 = vld [vmem:[%s1 + $0x174] sm:$0xf]
      %v5023 = vld [vmem:[%s1 + $0x178] sm:$0xf]
      %v5024 = vld [vmem:[%s1 + $0x17c] sm:$0xf]
      %v5025 = vld [vmem:[%s1 + $0x180] sm:$0xf]
      %v5026 = vld [vmem:[%s1 + $0x184] sm:$0xf]
      %v5027 = vld [vmem:[%s1 + $0x188] sm:$0xf]
      %v5028 = vld [vmem:[%s1 + $0x18c] sm:$0xf]
      %v5029 = vld [vmem:[%s1 + $0x190] sm:$0xf]
      %v5030 = vld [vmem:[%s1 + $0x194] sm:$0xf]
      %v5031 = vld [vmem:[%s1 + $0x198] sm:$0xf]
      %v5032 = vld [vmem:[%s1 + $0x19c] sm:$0xf]
      %v5033 = vld [vmem:[%s1 + $0x1a0] sm:$0xf]
      %v5034 = vld [vmem:[%s1 + $0x1a4] sm:$0xf]
      %v5035 = vld [vmem:[%s1 + $0x1a8] sm:$0xf]
      %v5036 = vld [vmem:[%s1 + $0x1ac] sm:$0xf]
      %v5037 = vpack.c.bf16 %v5017, %v5016
      %v5038 = vpack.c.bf16 %v5019, %v5018
      %v5039 = vpack.c.bf16 %v5020, %v5020
      %v5056 = vunpack.c.l.b16 %v5021
      %v5057 = vunpack.c.l.b16 %v5022
      %v5058 = vunpack.c.l.b16 %v5023
      %v5059 = vunpack.c.l.b16 %v5024
      %v5060 = vunpack.c.l.b16 %v5025
      %v5061 = vunpack.c.l.b16 %v5026
      %v5062 = vunpack.c.l.b16 %v5027
      %v5063 = vunpack.c.l.b16 %v5028
      %v5064 = vunpack.c.l.b16 %v5029
      %v5065 = vunpack.c.l.b16 %v5030
      %v5066 = vunpack.c.l.b16 %v5031
      %v5067 = vunpack.c.l.b16 %v5032
      %v5068 = vunpack.c.l.b16 %v5033
      %v5069 = vunpack.c.l.b16 %v5034
      %v5070 = vunpack.c.l.b16 %v5035
      %v5071 = vunpack.c.l.b16 %v5036
      %v5072 = vpack.c.b16 %v5057, %v5056
      %v5073 = vpack.c.b16 %v5059, %v5058
      %v5074 = vpack.c.b16 %v5061, %v5060
      %v5075 = vpack.c.b16 %v5063, %v5062
      %v5076 = vpack.c.b16 %v5065, %v5064
      %v5077 = vpack.c.b16 %v5067, %v5066
      %v5078 = vpack.c.b16 %v5069, %v5068
      %v5079 = vpack.c.b16 %v5071, %v5070
      %5088 = vmatprep.subr.bf16.mxu0 0
      %5089 = vmatpush1.bf16.msra.mxu0 %v5079
      %5090 = vmatprep.subr.bf16.mxu0 0
      %5091 = vmatpush1.bf16.msra.mxu0 %v5078
      %5092 = vmatprep.subr.bf16.mxu0 0
      %5093 = vmatpush1.bf16.msra.mxu0 %v5077
      %5094 = vmatprep.subr.bf16.mxu0 0
      %5095 = vmatpush1.bf16.msra.mxu0 %v5076
      %5096 = vmatprep.subr.bf16.mxu0 0
      %5097 = vmatpush1.bf16.msra.mxu0 %v5075
      %5098 = vmatprep.subr.bf16.mxu0 0
      %5099 = vmatpush1.bf16.msra.mxu0 %v5074
      %5100 = vmatprep.subr.bf16.mxu0 0
      %5101 = vmatpush1.bf16.msra.mxu0 %v5073
      %5102 = vmatprep.subr.bf16.mxu0 0
      %5103 = vmatpush1.bf16.msra.mxu0 %v5072
      %5104 = vmatprep.subr.bf16.mxu0 0
      %5105 = vmatpush2.bf16.msra.mxu0 0
      %5106 = vmatprep.subr.bf16.mxu0 0
      %5107 = vmatpush2.bf16.msra.mxu0 0
      %5108 = vmatprep.subr.bf16.mxu0 0
      %5109 = vmatpush2.bf16.msra.mxu0 0
      %5110 = vmatprep.subr.bf16.mxu0 0
      %5111 = vmatpush2.bf16.msra.mxu0 0
      %5112 = vmatprep.subr.bf16.mxu0 0
      %5113 = vmatpush2.bf16.msra.mxu0 0
      %5114 = vmatprep.subr.bf16.mxu0 0
      %5115 = vmatpush2.bf16.msra.mxu0 0
      %5116 = vmatprep.subr.bf16.mxu0 0
      %5117 = vmatpush2.bf16.msra.mxu0 0
      %5118 = vmatprep.subr.bf16.mxu0 0
      %5119 = vmatpush2.bf16.msra.mxu0 0
      %5120 = vmatprep.mubr.bf16.mxu0 0
      %5121 = vmatmul.mubr.bf16.gmra.mxu0 %v5037
      %v5122 = vpop.f32.mrf.mxu0
      %v5123 = vadd.f32 0.0, %v5122
      %v5124 = vpop.f32.mrf.mxu0
      %v5125 = vpop.f32.mrf.mxu0
      %v5126 = vpop.f32.mrf.mxu0
      %5127 = vmatprep.mubr.bf16.mxu0 0
      %5128 = vmatmul.mubr.bf16.gmra.mxu0 %v5038
      %v5129 = vpop.f32.mrf.mxu0
      %v5130 = vpop.f32.mrf.mxu0
      %v5131 = vpop.f32.mrf.mxu0
      %v5132 = vpop.f32.mrf.mxu0
      %5133 = vmatprep.mubr.bf16.mxu0 0
      %5134 = vmatmul.mubr.bf16.gmra.mxu0 %v5039
      %v5135 = vpop.f32.mrf.mxu0
      %v5136 = vpop.f32.mrf.mxu0
      %v5137 = vpop.f32.mrf.mxu0
      %v5138 = vpop.f32.mrf.mxu0
      %5139 = vdwg.mxu0
      %v5140 = vadd.f32 %v4477, %v5123
      %v5141 = vld [vmem:[%s2 + $0x19] sm:$0x1]
      %v5142 = vlaneseq
      %v5143 = vshrl.u32 %v5142, 7
      %v5144 = vsub.s32 0, %v5143
      %v5145 = vrot.slane %v5141, %v5144
      %v5146 = vadd.f32 %v5140, %v5145
      %v5147 = vsel %vm330, %v5146, 0.0
      %5148 = vadd.xlane.f32.xlu0 %v5147
      %v5149 = vpop.xlane.xlu0 %5148
      %v5150 = vrcp.pop 32.0
      %v5151 = vmul.f32 %v5149, %v5150
      %v5152 = vsub.f32 %v5146, %v5151
      %v5153 = vmul.f32 %v5152, %v5152
      %v5154 = vsel %vm330, %v5153, 0.0
      %5155 = vadd.xlane.f32.xlu0 %v5154
      %v5156 = vpop.xlane.xlu0 %5155
      %v5157 = vmul.f32 %v5156, %v5150
      %v5158 = vadd.f32 %v5157, 1e-06
      %v5159 = vrsqrt.pop %v5158
      %v5160 = vmul.f32 %v5152, %v5159
      %v5161 = vld [vmem:[%s2 + $0x1a] sm:$0x1]
      %v5162 = vlaneseq
      %v5163 = vshrl.u32 %v5162, 7
      %v5164 = vsub.s32 0, %v5163
      %v5165 = vrot.slane %v5161, %v5164
      %v5166 = vmul.f32 %v5160, %v5165
      %v5167 = vld [vmem:[%s2 + $0x1b] sm:$0x1]
      %v5168 = vlaneseq
      %v5169 = vshrl.u32 %v5168, 7
      %v5170 = vsub.s32 0, %v5169
      %v5171 = vrot.slane %v5167, %v5170
      %v5172 = vadd.f32 %v5166, %v5171
      %5173 = vst.msk [vmem:[%s197] sm:$0xff] %vm330, %v5172
      %p5174 = scmp.lt.s32.totalorder %s15, 1
      %s5175 = scalar_select %p5174, %s15, 1
      %s5176 = smul.addr %s5175, 8
      %s5177 = scalar_lea.vmem %s4, %s5176
      // Predicated region
      $region37: #{mvit_forward.1} parent=35 // pred_check
        %p5178 = pneg %p122
      $region38: #{mvit_forward.1} parent=35 // pred_check_branch
        %5180 = sbr.rel (%p5178) target = $region40
      $region39: #{mvit_forward.1} parent=35 // pred_region
        _
      $region40: #{mvit_forward.1} parent=35 // pred_fallthru
        _
    $region36: #{mvit_forward.1} parent=5 // pred_fallthru
      _
    %p5181 = scmp.le.s32.totalorder 2, %s10
    // Predicated region
    $region41: #{mvit_forward.1} parent=5 // pred_check
      %p5182 = pneg %p5181
    $region42: #{mvit_forward.1} parent=5 // pred_check_branch
      %5184 = sbr.rel (%p5182) target = $region44
    $region43: #{mvit_forward.1} parent=5 // pred_region
      %s5185 = ssub.s32 %s10, 2
      // Predicated region
      $region45: #{mvit_forward.1} parent=43 // pred_check
        %p5186 = pneg %p128
      $region46: #{mvit_forward.1} parent=43 // pred_check_branch
        %5188 = sbr.rel (%p5186) target = $region48
      $region47: #{mvit_forward.1} parent=43 // pred_region
        %p5189 = scmp.lt.s32.totalorder %s16, 1
        %s5190 = scalar_select %p5189, %s16, 1
        %s5191 = smul.addr %s5190, 8
        %s5192 = scalar_lea.vmem %s4, %s5191
      $region48: #{mvit_forward.1} parent=43 // pred_fallthru
        _
    $region44: #{mvit_forward.1} parent=5 // pred_fallthru
      _
  $region6: #{mvit_forward.1} parent=0 // loop_footer
    %s14 = sadd.s32 1, %s10
  $region7: #{mvit_forward.1} parent=0 // loop_footer_branch
    %9 = sbr.rel target = $region3
  $region8: #{mvit_forward.1} parent=0 // loop_exit
    _

</llo_original>
